<compile_context>
chip_gen: v6e
topology: v6e:2x2x1
jax: 0.10.0
libtpu: 0.0.40
codegen_flags: <defaults>
</compile_context>

<pallas_src>
import jax
import jax.numpy as jnp
from jax.experimental import pallas as pl
from jax.experimental.pallas import tpu as pltpu


def head_kernel(xkw_ref, wc_ref, g_ref, be_ref, w1_ref, b1_ref, w2_ref, b2_ref,
                out_ref, patch_ref, y_ref, h_ref):
    # xkw_ref : (N, H+2, W, 3*Cin) bf16   kw-stacked, H-padded NHWC input
    # wc_ref  : (9*Cin, Ch) bf16          conv weight, this step's Cout half
    # g_ref/be_ref : (1, Ch) f32          BN gamma / beta (this half)
    # w1_ref  : (Ch, hidden) bf16         fc1 weight rows for this half
    # b1_ref  : (1, hidden) f32
    # w2_ref  : (hidden, classes) bf16
    # b2_ref  : (1, classes) f32
    # out_ref : (N, classes) f32
    # patch_ref: (N*HW, 9*Cin) bf16 scratch — im2col patch (built on step 0)
    # y_ref    : (N*HW, Ch) f32 scratch — conv output for this half
    # h_ref    : (N, hidden) f32 scratch — fc1 accumulator across halves
    i = pl.program_id(0)
    N, Hp, W, Cin3 = xkw_ref.shape
    H = Hp - 2
    NHW = N * H * W

    # ---- step 0: build the full im2col patch once. Each kh tap is written
    #      directly into its lane range (offsets 0 / Cin3 / 2*Cin3 are
    #      128-lane aligned) — no concatenate, no f32 intermediates.
    @pl.when(i == 0)
    def _():
        for kh in range(3):
            patch_ref[:, kh * Cin3:(kh + 1) * Cin3] = (
                xkw_ref[:, kh:kh + H, :, :].reshape(NHW, Cin3))
        h_ref[...] = jnp.zeros_like(h_ref)

    # ---- conv: one M=N*HW, K=9*Cin MXU matmul for this Cout half.
    #      (conv bias omitted: exactly cancelled by train-mode BN mean
    #       subtraction that immediately follows.)
    y_ref[...] = jnp.dot(patch_ref[...], wc_ref[...],
                         preferred_element_type=jnp.float32)
    y = y_ref[...]                                          # (NHW, Ch) f32

    # ---- BatchNorm2d, training mode (biased batch variance), two-pass
    #      for numerical stability (y is VMEM-resident, extra read is cheap).
    mean = jnp.mean(y, axis=0, keepdims=True)               # (1, Ch)
    var = jnp.mean(jnp.square(y - mean), axis=0, keepdims=True)
    scale = g_ref[...] * jax.lax.rsqrt(var + 1e-5)          # (1, Ch)
    shift = be_ref[...] - mean * scale

    # ---- ReLU + AdaptiveAvgPool2d((1,1)) per image, then partial fc1.
    z = jnp.maximum(y * scale + shift, 0.0)                 # (NHW, Ch)
    pooled = jnp.mean(z.reshape(N, H * W, -1), axis=1)      # (N, Ch)
    h_ref[...] += jnp.dot(pooled.astype(jnp.bfloat16), w1_ref[...],
                          preferred_element_type=jnp.float32)

    # ---- final step: fc1 bias + ReLU + fc2.
    @pl.when(i == pl.num_programs(0) - 1)
    def _():
        h = jnp.maximum(h_ref[...] + b1_ref[...], 0.0)
        out_ref[...] = jnp.dot(h.astype(jnp.bfloat16), w2_ref[...],
                               preferred_element_type=jnp.float32) + b2_ref[...]


def init_params(key, cin, cout, hidden, num_classes):
    ks = jax.random.split(key, 6)
    return dict(
        conv_w=jax.random.normal(ks[0], (cout, cin, 3, 3), jnp.float32) * 0.05,  # torch OIHW
        conv_b=jax.random.normal(ks[1], (cout,), jnp.float32) * 0.05,
        gamma=jnp.ones((cout,), jnp.float32),    # nn.BatchNorm2d default init
        beta=jnp.zeros((cout,), jnp.float32),
        fc1_w=jax.random.normal(ks[2], (hidden, cout), jnp.float32) * 0.05,      # torch (out, in)
        fc1_b=jax.random.normal(ks[3], (hidden,), jnp.float32) * 0.05,
        fc2_w=jax.random.normal(ks[4], (num_classes, hidden), jnp.float32) * 0.05,
        fc2_b=jax.random.normal(ks[5], (num_classes,), jnp.float32) * 0.05,
    )


def _vmem_budget_bytes(N, H, W, cin, ch, hidden, num_classes):
    """Sum of the buffers the kernel keeps live (Buffered(1) on constant blocks)."""
    nhw = N * H * W
    cin3 = 3 * cin
    b = 0
    b += N * (H + 2) * W * cin3 * 2            # x_kw bf16 (single-buffered)
    b += 2 * 9 * cin * ch * 2                  # conv-weight half, double-buffered
    b += 2 * 2 * ch * 4                        # gamma/beta halves, double-buffered
    b += 2 * ch * hidden * 2                   # fc1 rows half, double-buffered
    b += hidden * 4 + hidden * num_classes * 2 + num_classes * 4   # b1, w2, b2
    b += nhw * 9 * cin * 2                     # im2col patch scratch (bf16)
    b += nhw * ch * 4                          # conv-output scratch (f32)
    b += N * hidden * 4                        # fc1 accumulator
    b += 2 * N * num_classes * 4               # output block
    return b


def classification_head_forward(x_nchw, p):
    N, Cin, H, W = x_nchw.shape
    Cout = p["conv_w"].shape[0]
    hidden = p["fc1_w"].shape[0]
    num_classes = p["fc2_w"].shape[0]
    assert Cout % 2 == 0
    ch = Cout // 2                       # Cout half per grid step

    # glue: NCHW->NHWC, pad, kw-stack (im2col along kw only), cast to bf16.
    x_nhwc = jnp.transpose(x_nchw, (0, 2, 3, 1))
    x_pad = jnp.pad(x_nhwc, ((0, 0), (1, 1), (1, 1), (0, 0)))   # (N,H+2,W+2,Cin)
    x_kw = jnp.concatenate([x_pad[:, :, kw:kw + W, :] for kw in range(3)],
                           axis=-1).astype(jnp.bfloat16)        # (N,H+2,W,3*Cin) bf16
    # conv weight OIHW -> (kh, kw, Cin, Cout) -> (9*Cin, Cout); bf16 halves DMA.
    wc = jnp.transpose(p["conv_w"], (2, 3, 1, 0)).reshape(9 * Cin, Cout)
    wc = wc.astype(jnp.bfloat16)
    # conv bias dropped: exactly cancelled by train-mode BN mean subtraction.
    g = p["gamma"].reshape(1, Cout)
    be = p["beta"].reshape(1, Cout)
    w1 = p["fc1_w"].T.astype(jnp.bfloat16)            # (Cout, hidden)
    b1 = p["fc1_b"].reshape(1, hidden)
    w2 = p["fc2_w"].T.astype(jnp.bfloat16)            # (hidden, classes)
    b2 = p["fc2_b"].reshape(1, num_classes)

    vmem_budget = _vmem_budget_bytes(N, H, W, Cin, ch, hidden, num_classes)
    vmem_limit = min(max(2 * vmem_budget, 8 * 1024 * 1024), 96 * 1024 * 1024)

    single = pl.Buffered(1)   # constant-index blocks: fetched once, no 2nd buffer

    return pl.pallas_call(
        head_kernel,
        out_shape=jax.ShapeDtypeStruct((N, num_classes), jnp.float32),
        grid=(Cout // ch,),
        in_specs=[
            pl.BlockSpec(x_kw.shape, lambda i: (0, 0, 0, 0),
                         pipeline_mode=single),                   # resident image (bf16)
            pl.BlockSpec((9 * Cin, ch), lambda i: (0, i)),        # conv-weight half (pipelined)
            pl.BlockSpec((1, ch), lambda i: (0, i)),              # gamma half
            pl.BlockSpec((1, ch), lambda i: (0, i)),              # beta half
            pl.BlockSpec((ch, hidden), lambda i: (i, 0)),         # fc1-weight rows half
            pl.BlockSpec((1, hidden), lambda i: (0, 0),
                         pipeline_mode=single),
            pl.BlockSpec((hidden, num_classes), lambda i: (0, 0),
                         pipeline_mode=single),
            pl.BlockSpec((1, num_classes), lambda i: (0, 0),
                         pipeline_mode=single),
        ],
        out_specs=pl.BlockSpec((N, num_classes), lambda i: (0, 0)),
        scratch_shapes=[
            pltpu.VMEM((N * H * W, 9 * Cin), jnp.bfloat16),   # im2col patch (built once)
            pltpu.VMEM((N * H * W, ch), jnp.float32),         # conv output, current half
            pltpu.VMEM((N, hidden), jnp.float32),             # fc1 accumulator
        ],
        compiler_params=pltpu.CompilerParams(
            dimension_semantics=("arbitrary",),               # Cout axis carries fc1 reduction
            vmem_limit_bytes=int(vmem_limit)),
    )(x_kw, wc, g, be, w1, b1, w2, b2)


def reference_forward(x_nchw, p):
    # pure-JAX reference mirroring the PyTorch module (BN in training mode)
    y = jax.lax.conv_general_dilated(
        x_nchw, p["conv_w"], window_strides=(1, 1), padding=((1, 1), (1, 1)),
        dimension_numbers=("NCHW", "OIHW", "NCHW"))
    y = y + p["conv_b"][None, :, None, None]
    mean = jnp.mean(y, axis=(0, 2, 3), keepdims=True)
    var = jnp.mean((y - mean) ** 2, axis=(0, 2, 3), keepdims=True)
    y = (y - mean) * jax.lax.rsqrt(var + 1e-5)
    y = y * p["gamma"][None, :, None, None] + p["beta"][None, :, None, None]
    y = jnp.maximum(y, 0.0)
    y = jnp.mean(y, axis=(2, 3))
    y = jnp.maximum(y @ p["fc1_w"].T + p["fc1_b"], 0.0)
    return y @ p["fc2_w"].T + p["fc2_b"]


if __name__ == "__main__":
    # small shapes: ClassificationHead(input_channels=128, num_classes=128, hidden_dim=256)
    N, CIN, H, W = 2, 128, 8, 8
    COUT, HIDDEN, NUM_CLASSES = 512, 256, 128   # conv1 out-channels fixed at 512 by the module

    key = jax.random.PRNGKey(0)
    kx, kp = jax.random.split(key)
    x = jax.random.normal(kx, (N, CIN, H, W), jnp.float32)   # PyTorch-style NCHW input
    params = init_params(kp, CIN, COUT, HIDDEN, NUM_CLASSES)

    out = jax.block_until_ready(classification_head_forward(x, params))
    ref = jax.block_until_ready(reference_forward(x, params))

    assert out.shape == (N, NUM_CLASSES)
    # bf16 matmul operands (incl. the bf16 image) vs f32 reference -> ~1e-2 level
    assert jnp.allclose(out, ref, rtol=3e-2, atol=3e-2)
    print("KERNEL_OK")
</pallas_src>

<mosaic_0001>
module attributes {stable_mosaic.version = 11 : i64} {
  func.func @head_kernel(%arg0: i32, %arg1: memref<2x10x8x384xbf16, #tpu.memory_space<vmem>>, %arg2: memref<1152x256xbf16, #tpu.memory_space<vmem>>, %arg3: memref<1x256xf32, #tpu.memory_space<vmem>>, %arg4: memref<1x256xf32, #tpu.memory_space<vmem>>, %arg5: memref<256x256xbf16, #tpu.memory_space<vmem>>, %arg6: memref<1x256xf32, #tpu.memory_space<vmem>>, %arg7: memref<256x128xbf16, #tpu.memory_space<vmem>>, %arg8: memref<1x128xf32, #tpu.memory_space<vmem>>, %arg9: memref<2x128xf32, #tpu.memory_space<vmem>>, %arg10: memref<128x1152xbf16, #tpu.memory_space<vmem>>, %arg11: memref<128x256xf32, #tpu.memory_space<vmem>>, %arg12: memref<2x256xf32, #tpu.memory_space<vmem>>) attributes {dimension_semantics = [#tpu.dimension_semantics<arbitrary>], iteration_bounds = array<i64: 2>, scalar_prefetch = 0 : i64, scratch_operands = 3 : i64, tpu.core_type = #tpu.core_type<tc>, window_params = [{pipeline_mode = #tpu.pipeline_mode<synchronous>, transform_indices = @transform_0, window_bounds = array<i64: 2, 10, 8, 384>}, {transform_indices = @transform_1, window_bounds = array<i64: 1152, 256>}, {transform_indices = @transform_2, window_bounds = array<i64: 1, 256>}, {transform_indices = @transform_3, window_bounds = array<i64: 1, 256>}, {transform_indices = @transform_4, window_bounds = array<i64: 256, 256>}, {pipeline_mode = #tpu.pipeline_mode<synchronous>, transform_indices = @transform_5, window_bounds = array<i64: 1, 256>}, {pipeline_mode = #tpu.pipeline_mode<synchronous>, transform_indices = @transform_6, window_bounds = array<i64: 256, 128>}, {pipeline_mode = #tpu.pipeline_mode<synchronous>, transform_indices = @transform_7, window_bounds = array<i64: 1, 128>}, {pipeline_mode = #tpu.pipeline_mode<synchronous>, transform_indices = @transform_8, window_bounds = array<i64: 2, 128>}]} {
    %c0_i32 = arith.constant 0 : i32
    %0 = arith.cmpi eq, %arg0, %c0_i32 : i32
    %1 = arith.extui %0 : i1 to i32
    %c0_i32_0 = arith.constant 0 : i32
    %2 = arith.cmpi ne, %1, %c0_i32_0 : i32
    scf.if %2 {
      %c0_28 = arith.constant 0 : index
      %c0_29 = arith.constant 0 : index
      %c0_30 = arith.constant 0 : index
      %c0_31 = arith.constant 0 : index
      %46 = vector.load %arg1[%c0_28, %c0_29, %c0_30, %c0_31] : memref<2x10x8x384xbf16, #tpu.memory_space<vmem>>, vector<2x8x8x384xbf16>
      %47 = vector.shape_cast %46 : vector<2x8x8x384xbf16> to vector<128x384xbf16>
      %c0_32 = arith.constant 0 : index
      %c0_33 = arith.constant 0 : index
      %48 = vector.load %arg10[%c0_32, %c0_33] : memref<128x1152xbf16, #tpu.memory_space<vmem>>, vector<128x384xbf16>
      tpu.vector_store %arg10[%c0_32, %c0_33], %47 {strides = array<i32>} : memref<128x1152xbf16, #tpu.memory_space<vmem>>, vector<128x384xbf16>,
      %c0_34 = arith.constant 0 : index
      %c1 = arith.constant 1 : index
      %c0_35 = arith.constant 0 : index
      %c0_36 = arith.constant 0 : index
      %49 = vector.load %arg1[%c0_34, %c1, %c0_35, %c0_36] : memref<2x10x8x384xbf16, #tpu.memory_space<vmem>>, vector<2x8x8x384xbf16>
      %50 = vector.shape_cast %49 : vector<2x8x8x384xbf16> to vector<128x384xbf16>
      %c0_37 = arith.constant 0 : index
      %c384 = arith.constant 384 : index
      %51 = vector.load %arg10[%c0_37, %c384] : memref<128x1152xbf16, #tpu.memory_space<vmem>>, vector<128x384xbf16>
      tpu.vector_store %arg10[%c0_37, %c384], %50 {strides = array<i32>} : memref<128x1152xbf16, #tpu.memory_space<vmem>>, vector<128x384xbf16>,
      %c0_38 = arith.constant 0 : index
      %c2 = arith.constant 2 : index
      %c0_39 = arith.constant 0 : index
      %c0_40 = arith.constant 0 : index
      %52 = vector.load %arg1[%c0_38, %c2, %c0_39, %c0_40] : memref<2x10x8x384xbf16, #tpu.memory_space<vmem>>, vector<2x8x8x384xbf16>
      %53 = vector.shape_cast %52 : vector<2x8x8x384xbf16> to vector<128x384xbf16>
      %c0_41 = arith.constant 0 : index
      %c768 = arith.constant 768 : index
      %54 = vector.load %arg10[%c0_41, %c768] : memref<128x1152xbf16, #tpu.memory_space<vmem>>, vector<128x384xbf16>
      tpu.vector_store %arg10[%c0_41, %c768], %53 {strides = array<i32>} : memref<128x1152xbf16, #tpu.memory_space<vmem>>, vector<128x384xbf16>,
      %cst_42 = arith.constant 0.000000e+00 : f32
      %55 = vector.broadcast %cst_42 : f32 to vector<2x256xf32>
      %c0_43 = arith.constant 0 : index
      %c0_44 = arith.constant 0 : index
      %56 = vector.load %arg12[%c0_43, %c0_44] : memref<2x256xf32, #tpu.memory_space<vmem>>, vector<2x256xf32>
      tpu.vector_store %arg12[%c0_43, %c0_44], %55 {strides = array<i32>} : memref<2x256xf32, #tpu.memory_space<vmem>>, vector<2x256xf32>,
    } else {
    }
    %c0 = arith.constant 0 : index
    %c0_1 = arith.constant 0 : index
    %3 = vector.load %arg10[%c0, %c0_1] : memref<128x1152xbf16, #tpu.memory_space<vmem>>, vector<128x1152xbf16>
    %c0_2 = arith.constant 0 : index
    %c0_3 = arith.constant 0 : index
    %4 = vector.load %arg2[%c0_2, %c0_3] : memref<1152x256xbf16, #tpu.memory_space<vmem>>, vector<1152x256xbf16>
    %cst = arith.constant dense<0.000000e+00> : vector<128x256xf32>
    %5 = tpu.matmul %3, %4, %cst {dimension_numbers = #tpu.dot_dimension_numbers<[1], [0], [0], [1], [0, 0, 1, 1], [], []>} : vector<128x1152xbf16>, vector<1152x256xbf16>, vector<128x256xf32> -> vector<128x256xf32>
    %c0_4 = arith.constant 0 : index
    %c0_5 = arith.constant 0 : index
    %6 = vector.load %arg11[%c0_4, %c0_5] : memref<128x256xf32, #tpu.memory_space<vmem>>, vector<128x256xf32>
    tpu.vector_store %arg11[%c0_4, %c0_5], %5 {strides = array<i32>} : memref<128x256xf32, #tpu.memory_space<vmem>>, vector<128x256xf32>,
    %c0_6 = arith.constant 0 : index
    %c0_7 = arith.constant 0 : index
    %7 = vector.load %arg11[%c0_6, %c0_7] : memref<128x256xf32, #tpu.memory_space<vmem>>, vector<128x256xf32>
    %cst_8 = arith.constant dense<0.000000e+00> : vector<256xf32>
    %8 = vector.multi_reduction <add>, %7, %cst_8 [0] : vector<128x256xf32> to vector<256xf32>
    %9 = vector.shape_cast %8 : vector<256xf32> to vector<1x256xf32>
    %cst_9 = arith.constant 1.280000e+02 : f32
    %10 = vector.broadcast %cst_9 : f32 to vector<1x256xf32>
    %11 = arith.divf %9, %10 : vector<1x256xf32>
    %12 = vector.broadcast %11 : vector<1x256xf32> to vector<128x256xf32>
    %13 = arith.subf %7, %12 : vector<128x256xf32>
    %14 = arith.mulf %13, %13 : vector<128x256xf32>
    %cst_10 = arith.constant dense<0.000000e+00> : vector<256xf32>
    %15 = vector.multi_reduction <add>, %14, %cst_10 [0] : vector<128x256xf32> to vector<256xf32>
    %16 = vector.shape_cast %15 : vector<256xf32> to vector<1x256xf32>
    %cst_11 = arith.constant 1.280000e+02 : f32
    %17 = vector.broadcast %cst_11 : f32 to vector<1x256xf32>
    %18 = arith.divf %16, %17 : vector<1x256xf32>
    %c0_12 = arith.constant 0 : index
    %c0_13 = arith.constant 0 : index
    %19 = vector.load %arg3[%c0_12, %c0_13] : memref<1x256xf32, #tpu.memory_space<vmem>>, vector<1x256xf32>
    %cst_14 = arith.constant 9.99999974E-6 : f32
    %20 = vector.broadcast %cst_14 : f32 to vector<1x256xf32>
    %21 = arith.addf %18, %20 : vector<1x256xf32>
    %22 = math.rsqrt %21 : vector<1x256xf32>
    %23 = arith.mulf %19, %22 : vector<1x256xf32>
    %c0_15 = arith.constant 0 : index
    %c0_16 = arith.constant 0 : index
    %24 = vector.load %arg4[%c0_15, %c0_16] : memref<1x256xf32, #tpu.memory_space<vmem>>, vector<1x256xf32>
    %25 = arith.mulf %11, %23 : vector<1x256xf32>
    %26 = arith.subf %24, %25 : vector<1x256xf32>
    %27 = vector.broadcast %23 : vector<1x256xf32> to vector<128x256xf32>
    %28 = arith.mulf %7, %27 : vector<128x256xf32>
    %29 = vector.broadcast %26 : vector<1x256xf32> to vector<128x256xf32>
    %30 = arith.addf %28, %29 : vector<128x256xf32>
    %cst_17 = arith.constant 0.000000e+00 : f32
    %31 = vector.broadcast %cst_17 : f32 to vector<128x256xf32>
    %32 = arith.maximumf %30, %31 : vector<128x256xf32>
    %33 = vector.shape_cast %32 : vector<128x256xf32> to vector<2x64x256xf32>
    %cst_18 = arith.constant dense<0.000000e+00> : vector<2x256xf32>
    %34 = vector.multi_reduction <add>, %33, %cst_18 [1] : vector<2x64x256xf32> to vector<2x256xf32>
    %cst_19 = arith.constant 6.400000e+01 : f32
    %35 = vector.broadcast %cst_19 : f32 to vector<2x256xf32>
    %36 = arith.divf %34, %35 : vector<2x256xf32>
    %c0_20 = arith.constant 0 : index
    %c0_21 = arith.constant 0 : index
    %37 = vector.load %arg12[%c0_20, %c0_21] : memref<2x256xf32, #tpu.memory_space<vmem>>, vector<2x256xf32>
    %38 = arith.truncf %36 : vector<2x256xf32> to vector<2x256xbf16>
    %c0_22 = arith.constant 0 : index
    %c0_23 = arith.constant 0 : index
    %39 = vector.load %arg5[%c0_22, %c0_23] : memref<256x256xbf16, #tpu.memory_space<vmem>>, vector<256x256xbf16>
    %cst_24 = arith.constant dense<0.000000e+00> : vector<2x256xf32>
    %40 = tpu.matmul %38, %39, %cst_24 {dimension_numbers = #tpu.dot_dimension_numbers<[1], [0], [0], [1], [0, 0, 1, 1], [], []>} : vector<2x256xbf16>, vector<256x256xbf16>, vector<2x256xf32> -> vector<2x256xf32>
    %41 = arith.addf %37, %40 : vector<2x256xf32>
    %c0_25 = arith.constant 0 : index
    %c0_26 = arith.constant 0 : index
    %42 = vector.load %arg12[%c0_25, %c0_26] : memref<2x256xf32, #tpu.memory_space<vmem>>, vector<2x256xf32>
    tpu.vector_store %arg12[%c0_25, %c0_26], %41 {strides = array<i32>} : memref<2x256xf32, #tpu.memory_space<vmem>>, vector<2x256xf32>,
    %c1_i32 = arith.constant 1 : i32
    %43 = arith.cmpi eq, %arg0, %c1_i32 : i32
    %44 = arith.extui %43 : i1 to i32
    %c0_i32_27 = arith.constant 0 : i32
    %45 = arith.cmpi ne, %44, %c0_i32_27 : i32
    scf.if %45 {
      %c0_28 = arith.constant 0 : index
      %c0_29 = arith.constant 0 : index
      %46 = vector.load %arg12[%c0_28, %c0_29] : memref<2x256xf32, #tpu.memory_space<vmem>>, vector<2x256xf32>
      %c0_30 = arith.constant 0 : index
      %c0_31 = arith.constant 0 : index
      %47 = vector.load %arg6[%c0_30, %c0_31] : memref<1x256xf32, #tpu.memory_space<vmem>>, vector<1x256xf32>
      %48 = vector.broadcast %47 : vector<1x256xf32> to vector<2x256xf32>
      %49 = arith.addf %46, %48 : vector<2x256xf32>
      %cst_32 = arith.constant 0.000000e+00 : f32
      %50 = vector.broadcast %cst_32 : f32 to vector<2x256xf32>
      %51 = arith.maximumf %49, %50 : vector<2x256xf32>
      %52 = arith.truncf %51 : vector<2x256xf32> to vector<2x256xbf16>
      %c0_33 = arith.constant 0 : index
      %c0_34 = arith.constant 0 : index
      %53 = vector.load %arg7[%c0_33, %c0_34] : memref<256x128xbf16, #tpu.memory_space<vmem>>, vector<256x128xbf16>
      %cst_35 = arith.constant dense<0.000000e+00> : vector<2x128xf32>
      %54 = tpu.matmul %52, %53, %cst_35 {dimension_numbers = #tpu.dot_dimension_numbers<[1], [0], [0], [1], [0, 0, 1, 1], [], []>} : vector<2x256xbf16>, vector<256x128xbf16>, vector<2x128xf32> -> vector<2x128xf32>
      %c0_36 = arith.constant 0 : index
      %c0_37 = arith.constant 0 : index
      %55 = vector.load %arg8[%c0_36, %c0_37] : memref<1x128xf32, #tpu.memory_space<vmem>>, vector<1x128xf32>
      %56 = vector.broadcast %55 : vector<1x128xf32> to vector<2x128xf32>
      %57 = arith.addf %54, %56 : vector<2x128xf32>
      %c0_38 = arith.constant 0 : index
      %c0_39 = arith.constant 0 : index
      %58 = vector.load %arg9[%c0_38, %c0_39] : memref<2x128xf32, #tpu.memory_space<vmem>>, vector<2x128xf32>
      tpu.vector_store %arg9[%c0_38, %c0_39], %57 {strides = array<i32>} : memref<2x128xf32, #tpu.memory_space<vmem>>, vector<2x128xf32>,
    } else {
    }
    return
  }
  func.func @transform_0(%arg0: i32) -> (i32, i32, i32, i32) {
    %c0_i32 = arith.constant 0 : i32
    %c0_i32_0 = arith.constant 0 : i32
    %c0_i32_1 = arith.constant 0 : i32
    %c0_i32_2 = arith.constant 0 : i32
    %c0_i32_3 = arith.constant 0 : i32
    return %c0_i32, %c0_i32_0, %c0_i32_1, %c0_i32_2 : i32, i32, i32, i32
  }
  func.func @transform_1(%arg0: i32) -> (i32, i32) {
    %c0_i32 = arith.constant 0 : i32
    %c0_i32_0 = arith.constant 0 : i32
    return %c0_i32, %arg0 : i32, i32
  }
  func.func @transform_2(%arg0: i32) -> (i32, i32) {
    %c0_i32 = arith.constant 0 : i32
    %c0_i32_0 = arith.constant 0 : i32
    return %c0_i32, %arg0 : i32, i32
  }
  func.func @transform_3(%arg0: i32) -> (i32, i32) {
    %c0_i32 = arith.constant 0 : i32
    %c0_i32_0 = arith.constant 0 : i32
    return %c0_i32, %arg0 : i32, i32
  }
  func.func @transform_4(%arg0: i32) -> (i32, i32) {
    %c0_i32 = arith.constant 0 : i32
    %c0_i32_0 = arith.constant 0 : i32
    return %arg0, %c0_i32 : i32, i32
  }
  func.func @transform_5(%arg0: i32) -> (i32, i32) {
    %c0_i32 = arith.constant 0 : i32
    %c0_i32_0 = arith.constant 0 : i32
    %c0_i32_1 = arith.constant 0 : i32
    return %c0_i32, %c0_i32_0 : i32, i32
  }
  func.func @transform_6(%arg0: i32) -> (i32, i32) {
    %c0_i32 = arith.constant 0 : i32
    %c0_i32_0 = arith.constant 0 : i32
    %c0_i32_1 = arith.constant 0 : i32
    return %c0_i32, %c0_i32_0 : i32, i32
  }
  func.func @transform_7(%arg0: i32) -> (i32, i32) {
    %c0_i32 = arith.constant 0 : i32
    %c0_i32_0 = arith.constant 0 : i32
    %c0_i32_1 = arith.constant 0 : i32
    return %c0_i32, %c0_i32_0 : i32, i32
  }
  func.func @transform_8(%arg0: i32) -> (i32, i32) {
    %c0_i32 = arith.constant 0 : i32
    %c0_i32_0 = arith.constant 0 : i32
    %c0_i32_1 = arith.constant 0 : i32
    return %c0_i32, %c0_i32_0 : i32, i32
  }
}

</mosaic_0001>

<llo_original>
// kernel: tpu_custom_call.1
$region0: #{tpu_custom_call.1}
  #allocation0 [shape = 'u32[]', space=smem, size = 0x4, offset = 0x4, fixed_abs, tag = 'smem constant byte address 0x4 - core index']
  #allocation1 [shape = 'u32[144,128]{1,0:T(1,128)}', space=vmem, size = 0x12000, scoped, tag = 'internal scratch']
  #allocation2 [shape = 'bf16[128,1152]{1,0:T(8,128)(2,1)}', space=vmem, size = 0x48000, scoped, tag = 'scratch operand']
  #allocation3 [shape = 'f32[128,256]{1,0:T(8,128)}', space=vmem, size = 0x20000, scoped, tag = 'scratch operand']
  #allocation4 [shape = 'f32[2,256]{1,0:T(2,128)}', space=vmem, size = 0x800, scoped, tag = 'scratch operand']
  %s0 = inlined_call_operand.hbm [shape: bf16[2,10,8,384], index: 0, kind: input, shape index: {}]
  %s1 = inlined_call_operand.hbm [shape: bf16[1152,512], index: 1, kind: input, shape index: {}]
  %s2 = inlined_call_operand.hbm [shape: f32[1,512], index: 2, kind: input, shape index: {}]
  %s3 = inlined_call_operand.hbm [shape: f32[1,512], index: 3, kind: input, shape index: {}]
  %s4 = inlined_call_operand.hbm [shape: bf16[512,256], index: 4, kind: input, shape index: {}]
  %s5 = inlined_call_operand.hbm [shape: f32[1,256], index: 5, kind: input, shape index: {}]
  %s6 = inlined_call_operand.hbm [shape: bf16[256,128], index: 6, kind: input, shape index: {}]
  %s7 = inlined_call_operand.hbm [shape: f32[1,128], index: 7, kind: input, shape index: {}]
  %s8 = inlined_call_operand.hbm [shape: f32[2,128], index: 8, kind: output, shape index: {}]
  %s9 = sld [smem:[#allocation0]]
  $region105: #{tpu_custom_call.1} parent=0
    _
  %s11 = ssub.s32 1, %s9
  %s12 = scalar_select 0, %s11, %s9
  $region1: #{tpu_custom_call.1} parent=0
    #allocation5 [shape = 'u8[122880]{0}', space=vmem, size = 0x1e000, scoped, tag = 'input window, operand 0, single buffered']
    #allocation6 [shape = 's32[2]{0}', space=sflag, size = 0x8, scoped, tag = 'scoped memory for tpu_custom_call.1']
    #allocation7 [shape = 's32[2]{0}', space=sflag, size = 0x8, scoped, tag = 'scoped memory for tpu_custom_call.1']
    #allocation8 [shape = 'u8[1179648]{0}', space=vmem, size = 0x120000, scoped, tag = 'input window, operand 1']
    #allocation9 [shape = 's32[2]{0}', space=sflag, size = 0x8, scoped, tag = 'scoped memory for tpu_custom_call.1']
    #allocation10 [shape = 'u8[2048]{0}', space=vmem, size = 0x800, scoped, tag = 'input window, operand 2']
    #allocation11 [shape = 'u8[2048]{0}', space=vmem, size = 0x800, scoped, tag = 'input window, operand 3']
    #allocation12 [shape = 's32[2]{0}', space=sflag, size = 0x8, scoped, tag = 'scoped memory for tpu_custom_call.1']
    #allocation13 [shape = 'u8[262144]{0}', space=vmem, size = 0x40000, scoped, tag = 'input window, operand 4']
    #allocation14 [shape = 'u8[1024]{0}', space=vmem, size = 0x400, scoped, tag = 'input window, operand 5, single buffered']
    #allocation15 [shape = 's32[1]{0}', space=sflag, size = 0x4, scoped, tag = 'scoped memory for tpu_custom_call.1']
    #allocation16 [shape = 'u8[65536]{0}', space=vmem, size = 0x10000, scoped, tag = 'input window, operand 6, single buffered']
    #allocation17 [shape = 'u8[512]{0}', space=vmem, size = 0x400, scoped, tag = 'input window, operand 7, single buffered']
    #allocation18 [shape = 's32[1]{0}', space=sflag, size = 0x4, scoped, tag = 'scoped memory for tpu_custom_call.1']
    #allocation19 [shape = 'u8[1024]{0}', space=vmem, size = 0x400, scoped, tag = 'output window, operand 0, single buffered']
    %13 = vsyncpa [#allocation6], 0
    %14 = vsyncpa [#allocation9], 0
    %s15 = scalar_lea.sflag [#allocation9], 1
    %16 = vsyncpa %s15, 0
    %17 = vsyncpa [#allocation12], 0
    %s18 = scalar_lea.sflag [#allocation12], 1
    %19 = vsyncpa %s18, 0
    %20 = vsyncpa [#allocation15], 0
    %21 = vsyncpa [#allocation18], 0
    %22 = vsyncpa [#allocation7], 0
    loop: start=0, step=1, limit=4
    $region2: #{tpu_custom_call.1} parent=1 // loop_pre_header
      _
    $region3: #{tpu_custom_call.1} parent=1 // loop_header
      %s24 = sphi 0, %s28
      %p25 = scmp.ge.s32.totalorder %s24, 4
      %s32 = sphi 0, %s32
      %s34 = sphi 0, %s32
      %s35 = sphi 0, %s34
      %s49 = sphi 0, %s35
      %s55 = sphi 0, %s57
      %s58 = sphi 0, %s55
      %s59 = sphi 0, %s58
      %s75 = sphi 0, %s59
      %s81 = sphi 0, %s83
      %s84 = sphi 0, %s81
      %s85 = sphi 0, %s84
      %s101 = sphi 0, %s85
      %s107 = sphi 0, %s109
      %s110 = sphi 0, %s107
      %s111 = sphi 0, %s110
      %s127 = sphi 0, %s111
      %s133 = sphi 0, %s135
      %s136 = sphi 0, %s133
      %s137 = sphi 0, %s136
      %s153 = sphi 0, %s137
      %s157 = sphi 0, %s157
      %s159 = sphi 0, %s157
      %s160 = sphi 0, %s159
      %s174 = sphi 0, %s160
      %s178 = sphi 0, %s178
      %s180 = sphi 0, %s178
      %s181 = sphi 0, %s180
      %s195 = sphi 0, %s181
      %s199 = sphi 0, %s199
      %s201 = sphi 0, %s199
      %s202 = sphi 0, %s201
      %s216 = sphi 0, %s202
      %s220 = sphi 0, %s220
      %s222 = sphi 0, %s220
      %s223 = sphi 0, %s222
      %s237 = sphi 0, %s223
    $region4: #{tpu_custom_call.1} parent=1 // loop_header_branch
      %27 = sbr.rel (%p25) target = $region8
    $region5: #{tpu_custom_call.1} parent=1 // loop_body
      %s29 = ssub.s32 %s24, 1
      %s30 = ssub.s32 %s24, 2
      %s31 = sadd.s32 %s24, 1
      %s33 = sadd.s32 %s32, 1
      %p36 = scmp.eq.s32.totalorder %s24, 1
      %p37 = scmp.ne.s32.totalorder %s32, %s34
      %p38 = scmp.eq.s32.totalorder %s24, 0
      %p39 = por %p37, %p38
      %p40 = scmp.ne.s32.totalorder %s32, %s34
      %p41 = scmp.eq.s32.totalorder %s29, 1
      %p42 = por %p40, %p41
      %p43 = scmp.ne.s32.totalorder %s34, %s35
      %p44 = scmp.eq.s32.totalorder %s29, 0
      %p45 = por %p43, %p44
      %p46 = scmp.ne.s32.totalorder %s34, %s35
      %p47 = scmp.eq.s32.totalorder %s30, 1
      %p48 = por %p46, %p47
      %p50 = scmp.ne.s32.totalorder %s35, %s49
      %p51 = scmp.eq.s32.totalorder %s30, 0
      %p52 = por %p50, %p51
      %s53 = ssub.s32 %s24, %s31
      %p54 = scmp.eq.s32.totalorder %s53, 0
      %s56 = sadd.s32 %s55, 1
      %s57 = scalar_select %p54, %s55, %s56
      %p60 = pneg %p54
      %p61 = scmp.eq.s32.totalorder %s24, 1
      %p62 = por %p60, %p61
      %p63 = scmp.ne.s32.totalorder %s55, %s58
      %p64 = scmp.eq.s32.totalorder %s24, 0
      %p65 = por %p63, %p64
      %p66 = scmp.ne.s32.totalorder %s55, %s58
      %p67 = scmp.eq.s32.totalorder %s29, 1
      %p68 = por %p66, %p67
      %p69 = scmp.ne.s32.totalorder %s58, %s59
      %p70 = scmp.eq.s32.totalorder %s29, 0
      %p71 = por %p69, %p70
      %p72 = scmp.ne.s32.totalorder %s58, %s59
      %p73 = scmp.eq.s32.totalorder %s30, 1
      %p74 = por %p72, %p73
      %p76 = scmp.ne.s32.totalorder %s59, %s75
      %p77 = scmp.eq.s32.totalorder %s30, 0
      %p78 = por %p76, %p77
      %s79 = ssub.s32 %s24, %s31
      %p80 = scmp.eq.s32.totalorder %s79, 0
      %s82 = sadd.s32 %s81, 1
      %s83 = scalar_select %p80, %s81, %s82
      %p86 = pneg %p80
      %p87 = scmp.eq.s32.totalorder %s24, 1
      %p88 = por %p86, %p87
      %p89 = scmp.ne.s32.totalorder %s81, %s84
      %p90 = scmp.eq.s32.totalorder %s24, 0
      %p91 = por %p89, %p90
      %p92 = scmp.ne.s32.totalorder %s81, %s84
      %p93 = scmp.eq.s32.totalorder %s29, 1
      %p94 = por %p92, %p93
      %p95 = scmp.ne.s32.totalorder %s84, %s85
      %p96 = scmp.eq.s32.totalorder %s29, 0
      %p97 = por %p95, %p96
      %p98 = scmp.ne.s32.totalorder %s84, %s85
      %p99 = scmp.eq.s32.totalorder %s30, 1
      %p100 = por %p98, %p99
      %p102 = scmp.ne.s32.totalorder %s85, %s101
      %p103 = scmp.eq.s32.totalorder %s30, 0
      %p104 = por %p102, %p103
      %s105 = ssub.s32 %s24, %s31
      %p106 = scmp.eq.s32.totalorder %s105, 0
      %s108 = sadd.s32 %s107, 1
      %s109 = scalar_select %p106, %s107, %s108
      %p112 = pneg %p106
      %p113 = scmp.eq.s32.totalorder %s24, 1
      %p114 = por %p112, %p113
      %p115 = scmp.ne.s32.totalorder %s107, %s110
      %p116 = scmp.eq.s32.totalorder %s24, 0
      %p117 = por %p115, %p116
      %p118 = scmp.ne.s32.totalorder %s107, %s110
      %p119 = scmp.eq.s32.totalorder %s29, 1
      %p120 = por %p118, %p119
      %p121 = scmp.ne.s32.totalorder %s110, %s111
      %p122 = scmp.eq.s32.totalorder %s29, 0
      %p123 = por %p121, %p122
      %p124 = scmp.ne.s32.totalorder %s110, %s111
      %p125 = scmp.eq.s32.totalorder %s30, 1
      %p126 = por %p124, %p125
      %p128 = scmp.ne.s32.totalorder %s111, %s127
      %p129 = scmp.eq.s32.totalorder %s30, 0
      %p130 = por %p128, %p129
      %s131 = ssub.s32 %s24, %s31
      %p132 = scmp.eq.s32.totalorder %s131, 0
      %s134 = sadd.s32 %s133, 1
      %s135 = scalar_select %p132, %s133, %s134
      %p138 = pneg %p132
      %p139 = scmp.eq.s32.totalorder %s24, 1
      %p140 = por %p138, %p139
      %p141 = scmp.ne.s32.totalorder %s133, %s136
      %p142 = scmp.eq.s32.totalorder %s24, 0
      %p143 = por %p141, %p142
      %p144 = scmp.ne.s32.totalorder %s133, %s136
      %p145 = scmp.eq.s32.totalorder %s29, 1
      %p146 = por %p144, %p145
      %p147 = scmp.ne.s32.totalorder %s136, %s137
      %p148 = scmp.eq.s32.totalorder %s29, 0
      %p149 = por %p147, %p148
      %p150 = scmp.ne.s32.totalorder %s136, %s137
      %p151 = scmp.eq.s32.totalorder %s30, 1
      %p152 = por %p150, %p151
      %p154 = scmp.ne.s32.totalorder %s137, %s153
      %p155 = scmp.eq.s32.totalorder %s30, 0
      %p156 = por %p154, %p155
      %s158 = sadd.s32 %s157, 1
      %p161 = scmp.eq.s32.totalorder %s24, 1
      %p162 = scmp.ne.s32.totalorder %s157, %s159
      %p163 = scmp.eq.s32.totalorder %s24, 0
      %p164 = por %p162, %p163
      %p165 = scmp.ne.s32.totalorder %s157, %s159
      %p166 = scmp.eq.s32.totalorder %s29, 1
      %p167 = por %p165, %p166
      %p168 = scmp.ne.s32.totalorder %s159, %s160
      %p169 = scmp.eq.s32.totalorder %s29, 0
      %p170 = por %p168, %p169
      %p171 = scmp.ne.s32.totalorder %s159, %s160
      %p172 = scmp.eq.s32.totalorder %s30, 1
      %p173 = por %p171, %p172
      %p175 = scmp.ne.s32.totalorder %s160, %s174
      %p176 = scmp.eq.s32.totalorder %s30, 0
      %p177 = por %p175, %p176
      %s179 = sadd.s32 %s178, 1
      %p182 = scmp.eq.s32.totalorder %s24, 1
      %p183 = scmp.ne.s32.totalorder %s178, %s180
      %p184 = scmp.eq.s32.totalorder %s24, 0
      %p185 = por %p183, %p184
      %p186 = scmp.ne.s32.totalorder %s178, %s180
      %p187 = scmp.eq.s32.totalorder %s29, 1
      %p188 = por %p186, %p187
      %p189 = scmp.ne.s32.totalorder %s180, %s181
      %p190 = scmp.eq.s32.totalorder %s29, 0
      %p191 = por %p189, %p190
      %p192 = scmp.ne.s32.totalorder %s180, %s181
      %p193 = scmp.eq.s32.totalorder %s30, 1
      %p194 = por %p192, %p193
      %p196 = scmp.ne.s32.totalorder %s181, %s195
      %p197 = scmp.eq.s32.totalorder %s30, 0
      %p198 = por %p196, %p197
      %s200 = sadd.s32 %s199, 1
      %p203 = scmp.eq.s32.totalorder %s24, 1
      %p204 = scmp.ne.s32.totalorder %s199, %s201
      %p205 = scmp.eq.s32.totalorder %s24, 0
      %p206 = por %p204, %p205
      %p207 = scmp.ne.s32.totalorder %s199, %s201
      %p208 = scmp.eq.s32.totalorder %s29, 1
      %p209 = por %p207, %p208
      %p210 = scmp.ne.s32.totalorder %s201, %s202
      %p211 = scmp.eq.s32.totalorder %s29, 0
      %p212 = por %p210, %p211
      %p213 = scmp.ne.s32.totalorder %s201, %s202
      %p214 = scmp.eq.s32.totalorder %s30, 1
      %p215 = por %p213, %p214
      %p217 = scmp.ne.s32.totalorder %s202, %s216
      %p218 = scmp.eq.s32.totalorder %s30, 0
      %p219 = por %p217, %p218
      %s221 = sadd.s32 %s220, 1
      %p224 = scmp.eq.s32.totalorder %s24, 1
      %p225 = scmp.ne.s32.totalorder %s220, %s222
      %p226 = scmp.eq.s32.totalorder %s24, 0
      %p227 = por %p225, %p226
      %p228 = scmp.ne.s32.totalorder %s220, %s222
      %p229 = scmp.eq.s32.totalorder %s29, 1
      %p230 = por %p228, %p229
      %p231 = scmp.ne.s32.totalorder %s222, %s223
      %p232 = scmp.eq.s32.totalorder %s29, 0
      %p233 = por %p231, %p232
      %p234 = scmp.ne.s32.totalorder %s222, %s223
      %p235 = scmp.eq.s32.totalorder %s30, 1
      %p236 = por %p234, %p235
      %p238 = scmp.ne.s32.totalorder %s223, %s237
      %p239 = scmp.eq.s32.totalorder %s30, 0
      %p240 = por %p238, %p239
      %p241 = scmp.le.s32.totalorder 1, %s24
      %p242 = scmp.lt.s32.totalorder %s24, 3
      %p243 = pnand %p241, %p242
      %p244 = pneg %p243
      // Predicated region
      $region9: #{tpu_custom_call.1} parent=5 // pred_check
        _
      $region10: #{tpu_custom_call.1} parent=5 // pred_check_branch
        %246 = sbr.rel (%p243) target = $region12
      $region11: #{tpu_custom_call.1} parent=5 // pred_region
        %s247 = ssub.s32 %s24, 1
        // Predicated region
        $region13: #{tpu_custom_call.1} parent=11 // pred_check
          %p248 = pneg %p45
        $region14: #{tpu_custom_call.1} parent=11 // pred_check_branch
          %250 = sbr.rel (%p248) target = $region16
        $region15: #{tpu_custom_call.1} parent=11 // pred_region
          %s252 = ssub.s32 3840, 3840
          %253 = vsyncadd [#allocation6], %s252
          %s254 = sshll.u32 [#allocation5], 4
          %s255 = int_to_ptr.vmem [resolvable:$true] %s254
          %260 = dma.hbm_to_vmem [thread:$0]  %s0, 3840, %s255, [#allocation6], 192, 192, 12
        $region16: #{tpu_custom_call.1} parent=11 // pred_fallthru
          _
        // Predicated region
        $region17: #{tpu_custom_call.1} parent=11 // pred_check
          %p261 = pneg %p170
        $region18: #{tpu_custom_call.1} parent=11 // pred_check_branch
          %263 = sbr.rel (%p261) target = $region20
        $region19: #{tpu_custom_call.1} parent=11 // pred_region
          %s265 = ssub.s32 32, 32
          %266 = vsyncadd [#allocation15], %s265
          %s268 = sshll.u32 [#allocation14], 4
          %s269 = int_to_ptr.vmem [resolvable:$true] %s268
          %271 = dma.hbm_to_vmem [thread:$0]  %s5, 32, %s269, [#allocation15]
        $region20: #{tpu_custom_call.1} parent=11 // pred_fallthru
          _
        // Predicated region
        $region21: #{tpu_custom_call.1} parent=11 // pred_check
          %p272 = pneg %p191
        $region22: #{tpu_custom_call.1} parent=11 // pred_check_branch
          %274 = sbr.rel (%p272) target = $region24
        $region23: #{tpu_custom_call.1} parent=11 // pred_region
          %s276 = ssub.s32 2048, 2048
          %277 = vsyncadd [#allocation15], %s276
          %s278 = sshll.u32 [#allocation16], 4
          %s279 = int_to_ptr.vmem [resolvable:$true] %s278
          %284 = dma.hbm_to_vmem [thread:$0]  %s6, 2048, %s279, [#allocation15], 64, 64, 4
        $region24: #{tpu_custom_call.1} parent=11 // pred_fallthru
          _
        // Predicated region
        $region25: #{tpu_custom_call.1} parent=11 // pred_check
          %p285 = pneg %p212
        $region26: #{tpu_custom_call.1} parent=11 // pred_check_branch
          %287 = sbr.rel (%p285) target = $region28
        $region27: #{tpu_custom_call.1} parent=11 // pred_region
          %s289 = ssub.s32 16, 16
          %290 = vsyncadd [#allocation18], %s289
          %s292 = sshll.u32 [#allocation17], 4
          %s293 = int_to_ptr.vmem [resolvable:$true] %s292
          %295 = dma.hbm_to_vmem [thread:$0]  %s7, 16, %s293, [#allocation18]
        $region28: #{tpu_custom_call.1} parent=11 // pred_fallthru
          _
      $region12: #{tpu_custom_call.1} parent=5 // pred_fallthru
        _
      %p296 = scmp.lt.s32.totalorder %s24, 2
      // Predicated region
      $region29: #{tpu_custom_call.1} parent=5 // pred_check
        %p297 = pneg %p296
      $region30: #{tpu_custom_call.1} parent=5 // pred_check_branch
        %299 = sbr.rel (%p297) target = $region32
      $region31: #{tpu_custom_call.1} parent=5 // pred_region
        // Predicated region
        $region33: #{tpu_custom_call.1} parent=31 // pred_check
          %p300 = pneg %p65
        $region34: #{tpu_custom_call.1} parent=31 // pred_check_branch
          %302 = sbr.rel (%p300) target = $region36
        $region35: #{tpu_custom_call.1} parent=31 // pred_region
          %s303 = sand.u32 %s24, 1
          %s304 = scalar_lea.sflag [#allocation9], %s303
          %s305 = sand.u32 %s55, 1
          %s306 = smul.addr %s305, 1152
          %s307 = scalar_lea.vmem [#allocation8], %s306
          %s308 = smul.u32 2, %s24
          %s310 = ssub.s32 18432, 18432
          %311 = vsyncadd %s304, %s310
          %s312 = smul.addr %s308, 64
          %s313 = scalar_lea.hbm %s1, %s312
          %s314 = sshll.u32 %s307, 4
          %s315 = int_to_ptr.vmem [resolvable:$true] %s314
          %320 = dma.hbm_to_vmem [thread:$0]  %s313, 18432, %s315, %s304, 256, 128, 8
        $region36: #{tpu_custom_call.1} parent=31 // pred_fallthru
          _
        // Predicated region
        $region37: #{tpu_custom_call.1} parent=31 // pred_check
          %p321 = pneg %p91
        $region38: #{tpu_custom_call.1} parent=31 // pred_check_branch
          %323 = sbr.rel (%p321) target = $region40
        $region39: #{tpu_custom_call.1} parent=31 // pred_region
          %s324 = sand.u32 %s24, 1
          %s325 = scalar_lea.sflag [#allocation9], %s324
          %s326 = sand.u32 %s81, 1
          %s327 = smul.addr %s326, 2
          %s328 = scalar_lea.vmem [#allocation10], %s327
          %s329 = smul.u32 2, %s24
          %s331 = ssub.s32 32, 32
          %332 = vsyncadd %s325, %s331
          %s333 = smul.addr %s329, 16
          %s334 = scalar_lea.hbm %s2, %s333
          %s336 = sshll.u32 %s328, 4
          %s337 = int_to_ptr.vmem [resolvable:$true] %s336
          %339 = dma.hbm_to_vmem [thread:$0]  %s334, 32, %s337, %s325
        $region40: #{tpu_custom_call.1} parent=31 // pred_fallthru
          _
        // Predicated region
        $region41: #{tpu_custom_call.1} parent=31 // pred_check
          %p340 = pneg %p117
        $region42: #{tpu_custom_call.1} parent=31 // pred_check_branch
          %342 = sbr.rel (%p340) target = $region44
        $region43: #{tpu_custom_call.1} parent=31 // pred_region
          %s343 = sand.u32 %s24, 1
          %s344 = scalar_lea.sflag [#allocation12], %s343
          %s345 = sand.u32 %s107, 1
          %s346 = smul.addr %s345, 2
          %s347 = scalar_lea.vmem [#allocation11], %s346
          %s348 = smul.u32 2, %s24
          %s350 = ssub.s32 32, 32
          %351 = vsyncadd %s344, %s350
          %s352 = smul.addr %s348, 16
          %s353 = scalar_lea.hbm %s3, %s352
          %s355 = sshll.u32 %s347, 4
          %s356 = int_to_ptr.vmem [resolvable:$true] %s355
          %358 = dma.hbm_to_vmem [thread:$0]  %s353, 32, %s356, %s344
        $region44: #{tpu_custom_call.1} parent=31 // pred_fallthru
          _
        // Predicated region
        $region45: #{tpu_custom_call.1} parent=31 // pred_check
          %p359 = pneg %p143
        $region46: #{tpu_custom_call.1} parent=31 // pred_check_branch
          %361 = sbr.rel (%p359) target = $region48
        $region47: #{tpu_custom_call.1} parent=31 // pred_region
          %s362 = sand.u32 %s24, 1
          %s363 = scalar_lea.sflag [#allocation12], %s362
          %s364 = sand.u32 %s133, 1
          %s365 = smul.addr %s364, 256
          %s366 = scalar_lea.vmem [#allocation13], %s365
          %s367 = smul.u32 32, %s24
          %s369 = ssub.s32 4096, 4096
          %370 = vsyncadd %s363, %s369
          %s371 = smul.addr %s367, 2
          %s372 = smul.addr %s371, 64
          %s373 = scalar_lea.hbm %s4, %s372
          %s374 = sshll.u32 %s366, 4
          %s375 = int_to_ptr.vmem [resolvable:$true] %s374
          %380 = dma.hbm_to_vmem [thread:$0]  %s373, 4096, %s375, %s363, 128, 128, 8
        $region48: #{tpu_custom_call.1} parent=31 // pred_fallthru
          _
      $region32: #{tpu_custom_call.1} parent=5 // pred_fallthru
        _
      %p381 = scmp.le.s32.totalorder 1, %s24
      %p382 = scmp.lt.s32.totalorder %s24, 3
      %p383 = pnand %p381, %p382
      %p384 = pneg %p383
      // Predicated region
      $region49: #{tpu_custom_call.1} parent=5 // pred_check
        _
      $region50: #{tpu_custom_call.1} parent=5 // pred_check_branch
        %386 = sbr.rel (%p383) target = $region52
      $region51: #{tpu_custom_call.1} parent=5 // pred_region
        %s387 = ssub.s32 %s24, 1
        // Predicated region
        $region53: #{tpu_custom_call.1} parent=51 // pred_check
          %p388 = pneg %p45
        $region54: #{tpu_custom_call.1} parent=51 // pred_check_branch
          %390 = sbr.rel (%p388) target = $region56
        $region55: #{tpu_custom_call.1} parent=51 // pred_region
          %391 = dma.done [#allocation6], 3840
        $region56: #{tpu_custom_call.1} parent=51 // pred_fallthru
          _
        %s392 = sand.u32 %s29, 1
        %s393 = scalar_lea.sflag [#allocation9], %s392
        %s394 = sand.u32 %s58, 1
        %s395 = smul.addr %s394, 1152
        %s396 = scalar_lea.vmem [#allocation8], %s395
        // Predicated region
        $region57: #{tpu_custom_call.1} parent=51 // pred_check
          %p397 = pneg %p71
        $region58: #{tpu_custom_call.1} parent=51 // pred_check_branch
          %399 = sbr.rel (%p397) target = $region60
        $region59: #{tpu_custom_call.1} parent=51 // pred_region
          %400 = dma.done %s393, 18432
        $region60: #{tpu_custom_call.1} parent=51 // pred_fallthru
          _
        %s401 = sand.u32 %s29, 1
        %s402 = scalar_lea.sflag [#allocation9], %s401
        %s403 = sand.u32 %s84, 1
        %s404 = smul.addr %s403, 2
        %s405 = scalar_lea.vmem [#allocation10], %s404
        // Predicated region
        $region61: #{tpu_custom_call.1} parent=51 // pred_check
          %p406 = pneg %p97
        $region62: #{tpu_custom_call.1} parent=51 // pred_check_branch
          %408 = sbr.rel (%p406) target = $region64
        $region63: #{tpu_custom_call.1} parent=51 // pred_region
          %409 = dma.done %s402, 32
        $region64: #{tpu_custom_call.1} parent=51 // pred_fallthru
          _
        %s410 = sand.u32 %s29, 1
        %s411 = scalar_lea.sflag [#allocation12], %s410
        %s412 = sand.u32 %s110, 1
        %s413 = smul.addr %s412, 2
        %s414 = scalar_lea.vmem [#allocation11], %s413
        // Predicated region
        $region65: #{tpu_custom_call.1} parent=51 // pred_check
          %p415 = pneg %p123
        $region66: #{tpu_custom_call.1} parent=51 // pred_check_branch
          %417 = sbr.rel (%p415) target = $region68
        $region67: #{tpu_custom_call.1} parent=51 // pred_region
          %418 = dma.done %s411, 32
        $region68: #{tpu_custom_call.1} parent=51 // pred_fallthru
          _
        %s419 = sand.u32 %s29, 1
        %s420 = scalar_lea.sflag [#allocation12], %s419
        %s421 = sand.u32 %s136, 1
        %s422 = smul.addr %s421, 256
        %s423 = scalar_lea.vmem [#allocation13], %s422
        // Predicated region
        $region69: #{tpu_custom_call.1} parent=51 // pred_check
          %p424 = pneg %p149
        $region70: #{tpu_custom_call.1} parent=51 // pred_check_branch
          %426 = sbr.rel (%p424) target = $region72
        $region71: #{tpu_custom_call.1} parent=51 // pred_region
          %427 = dma.done %s420, 4096
        $region72: #{tpu_custom_call.1} parent=51 // pred_fallthru
          _
        // Predicated region
        $region73: #{tpu_custom_call.1} parent=51 // pred_check
          %p428 = pneg %p170
        $region74: #{tpu_custom_call.1} parent=51 // pred_check_branch
          %430 = sbr.rel (%p428) target = $region76
        $region75: #{tpu_custom_call.1} parent=51 // pred_region
          %431 = dma.done [#allocation15], 32
        $region76: #{tpu_custom_call.1} parent=51 // pred_fallthru
          _
        // Predicated region
        $region77: #{tpu_custom_call.1} parent=51 // pred_check
          %p432 = pneg %p191
        $region78: #{tpu_custom_call.1} parent=51 // pred_check_branch
          %434 = sbr.rel (%p432) target = $region80
        $region79: #{tpu_custom_call.1} parent=51 // pred_region
          %435 = dma.done [#allocation15], 2048
        $region80: #{tpu_custom_call.1} parent=51 // pred_fallthru
          _
        // Predicated region
        $region81: #{tpu_custom_call.1} parent=51 // pred_check
          %p436 = pneg %p212
        $region82: #{tpu_custom_call.1} parent=51 // pred_check_branch
          %438 = sbr.rel (%p436) target = $region84
        $region83: #{tpu_custom_call.1} parent=51 // pred_region
          %439 = dma.done [#allocation18], 16
        $region84: #{tpu_custom_call.1} parent=51 // pred_fallthru
          _
        %p440 = pneg %p45
        %p441 = pneg %p42
        %s442 = sand.u32 %s29, 1
        %s443 = scalar_lea.sflag [#allocation9], %s442
        %s444 = sand.u32 %s58, 1
        %s445 = smul.addr %s444, 1152
        %s446 = scalar_lea.vmem [#allocation8], %s445
        %p447 = pneg %p71
        %p448 = pneg %p68
        %s449 = sand.u32 %s29, 1
        %s450 = scalar_lea.sflag [#allocation9], %s449
        %s451 = sand.u32 %s84, 1
        %s452 = smul.addr %s451, 2
        %s453 = scalar_lea.vmem [#allocation10], %s452
        %p454 = pneg %p97
        %p455 = pneg %p94
        %s456 = sand.u32 %s29, 1
        %s457 = scalar_lea.sflag [#allocation12], %s456
        %s458 = sand.u32 %s110, 1
        %s459 = smul.addr %s458, 2
        %s460 = scalar_lea.vmem [#allocation11], %s459
        %p461 = pneg %p123
        %p462 = pneg %p120
        %s463 = sand.u32 %s29, 1
        %s464 = scalar_lea.sflag [#allocation12], %s463
        %s465 = sand.u32 %s136, 1
        %s466 = smul.addr %s465, 256
        %s467 = scalar_lea.vmem [#allocation13], %s466
        %p468 = pneg %p149
        %p469 = pneg %p146
        %p470 = pneg %p170
        %p471 = pneg %p167
        %p472 = pneg %p191
        %p473 = pneg %p188
        %p474 = pneg %p212
        %p475 = pneg %p209
        %p476 = pneg %p233
        %p477 = pneg %p230
        %s478 = smul.u32 2, %s29
        %s479 = smul.u32 2, %s29
        %s480 = smul.u32 2, %s29
        %s481 = smul.u32 32, %s29
        %p483 = scmp.eq.s32.totalorder %s29, 0
        // Predicated region
        $region85: #{tpu_custom_call.1} parent=51 // pred_check
          %p484 = pneg %p483
        $region86: #{tpu_custom_call.1} parent=51 // pred_check_branch
          %486 = sbr.rel (%p484) target = $region88
        $region87: #{tpu_custom_call.1} parent=51 // pred_region
          %v487 = vld [vmem:[#allocation5] sm:$0xff]
          %v488 = vld [vmem:[#allocation5 + $0x8] sm:$0xf]
          %v489 = vld [vmem:[#allocation5 + $0xc] sm:$0xff]
          %v490 = vld [vmem:[#allocation5 + $0x14] sm:$0xf]
          %v491 = vld [vmem:[#allocation5 + $0x18] sm:$0xff]
          %v492 = vld [vmem:[#allocation5 + $0x20] sm:$0xf]
          %v493 = vld [vmem:[#allocation5 + $0x24] sm:$0xff]
          %v494 = vld [vmem:[#allocation5 + $0x2c] sm:$0xf]
          %v495 = vld [vmem:[#allocation5 + $0x30] sm:$0xff]
          %v496 = vld [vmem:[#allocation5 + $0x38] sm:$0xf]
          %v497 = vld [vmem:[#allocation5 + $0x3c] sm:$0xff]
          %v498 = vld [vmem:[#allocation5 + $0x44] sm:$0xf]
          %v499 = vld [vmem:[#allocation5 + $0x48] sm:$0xff]
          %v500 = vld [vmem:[#allocation5 + $0x50] sm:$0xf]
          %v501 = vld [vmem:[#allocation5 + $0x54] sm:$0xff]
          %v502 = vld [vmem:[#allocation5 + $0x5c] sm:$0xf]
          %v503 = vld [vmem:[#allocation5 + $0x78] sm:$0xff]
          %v504 = vld [vmem:[#allocation5 + $0x80] sm:$0xf]
          %v505 = vld [vmem:[#allocation5 + $0x84] sm:$0xff]
          %v506 = vld [vmem:[#allocation5 + $0x8c] sm:$0xf]
          %v507 = vld [vmem:[#allocation5 + $0x90] sm:$0xff]
          %v508 = vld [vmem:[#allocation5 + $0x98] sm:$0xf]
          %v509 = vld [vmem:[#allocation5 + $0x9c] sm:$0xff]
          %v510 = vld [vmem:[#allocation5 + $0xa4] sm:$0xf]
          %v511 = vld [vmem:[#allocation5 + $0xa8] sm:$0xff]
          %v512 = vld [vmem:[#allocation5 + $0xb0] sm:$0xf]
          %v513 = vld [vmem:[#allocation5 + $0xb4] sm:$0xff]
          %v514 = vld [vmem:[#allocation5 + $0xbc] sm:$0xf]
          %v515 = vld [vmem:[#allocation5 + $0xc0] sm:$0xff]
          %v516 = vld [vmem:[#allocation5 + $0xc8] sm:$0xf]
          %v517 = vld [vmem:[#allocation5 + $0xcc] sm:$0xff]
          %v518 = vld [vmem:[#allocation5 + $0xd4] sm:$0xf]
          %519 = vst [vmem:[#allocation2] sm:$0xff] %v487
          %520 = vst [vmem:[#allocation2 + $0x8] sm:$0xf] %v488
          %521 = vst [vmem:[#allocation2 + $0x24] sm:$0xff] %v489
          %522 = vst [vmem:[#allocation2 + $0x2c] sm:$0xf] %v490
          %523 = vst [vmem:[#allocation2 + $0x48] sm:$0xff] %v491
          %524 = vst [vmem:[#allocation2 + $0x50] sm:$0xf] %v492
          %525 = vst [vmem:[#allocation2 + $0x6c] sm:$0xff] %v493
          %526 = vst [vmem:[#allocation2 + $0x74] sm:$0xf] %v494
          %527 = vst [vmem:[#allocation2 + $0x90] sm:$0xff] %v495
          %528 = vst [vmem:[#allocation2 + $0x98] sm:$0xf] %v496
          %529 = vst [vmem:[#allocation2 + $0xb4] sm:$0xff] %v497
          %530 = vst [vmem:[#allocation2 + $0xbc] sm:$0xf] %v498
          %531 = vst [vmem:[#allocation2 + $0xd8] sm:$0xff] %v499
          %532 = vst [vmem:[#allocation2 + $0xe0] sm:$0xf] %v500
          %533 = vst [vmem:[#allocation2 + $0xfc] sm:$0xff] %v501
          %534 = vst [vmem:[#allocation2 + $0x104] sm:$0xf] %v502
          %535 = vst [vmem:[#allocation2 + $0x120] sm:$0xff] %v503
          %536 = vst [vmem:[#allocation2 + $0x128] sm:$0xf] %v504
          %537 = vst [vmem:[#allocation2 + $0x144] sm:$0xff] %v505
          %538 = vst [vmem:[#allocation2 + $0x14c] sm:$0xf] %v506
          %539 = vst [vmem:[#allocation2 + $0x168] sm:$0xff] %v507
          %540 = vst [vmem:[#allocation2 + $0x170] sm:$0xf] %v508
          %541 = vst [vmem:[#allocation2 + $0x18c] sm:$0xff] %v509
          %542 = vst [vmem:[#allocation2 + $0x194] sm:$0xf] %v510
          %543 = vst [vmem:[#allocation2 + $0x1b0] sm:$0xff] %v511
          %544 = vst [vmem:[#allocation2 + $0x1b8] sm:$0xf] %v512
          %545 = vst [vmem:[#allocation2 + $0x1d4] sm:$0xff] %v513
          %546 = vst [vmem:[#allocation2 + $0x1dc] sm:$0xf] %v514
          %547 = vst [vmem:[#allocation2 + $0x1f8] sm:$0xff] %v515
          %548 = vst [vmem:[#allocation2 + $0x200] sm:$0xf] %v516
          %549 = vst [vmem:[#allocation2 + $0x21c] sm:$0xff] %v517
          %550 = vst [vmem:[#allocation2 + $0x224] sm:$0xf] %v518
          %s551 = scalar_lea.vmem [#allocation5], 12
          %v552 = vld [vmem:[%s551] sm:$0xff]
          %v553 = vld [vmem:[%s551 + $0x8] sm:$0xf]
          %v554 = vld [vmem:[%s551 + $0xc] sm:$0xff]
          %v555 = vld [vmem:[%s551 + $0x14] sm:$0xf]
          %v556 = vld [vmem:[%s551 + $0x18] sm:$0xff]
          %v557 = vld [vmem:[%s551 + $0x20] sm:$0xf]
          %v558 = vld [vmem:[%s551 + $0x24] sm:$0xff]
          %v559 = vld [vmem:[%s551 + $0x2c] sm:$0xf]
          %v560 = vld [vmem:[%s551 + $0x30] sm:$0xff]
          %v561 = vld [vmem:[%s551 + $0x38] sm:$0xf]
          %v562 = vld [vmem:[%s551 + $0x3c] sm:$0xff]
          %v563 = vld [vmem:[%s551 + $0x44] sm:$0xf]
          %v564 = vld [vmem:[%s551 + $0x48] sm:$0xff]
          %v565 = vld [vmem:[%s551 + $0x50] sm:$0xf]
          %v566 = vld [vmem:[%s551 + $0x54] sm:$0xff]
          %v567 = vld [vmem:[%s551 + $0x5c] sm:$0xf]
          %v568 = vld [vmem:[%s551 + $0x78] sm:$0xff]
          %v569 = vld [vmem:[%s551 + $0x80] sm:$0xf]
          %v570 = vld [vmem:[%s551 + $0x84] sm:$0xff]
          %v571 = vld [vmem:[%s551 + $0x8c] sm:$0xf]
          %v572 = vld [vmem:[%s551 + $0x90] sm:$0xff]
          %v573 = vld [vmem:[%s551 + $0x98] sm:$0xf]
          %v574 = vld [vmem:[%s551 + $0x9c] sm:$0xff]
          %v575 = vld [vmem:[%s551 + $0xa4] sm:$0xf]
          %v576 = vld [vmem:[%s551 + $0xa8] sm:$0xff]
          %v577 = vld [vmem:[%s551 + $0xb0] sm:$0xf]
          %v578 = vld [vmem:[%s551 + $0xb4] sm:$0xff]
          %v579 = vld [vmem:[%s551 + $0xbc] sm:$0xf]
          %v580 = vld [vmem:[%s551 + $0xc0] sm:$0xff]
          %v581 = vld [vmem:[%s551 + $0xc8] sm:$0xf]
          %v582 = vld [vmem:[%s551 + $0xcc] sm:$0xff]
          %v583 = vld [vmem:[%s551 + $0xd4] sm:$0xf]
          %584 = vst [vmem:[#allocation2 + $0xc] sm:$0xff] %v552
          %585 = vst [vmem:[#allocation2 + $0x14] sm:$0xf] %v553
          %586 = vst [vmem:[#allocation2 + $0x30] sm:$0xff] %v554
          %587 = vst [vmem:[#allocation2 + $0x38] sm:$0xf] %v555
          %588 = vst [vmem:[#allocation2 + $0x54] sm:$0xff] %v556
          %589 = vst [vmem:[#allocation2 + $0x5c] sm:$0xf] %v557
          %590 = vst [vmem:[#allocation2 + $0x78] sm:$0xff] %v558
          %591 = vst [vmem:[#allocation2 + $0x80] sm:$0xf] %v559
          %592 = vst [vmem:[#allocation2 + $0x9c] sm:$0xff] %v560
          %593 = vst [vmem:[#allocation2 + $0xa4] sm:$0xf] %v561
          %594 = vst [vmem:[#allocation2 + $0xc0] sm:$0xff] %v562
          %595 = vst [vmem:[#allocation2 + $0xc8] sm:$0xf] %v563
          %596 = vst [vmem:[#allocation2 + $0xe4] sm:$0xff] %v564
          %597 = vst [vmem:[#allocation2 + $0xec] sm:$0xf] %v565
          %598 = vst [vmem:[#allocation2 + $0x108] sm:$0xff] %v566
          %599 = vst [vmem:[#allocation2 + $0x110] sm:$0xf] %v567
          %600 = vst [vmem:[#allocation2 + $0x12c] sm:$0xff] %v568
          %601 = vst [vmem:[#allocation2 + $0x134] sm:$0xf] %v569
          %602 = vst [vmem:[#allocation2 + $0x150] sm:$0xff] %v570
          %603 = vst [vmem:[#allocation2 + $0x158] sm:$0xf] %v571
          %604 = vst [vmem:[#allocation2 + $0x174] sm:$0xff] %v572
          %605 = vst [vmem:[#allocation2 + $0x17c] sm:$0xf] %v573
          %606 = vst [vmem:[#allocation2 + $0x198] sm:$0xff] %v574
          %607 = vst [vmem:[#allocation2 + $0x1a0] sm:$0xf] %v575
          %608 = vst [vmem:[#allocation2 + $0x1bc] sm:$0xff] %v576
          %609 = vst [vmem:[#allocation2 + $0x1c4] sm:$0xf] %v577
          %610 = vst [vmem:[#allocation2 + $0x1e0] sm:$0xff] %v578
          %611 = vst [vmem:[#allocation2 + $0x1e8] sm:$0xf] %v579
          %612 = vst [vmem:[#allocation2 + $0x204] sm:$0xff] %v580
          %613 = vst [vmem:[#allocation2 + $0x20c] sm:$0xf] %v581
          %614 = vst [vmem:[#allocation2 + $0x228] sm:$0xff] %v582
          %615 = vst [vmem:[#allocation2 + $0x230] sm:$0xf] %v583
          %s616 = scalar_lea.vmem [#allocation5], 24
          %v617 = vld [vmem:[%s616] sm:$0xff]
          %v618 = vld [vmem:[%s616 + $0x8] sm:$0xf]
          %v619 = vld [vmem:[%s616 + $0xc] sm:$0xff]
          %v620 = vld [vmem:[%s616 + $0x14] sm:$0xf]
          %v621 = vld [vmem:[%s616 + $0x18] sm:$0xff]
          %v622 = vld [vmem:[%s616 + $0x20] sm:$0xf]
          %v623 = vld [vmem:[%s616 + $0x24] sm:$0xff]
          %v624 = vld [vmem:[%s616 + $0x2c] sm:$0xf]
          %v625 = vld [vmem:[%s616 + $0x30] sm:$0xff]
          %v626 = vld [vmem:[%s616 + $0x38] sm:$0xf]
          %v627 = vld [vmem:[%s616 + $0x3c] sm:$0xff]
          %v628 = vld [vmem:[%s616 + $0x44] sm:$0xf]
          %v629 = vld [vmem:[%s616 + $0x48] sm:$0xff]
          %v630 = vld [vmem:[%s616 + $0x50] sm:$0xf]
          %v631 = vld [vmem:[%s616 + $0x54] sm:$0xff]
          %v632 = vld [vmem:[%s616 + $0x5c] sm:$0xf]
          %v633 = vld [vmem:[%s616 + $0x78] sm:$0xff]
          %v634 = vld [vmem:[%s616 + $0x80] sm:$0xf]
          %v635 = vld [vmem:[%s616 + $0x84] sm:$0xff]
          %v636 = vld [vmem:[%s616 + $0x8c] sm:$0xf]
          %v637 = vld [vmem:[%s616 + $0x90] sm:$0xff]
          %v638 = vld [vmem:[%s616 + $0x98] sm:$0xf]
          %v639 = vld [vmem:[%s616 + $0x9c] sm:$0xff]
          %v640 = vld [vmem:[%s616 + $0xa4] sm:$0xf]
          %v641 = vld [vmem:[%s616 + $0xa8] sm:$0xff]
          %v642 = vld [vmem:[%s616 + $0xb0] sm:$0xf]
          %v643 = vld [vmem:[%s616 + $0xb4] sm:$0xff]
          %v644 = vld [vmem:[%s616 + $0xbc] sm:$0xf]
          %v645 = vld [vmem:[%s616 + $0xc0] sm:$0xff]
          %v646 = vld [vmem:[%s616 + $0xc8] sm:$0xf]
          %v647 = vld [vmem:[%s616 + $0xcc] sm:$0xff]
          %v648 = vld [vmem:[%s616 + $0xd4] sm:$0xf]
          %649 = vst [vmem:[#allocation2 + $0x18] sm:$0xff] %v617
          %650 = vst [vmem:[#allocation2 + $0x20] sm:$0xf] %v618
          %651 = vst [vmem:[#allocation2 + $0x3c] sm:$0xff] %v619
          %652 = vst [vmem:[#allocation2 + $0x44] sm:$0xf] %v620
          %653 = vst [vmem:[#allocation2 + $0x60] sm:$0xff] %v621
          %654 = vst [vmem:[#allocation2 + $0x68] sm:$0xf] %v622
          %655 = vst [vmem:[#allocation2 + $0x84] sm:$0xff] %v623
          %656 = vst [vmem:[#allocation2 + $0x8c] sm:$0xf] %v624
          %657 = vst [vmem:[#allocation2 + $0xa8] sm:$0xff] %v625
          %658 = vst [vmem:[#allocation2 + $0xb0] sm:$0xf] %v626
          %659 = vst [vmem:[#allocation2 + $0xcc] sm:$0xff] %v627
          %660 = vst [vmem:[#allocation2 + $0xd4] sm:$0xf] %v628
          %661 = vst [vmem:[#allocation2 + $0xf0] sm:$0xff] %v629
          %662 = vst [vmem:[#allocation2 + $0xf8] sm:$0xf] %v630
          %663 = vst [vmem:[#allocation2 + $0x114] sm:$0xff] %v631
          %664 = vst [vmem:[#allocation2 + $0x11c] sm:$0xf] %v632
          %665 = vst [vmem:[#allocation2 + $0x138] sm:$0xff] %v633
          %666 = vst [vmem:[#allocation2 + $0x140] sm:$0xf] %v634
          %667 = vst [vmem:[#allocation2 + $0x15c] sm:$0xff] %v635
          %668 = vst [vmem:[#allocation2 + $0x164] sm:$0xf] %v636
          %669 = vst [vmem:[#allocation2 + $0x180] sm:$0xff] %v637
          %670 = vst [vmem:[#allocation2 + $0x188] sm:$0xf] %v638
          %671 = vst [vmem:[#allocation2 + $0x1a4] sm:$0xff] %v639
          %672 = vst [vmem:[#allocation2 + $0x1ac] sm:$0xf] %v640
          %673 = vst [vmem:[#allocation2 + $0x1c8] sm:$0xff] %v641
          %674 = vst [vmem:[#allocation2 + $0x1d0] sm:$0xf] %v642
          %675 = vst [vmem:[#allocation2 + $0x1ec] sm:$0xff] %v643
          %676 = vst [vmem:[#allocation2 + $0x1f4] sm:$0xf] %v644
          %677 = vst [vmem:[#allocation2 + $0x210] sm:$0xff] %v645
          %678 = vst [vmem:[#allocation2 + $0x218] sm:$0xf] %v646
          %679 = vst [vmem:[#allocation2 + $0x234] sm:$0xff] %v647
          %680 = vst [vmem:[#allocation2 + $0x23c] sm:$0xf] %v648
          %681 = vst [vmem:[#allocation4] sm:$0xf] 0.0
        $region88: #{tpu_custom_call.1} parent=51 // pred_fallthru
          _
        %v682 = vld [vmem:[#allocation2] sm:$0xff]
        %v683 = vld [vmem:[#allocation2 + $0x8] sm:$0xff]
        %v684 = vld [vmem:[#allocation2 + $0x10] sm:$0xff]
        %v685 = vld [vmem:[#allocation2 + $0x18] sm:$0xff]
        %v686 = vld [vmem:[#allocation2 + $0x20] sm:$0xf]
        %v687 = vld [vmem:[#allocation2 + $0x24] sm:$0xff]
        %v688 = vld [vmem:[#allocation2 + $0x2c] sm:$0xff]
        %v689 = vld [vmem:[#allocation2 + $0x34] sm:$0xff]
        %v690 = vld [vmem:[#allocation2 + $0x3c] sm:$0xff]
        %v691 = vld [vmem:[#allocation2 + $0x44] sm:$0xf]
        %v692 = vld [vmem:[#allocation2 + $0x48] sm:$0xff]
        %v693 = vld [vmem:[#allocation2 + $0x50] sm:$0xff]
        %v694 = vld [vmem:[#allocation2 + $0x58] sm:$0xff]
        %v695 = vld [vmem:[#allocation2 + $0x60] sm:$0xff]
        %v696 = vld [vmem:[#allocation2 + $0x68] sm:$0xf]
        %v697 = vld [vmem:[#allocation2 + $0x6c] sm:$0xff]
        %v698 = vld [vmem:[#allocation2 + $0x74] sm:$0xff]
        %v699 = vld [vmem:[#allocation2 + $0x7c] sm:$0xff]
        %v700 = vld [vmem:[#allocation2 + $0x84] sm:$0xff]
        %v701 = vld [vmem:[#allocation2 + $0x8c] sm:$0xf]
        %v702 = vld [vmem:[#allocation2 + $0x90] sm:$0xff]
        %v703 = vld [vmem:[#allocation2 + $0x98] sm:$0xff]
        %v704 = vld [vmem:[#allocation2 + $0xa0] sm:$0xff]
        %v705 = vld [vmem:[#allocation2 + $0xa8] sm:$0xff]
        %v706 = vld [vmem:[#allocation2 + $0xb0] sm:$0xf]
        %v707 = vld [vmem:[#allocation2 + $0xb4] sm:$0xff]
        %v708 = vld [vmem:[#allocation2 + $0xbc] sm:$0xff]
        %v709 = vld [vmem:[#allocation2 + $0xc4] sm:$0xff]
        %v710 = vld [vmem:[#allocation2 + $0xcc] sm:$0xff]
        %v711 = vld [vmem:[#allocation2 + $0xd4] sm:$0xf]
        %v712 = vld [vmem:[#allocation2 + $0xd8] sm:$0xff]
        %v713 = vld [vmem:[#allocation2 + $0xe0] sm:$0xff]
        %v714 = vld [vmem:[#allocation2 + $0xe8] sm:$0xff]
        %v715 = vld [vmem:[#allocation2 + $0xf0] sm:$0xff]
        %v716 = vld [vmem:[#allocation2 + $0xf8] sm:$0xf]
        %v717 = vld [vmem:[#allocation2 + $0xfc] sm:$0xff]
        %v718 = vld [vmem:[#allocation2 + $0x104] sm:$0xff]
        %v719 = vld [vmem:[#allocation2 + $0x10c] sm:$0xff]
        %v720 = vld [vmem:[#allocation2 + $0x114] sm:$0xff]
        %v721 = vld [vmem:[#allocation2 + $0x11c] sm:$0xf]
        %v722 = vld [vmem:[#allocation2 + $0x120] sm:$0xff]
        %v723 = vld [vmem:[#allocation2 + $0x128] sm:$0xff]
        %v724 = vld [vmem:[#allocation2 + $0x130] sm:$0xff]
        %v725 = vld [vmem:[#allocation2 + $0x138] sm:$0xff]
        %v726 = vld [vmem:[#allocation2 + $0x140] sm:$0xf]
        %v727 = vld [vmem:[#allocation2 + $0x144] sm:$0xff]
        %v728 = vld [vmem:[#allocation2 + $0x14c] sm:$0xff]
        %v729 = vld [vmem:[#allocation2 + $0x154] sm:$0xff]
        %v730 = vld [vmem:[#allocation2 + $0x15c] sm:$0xff]
        %v731 = vld [vmem:[#allocation2 + $0x164] sm:$0xf]
        %v732 = vld [vmem:[#allocation2 + $0x168] sm:$0xff]
        %v733 = vld [vmem:[#allocation2 + $0x170] sm:$0xff]
        %v734 = vld [vmem:[#allocation2 + $0x178] sm:$0xff]
        %v735 = vld [vmem:[#allocation2 + $0x180] sm:$0xff]
        %v736 = vld [vmem:[#allocation2 + $0x188] sm:$0xf]
        %v737 = vld [vmem:[#allocation2 + $0x18c] sm:$0xff]
        %v738 = vld [vmem:[#allocation2 + $0x194] sm:$0xff]
        %v739 = vld [vmem:[#allocation2 + $0x19c] sm:$0xff]
        %v740 = vld [vmem:[#allocation2 + $0x1a4] sm:$0xff]
        %v741 = vld [vmem:[#allocation2 + $0x1ac] sm:$0xf]
        %v742 = vld [vmem:[#allocation2 + $0x1b0] sm:$0xff]
        %v743 = vld [vmem:[#allocation2 + $0x1b8] sm:$0xff]
        %v744 = vld [vmem:[#allocation2 + $0x1c0] sm:$0xff]
        %v745 = vld [vmem:[#allocation2 + $0x1c8] sm:$0xff]
        %v746 = vld [vmem:[#allocation2 + $0x1d0] sm:$0xf]
        %v747 = vld [vmem:[#allocation2 + $0x1d4] sm:$0xff]
        %v748 = vld [vmem:[#allocation2 + $0x1dc] sm:$0xff]
        %v749 = vld [vmem:[#allocation2 + $0x1e4] sm:$0xff]
        %v750 = vld [vmem:[#allocation2 + $0x1ec] sm:$0xff]
        %v751 = vld [vmem:[#allocation2 + $0x1f4] sm:$0xf]
        %v752 = vld [vmem:[#allocation2 + $0x1f8] sm:$0xff]
        %v753 = vld [vmem:[#allocation2 + $0x200] sm:$0xff]
        %v754 = vld [vmem:[#allocation2 + $0x208] sm:$0xff]
        %v755 = vld [vmem:[#allocation2 + $0x210] sm:$0xff]
        %v756 = vld [vmem:[#allocation2 + $0x218] sm:$0xf]
        %v757 = vld [vmem:[#allocation2 + $0x21c] sm:$0xff]
        %v758 = vld [vmem:[#allocation2 + $0x224] sm:$0xff]
        %v759 = vld [vmem:[#allocation2 + $0x22c] sm:$0xff]
        %v760 = vld [vmem:[#allocation2 + $0x234] sm:$0xff]
        %v761 = vld [vmem:[#allocation2 + $0x23c] sm:$0xf]
        %v762 = vld [vmem:[%s396] sm:$0xff]
        %v763 = vld [vmem:[%s396 + $0x8] sm:$0xff]
        %v764 = vld [vmem:[%s396 + $0x10] sm:$0xff]
        %v765 = vld [vmem:[%s396 + $0x18] sm:$0xff]
        %v766 = vld [vmem:[%s396 + $0x20] sm:$0xff]
        %v767 = vld [vmem:[%s396 + $0x28] sm:$0xff]
        %v768 = vld [vmem:[%s396 + $0x30] sm:$0xff]
        %v769 = vld [vmem:[%s396 + $0x38] sm:$0xff]
        %v770 = vld [vmem:[%s396 + $0x40] sm:$0xff]
        %v771 = vld [vmem:[%s396 + $0x48] sm:$0xff]
        %v772 = vld [vmem:[%s396 + $0x50] sm:$0xff]
        %v773 = vld [vmem:[%s396 + $0x58] sm:$0xff]
        %v774 = vld [vmem:[%s396 + $0x60] sm:$0xff]
        %v775 = vld [vmem:[%s396 + $0x68] sm:$0xff]
        %v776 = vld [vmem:[%s396 + $0x70] sm:$0xff]
        %v777 = vld [vmem:[%s396 + $0x78] sm:$0xff]
        %v778 = vld [vmem:[%s396 + $0x80] sm:$0xff]
        %v779 = vld [vmem:[%s396 + $0x88] sm:$0xff]
        %v780 = vld [vmem:[%s396 + $0x90] sm:$0xff]
        %v781 = vld [vmem:[%s396 + $0x98] sm:$0xff]
        %v782 = vld [vmem:[%s396 + $0xa0] sm:$0xff]
        %v783 = vld [vmem:[%s396 + $0xa8] sm:$0xff]
        %v784 = vld [vmem:[%s396 + $0xb0] sm:$0xff]
        %v785 = vld [vmem:[%s396 + $0xb8] sm:$0xff]
        %v786 = vld [vmem:[%s396 + $0xc0] sm:$0xff]
        %v787 = vld [vmem:[%s396 + $0xc8] sm:$0xff]
        %v788 = vld [vmem:[%s396 + $0xd0] sm:$0xff]
        %v789 = vld [vmem:[%s396 + $0xd8] sm:$0xff]
        %v790 = vld [vmem:[%s396 + $0xe0] sm:$0xff]
        %v791 = vld [vmem:[%s396 + $0xe8] sm:$0xff]
        %v792 = vld [vmem:[%s396 + $0xf0] sm:$0xff]
        %v793 = vld [vmem:[%s396 + $0xf8] sm:$0xff]
        %v794 = vld [vmem:[%s396 + $0x100] sm:$0xff]
        %v795 = vld [vmem:[%s396 + $0x108] sm:$0xff]
        %v796 = vld [vmem:[%s396 + $0x110] sm:$0xff]
        %v797 = vld [vmem:[%s396 + $0x118] sm:$0xff]
        %v798 = vld [vmem:[%s396 + $0x120] sm:$0xff]
        %v799 = vld [vmem:[%s396 + $0x128] sm:$0xff]
        %v800 = vld [vmem:[%s396 + $0x130] sm:$0xff]
        %v801 = vld [vmem:[%s396 + $0x138] sm:$0xff]
        %v802 = vld [vmem:[%s396 + $0x140] sm:$0xff]
        %v803 = vld [vmem:[%s396 + $0x148] sm:$0xff]
        %v804 = vld [vmem:[%s396 + $0x150] sm:$0xff]
        %v805 = vld [vmem:[%s396 + $0x158] sm:$0xff]
        %v806 = vld [vmem:[%s396 + $0x160] sm:$0xff]
        %v807 = vld [vmem:[%s396 + $0x168] sm:$0xff]
        %v808 = vld [vmem:[%s396 + $0x170] sm:$0xff]
        %v809 = vld [vmem:[%s396 + $0x178] sm:$0xff]
        %v810 = vld [vmem:[%s396 + $0x180] sm:$0xff]
        %v811 = vld [vmem:[%s396 + $0x188] sm:$0xff]
        %v812 = vld [vmem:[%s396 + $0x190] sm:$0xff]
        %v813 = vld [vmem:[%s396 + $0x198] sm:$0xff]
        %v814 = vld [vmem:[%s396 + $0x1a0] sm:$0xff]
        %v815 = vld [vmem:[%s396 + $0x1a8] sm:$0xff]
        %v816 = vld [vmem:[%s396 + $0x1b0] sm:$0xff]
        %v817 = vld [vmem:[%s396 + $0x1b8] sm:$0xff]
        %v818 = vld [vmem:[%s396 + $0x1c0] sm:$0xff]
        %v819 = vld [vmem:[%s396 + $0x1c8] sm:$0xff]
        %v820 = vld [vmem:[%s396 + $0x1d0] sm:$0xff]
        %v821 = vld [vmem:[%s396 + $0x1d8] sm:$0xff]
        %v822 = vld [vmem:[%s396 + $0x1e0] sm:$0xff]
        %v823 = vld [vmem:[%s396 + $0x1e8] sm:$0xff]
        %v824 = vld [vmem:[%s396 + $0x1f0] sm:$0xff]
        %v825 = vld [vmem:[%s396 + $0x1f8] sm:$0xff]
        %v826 = vld [vmem:[%s396 + $0x200] sm:$0xff]
        %v827 = vld [vmem:[%s396 + $0x208] sm:$0xff]
        %v828 = vld [vmem:[%s396 + $0x210] sm:$0xff]
        %v829 = vld [vmem:[%s396 + $0x218] sm:$0xff]
        %v830 = vld [vmem:[%s396 + $0x220] sm:$0xff]
        %v831 = vld [vmem:[%s396 + $0x228] sm:$0xff]
        %v832 = vld [vmem:[%s396 + $0x230] sm:$0xff]
        %v833 = vld [vmem:[%s396 + $0x238] sm:$0xff]
        %v834 = vld [vmem:[%s396 + $0x240] sm:$0xff]
        %v835 = vld [vmem:[%s396 + $0x248] sm:$0xff]
        %v836 = vld [vmem:[%s396 + $0x250] sm:$0xff]
        %v837 = vld [vmem:[%s396 + $0x258] sm:$0xff]
        %v838 = vld [vmem:[%s396 + $0x260] sm:$0xff]
        %v839 = vld [vmem:[%s396 + $0x268] sm:$0xff]
        %v840 = vld [vmem:[%s396 + $0x270] sm:$0xff]
        %v841 = vld [vmem:[%s396 + $0x278] sm:$0xff]
        %v842 = vld [vmem:[%s396 + $0x280] sm:$0xff]
        %v843 = vld [vmem:[%s396 + $0x288] sm:$0xff]
        %v844 = vld [vmem:[%s396 + $0x290] sm:$0xff]
        %v845 = vld [vmem:[%s396 + $0x298] sm:$0xff]
        %v846 = vld [vmem:[%s396 + $0x2a0] sm:$0xff]
        %v847 = vld [vmem:[%s396 + $0x2a8] sm:$0xff]
        %v848 = vld [vmem:[%s396 + $0x2b0] sm:$0xff]
        %v849 = vld [vmem:[%s396 + $0x2b8] sm:$0xff]
        %v850 = vld [vmem:[%s396 + $0x2c0] sm:$0xff]
        %v851 = vld [vmem:[%s396 + $0x2c8] sm:$0xff]
        %v852 = vld [vmem:[%s396 + $0x2d0] sm:$0xff]
        %v853 = vld [vmem:[%s396 + $0x2d8] sm:$0xff]
        %v854 = vld [vmem:[%s396 + $0x2e0] sm:$0xff]
        %v855 = vld [vmem:[%s396 + $0x2e8] sm:$0xff]
        %v856 = vld [vmem:[%s396 + $0x2f0] sm:$0xff]
        %v857 = vld [vmem:[%s396 + $0x2f8] sm:$0xff]
        %v858 = vld [vmem:[%s396 + $0x300] sm:$0xff]
        %v859 = vld [vmem:[%s396 + $0x308] sm:$0xff]
        %v860 = vld [vmem:[%s396 + $0x310] sm:$0xff]
        %v861 = vld [vmem:[%s396 + $0x318] sm:$0xff]
        %v862 = vld [vmem:[%s396 + $0x320] sm:$0xff]
        %v863 = vld [vmem:[%s396 + $0x328] sm:$0xff]
        %v864 = vld [vmem:[%s396 + $0x330] sm:$0xff]
        %v865 = vld [vmem:[%s396 + $0x338] sm:$0xff]
        %v866 = vld [vmem:[%s396 + $0x340] sm:$0xff]
        %v867 = vld [vmem:[%s396 + $0x348] sm:$0xff]
        %v868 = vld [vmem:[%s396 + $0x350] sm:$0xff]
        %v869 = vld [vmem:[%s396 + $0x358] sm:$0xff]
        %v870 = vld [vmem:[%s396 + $0x360] sm:$0xff]
        %v871 = vld [vmem:[%s396 + $0x368] sm:$0xff]
        %v872 = vld [vmem:[%s396 + $0x370] sm:$0xff]
        %v873 = vld [vmem:[%s396 + $0x378] sm:$0xff]
        %v874 = vld [vmem:[%s396 + $0x380] sm:$0xff]
        %v875 = vld [vmem:[%s396 + $0x388] sm:$0xff]
        %v876 = vld [vmem:[%s396 + $0x390] sm:$0xff]
        %v877 = vld [vmem:[%s396 + $0x398] sm:$0xff]
        %v878 = vld [vmem:[%s396 + $0x3a0] sm:$0xff]
        %v879 = vld [vmem:[%s396 + $0x3a8] sm:$0xff]
        %v880 = vld [vmem:[%s396 + $0x3b0] sm:$0xff]
        %v881 = vld [vmem:[%s396 + $0x3b8] sm:$0xff]
        %v882 = vld [vmem:[%s396 + $0x3c0] sm:$0xff]
        %v883 = vld [vmem:[%s396 + $0x3c8] sm:$0xff]
        %v884 = vld [vmem:[%s396 + $0x3d0] sm:$0xff]
        %v885 = vld [vmem:[%s396 + $0x3d8] sm:$0xff]
        %v886 = vld [vmem:[%s396 + $0x3e0] sm:$0xff]
        %v887 = vld [vmem:[%s396 + $0x3e8] sm:$0xff]
        %v888 = vld [vmem:[%s396 + $0x3f0] sm:$0xff]
        %v889 = vld [vmem:[%s396 + $0x3f8] sm:$0xff]
        %v890 = vld [vmem:[%s396 + $0x400] sm:$0xff]
        %v891 = vld [vmem:[%s396 + $0x408] sm:$0xff]
        %v892 = vld [vmem:[%s396 + $0x410] sm:$0xff]
        %v893 = vld [vmem:[%s396 + $0x418] sm:$0xff]
        %v894 = vld [vmem:[%s396 + $0x420] sm:$0xff]
        %v895 = vld [vmem:[%s396 + $0x428] sm:$0xff]
        %v896 = vld [vmem:[%s396 + $0x430] sm:$0xff]
        %v897 = vld [vmem:[%s396 + $0x438] sm:$0xff]
        %v898 = vld [vmem:[%s396 + $0x440] sm:$0xff]
        %v899 = vld [vmem:[%s396 + $0x448] sm:$0xff]
        %v900 = vld [vmem:[%s396 + $0x450] sm:$0xff]
        %v901 = vld [vmem:[%s396 + $0x458] sm:$0xff]
        %v902 = vld [vmem:[%s396 + $0x460] sm:$0xff]
        %v903 = vld [vmem:[%s396 + $0x468] sm:$0xff]
        %v904 = vld [vmem:[%s396 + $0x470] sm:$0xff]
        %v905 = vld [vmem:[%s396 + $0x478] sm:$0xff]
        %v986 = vunpack.c.l.b16 %v682
        %v987 = vunpack.c.h.b16 %v682
        %v988 = vunpack.c.l.b16 %v683
        %v989 = vunpack.c.h.b16 %v683
        %v990 = vunpack.c.l.b16 %v684
        %v991 = vunpack.c.h.b16 %v684
        %v992 = vunpack.c.l.b16 %v685
        %v993 = vunpack.c.h.b16 %v685
        %v994 = vunpack.c.l.b16 %v686
        %v995 = vunpack.c.l.b16 %v687
        %v996 = vunpack.c.h.b16 %v687
        %v997 = vunpack.c.l.b16 %v688
        %v998 = vunpack.c.h.b16 %v688
        %v999 = vunpack.c.l.b16 %v689
        %v1000 = vunpack.c.h.b16 %v689
        %v1001 = vunpack.c.l.b16 %v690
        %v1002 = vunpack.c.h.b16 %v690
        %v1003 = vunpack.c.l.b16 %v691
        %v1004 = vunpack.c.l.b16 %v692
        %v1005 = vunpack.c.h.b16 %v692
        %v1006 = vunpack.c.l.b16 %v693
        %v1007 = vunpack.c.h.b16 %v693
        %v1008 = vunpack.c.l.b16 %v694
        %v1009 = vunpack.c.h.b16 %v694
        %v1010 = vunpack.c.l.b16 %v695
        %v1011 = vunpack.c.h.b16 %v695
        %v1012 = vunpack.c.l.b16 %v696
        %v1013 = vunpack.c.l.b16 %v697
        %v1014 = vunpack.c.h.b16 %v697
        %v1015 = vunpack.c.l.b16 %v698
        %v1016 = vunpack.c.h.b16 %v698
        %v1017 = vunpack.c.l.b16 %v699
        %v1018 = vunpack.c.h.b16 %v699
        %v1019 = vunpack.c.l.b16 %v700
        %v1020 = vunpack.c.h.b16 %v700
        %v1021 = vunpack.c.l.b16 %v701
        %v1022 = vunpack.c.l.b16 %v702
        %v1023 = vunpack.c.h.b16 %v702
        %v1024 = vunpack.c.l.b16 %v703
        %v1025 = vunpack.c.h.b16 %v703
        %v1026 = vunpack.c.l.b16 %v704
        %v1027 = vunpack.c.h.b16 %v704
        %v1028 = vunpack.c.l.b16 %v705
        %v1029 = vunpack.c.h.b16 %v705
        %v1030 = vunpack.c.l.b16 %v706
        %v1031 = vunpack.c.l.b16 %v707
        %v1032 = vunpack.c.h.b16 %v707
        %v1033 = vunpack.c.l.b16 %v708
        %v1034 = vunpack.c.h.b16 %v708
        %v1035 = vunpack.c.l.b16 %v709
        %v1036 = vunpack.c.h.b16 %v709
        %v1037 = vunpack.c.l.b16 %v710
        %v1038 = vunpack.c.h.b16 %v710
        %v1039 = vunpack.c.l.b16 %v711
        %v1040 = vunpack.c.l.b16 %v712
        %v1041 = vunpack.c.h.b16 %v712
        %v1042 = vunpack.c.l.b16 %v713
        %v1043 = vunpack.c.h.b16 %v713
        %v1044 = vunpack.c.l.b16 %v714
        %v1045 = vunpack.c.h.b16 %v714
        %v1046 = vunpack.c.l.b16 %v715
        %v1047 = vunpack.c.h.b16 %v715
        %v1048 = vunpack.c.l.b16 %v716
        %v1049 = vunpack.c.l.b16 %v717
        %v1050 = vunpack.c.h.b16 %v717
        %v1051 = vunpack.c.l.b16 %v718
        %v1052 = vunpack.c.h.b16 %v718
        %v1053 = vunpack.c.l.b16 %v719
        %v1054 = vunpack.c.h.b16 %v719
        %v1055 = vunpack.c.l.b16 %v720
        %v1056 = vunpack.c.h.b16 %v720
        %v1057 = vunpack.c.l.b16 %v721
        %v1058 = vunpack.c.l.b16 %v722
        %v1059 = vunpack.c.h.b16 %v722
        %v1060 = vunpack.c.l.b16 %v723
        %v1061 = vunpack.c.h.b16 %v723
        %v1062 = vunpack.c.l.b16 %v724
        %v1063 = vunpack.c.h.b16 %v724
        %v1064 = vunpack.c.l.b16 %v725
        %v1065 = vunpack.c.h.b16 %v725
        %v1066 = vunpack.c.l.b16 %v726
        %v1067 = vunpack.c.l.b16 %v727
        %v1068 = vunpack.c.h.b16 %v727
        %v1069 = vunpack.c.l.b16 %v728
        %v1070 = vunpack.c.h.b16 %v728
        %v1071 = vunpack.c.l.b16 %v729
        %v1072 = vunpack.c.h.b16 %v729
        %v1073 = vunpack.c.l.b16 %v730
        %v1074 = vunpack.c.h.b16 %v730
        %v1075 = vunpack.c.l.b16 %v731
        %v1076 = vunpack.c.l.b16 %v732
        %v1077 = vunpack.c.h.b16 %v732
        %v1078 = vunpack.c.l.b16 %v733
        %v1079 = vunpack.c.h.b16 %v733
        %v1080 = vunpack.c.l.b16 %v734
        %v1081 = vunpack.c.h.b16 %v734
        %v1082 = vunpack.c.l.b16 %v735
        %v1083 = vunpack.c.h.b16 %v735
        %v1084 = vunpack.c.l.b16 %v736
        %v1085 = vunpack.c.l.b16 %v737
        %v1086 = vunpack.c.h.b16 %v737
        %v1087 = vunpack.c.l.b16 %v738
        %v1088 = vunpack.c.h.b16 %v738
        %v1089 = vunpack.c.l.b16 %v739
        %v1090 = vunpack.c.h.b16 %v739
        %v1091 = vunpack.c.l.b16 %v740
        %v1092 = vunpack.c.h.b16 %v740
        %v1093 = vunpack.c.l.b16 %v741
        %v1094 = vunpack.c.l.b16 %v742
        %v1095 = vunpack.c.h.b16 %v742
        %v1096 = vunpack.c.l.b16 %v743
        %v1097 = vunpack.c.h.b16 %v743
        %v1098 = vunpack.c.l.b16 %v744
        %v1099 = vunpack.c.h.b16 %v744
        %v1100 = vunpack.c.l.b16 %v745
        %v1101 = vunpack.c.h.b16 %v745
        %v1102 = vunpack.c.l.b16 %v746
        %v1103 = vunpack.c.l.b16 %v747
        %v1104 = vunpack.c.h.b16 %v747
        %v1105 = vunpack.c.l.b16 %v748
        %v1106 = vunpack.c.h.b16 %v748
        %v1107 = vunpack.c.l.b16 %v749
        %v1108 = vunpack.c.h.b16 %v749
        %v1109 = vunpack.c.l.b16 %v750
        %v1110 = vunpack.c.h.b16 %v750
        %v1111 = vunpack.c.l.b16 %v751
        %v1112 = vunpack.c.l.b16 %v752
        %v1113 = vunpack.c.h.b16 %v752
        %v1114 = vunpack.c.l.b16 %v753
        %v1115 = vunpack.c.h.b16 %v753
        %v1116 = vunpack.c.l.b16 %v754
        %v1117 = vunpack.c.h.b16 %v754
        %v1118 = vunpack.c.l.b16 %v755
        %v1119 = vunpack.c.h.b16 %v755
        %v1120 = vunpack.c.l.b16 %v756
        %v1121 = vunpack.c.l.b16 %v757
        %v1122 = vunpack.c.h.b16 %v757
        %v1123 = vunpack.c.l.b16 %v758
        %v1124 = vunpack.c.h.b16 %v758
        %v1125 = vunpack.c.l.b16 %v759
        %v1126 = vunpack.c.h.b16 %v759
        %v1127 = vunpack.c.l.b16 %v760
        %v1128 = vunpack.c.h.b16 %v760
        %v1129 = vunpack.c.l.b16 %v761
        %v1130 = vpack.c.b16 %v995, %v986
        %v1131 = vpack.c.b16 %v996, %v987
        %v1132 = vpack.c.b16 %v997, %v988
        %v1133 = vpack.c.b16 %v998, %v989
        %v1134 = vpack.c.b16 %v999, %v990
        %v1135 = vpack.c.b16 %v1000, %v991
        %v1136 = vpack.c.b16 %v1001, %v992
        %v1137 = vpack.c.b16 %v1002, %v993
        %v1138 = vpack.c.b16 %v1003, %v994
        %v1139 = vpack.c.b16 %v1013, %v1004
        %v1140 = vpack.c.b16 %v1014, %v1005
        %v1141 = vpack.c.b16 %v1015, %v1006
        %v1142 = vpack.c.b16 %v1016, %v1007
        %v1143 = vpack.c.b16 %v1017, %v1008
        %v1144 = vpack.c.b16 %v1018, %v1009
        %v1145 = vpack.c.b16 %v1019, %v1010
        %v1146 = vpack.c.b16 %v1020, %v1011
        %v1147 = vpack.c.b16 %v1021, %v1012
        %v1148 = vpack.c.b16 %v1031, %v1022
        %v1149 = vpack.c.b16 %v1032, %v1023
        %v1150 = vpack.c.b16 %v1033, %v1024
        %v1151 = vpack.c.b16 %v1034, %v1025
        %v1152 = vpack.c.b16 %v1035, %v1026
        %v1153 = vpack.c.b16 %v1036, %v1027
        %v1154 = vpack.c.b16 %v1037, %v1028
        %v1155 = vpack.c.b16 %v1038, %v1029
        %v1156 = vpack.c.b16 %v1039, %v1030
        %v1157 = vpack.c.b16 %v1049, %v1040
        %v1158 = vpack.c.b16 %v1050, %v1041
        %v1159 = vpack.c.b16 %v1051, %v1042
        %v1160 = vpack.c.b16 %v1052, %v1043
        %v1161 = vpack.c.b16 %v1053, %v1044
        %v1162 = vpack.c.b16 %v1054, %v1045
        %v1163 = vpack.c.b16 %v1055, %v1046
        %v1164 = vpack.c.b16 %v1056, %v1047
        %v1165 = vpack.c.b16 %v1057, %v1048
        %v1166 = vpack.c.b16 %v1067, %v1058
        %v1167 = vpack.c.b16 %v1068, %v1059
        %v1168 = vpack.c.b16 %v1069, %v1060
        %v1169 = vpack.c.b16 %v1070, %v1061
        %v1170 = vpack.c.b16 %v1071, %v1062
        %v1171 = vpack.c.b16 %v1072, %v1063
        %v1172 = vpack.c.b16 %v1073, %v1064
        %v1173 = vpack.c.b16 %v1074, %v1065
        %v1174 = vpack.c.b16 %v1075, %v1066
        %v1175 = vpack.c.b16 %v1085, %v1076
        %v1176 = vpack.c.b16 %v1086, %v1077
        %v1177 = vpack.c.b16 %v1087, %v1078
        %v1178 = vpack.c.b16 %v1088, %v1079
        %v1179 = vpack.c.b16 %v1089, %v1080
        %v1180 = vpack.c.b16 %v1090, %v1081
        %v1181 = vpack.c.b16 %v1091, %v1082
        %v1182 = vpack.c.b16 %v1092, %v1083
        %v1183 = vpack.c.b16 %v1093, %v1084
        %v1184 = vpack.c.b16 %v1103, %v1094
        %v1185 = vpack.c.b16 %v1104, %v1095
        %v1186 = vpack.c.b16 %v1105, %v1096
        %v1187 = vpack.c.b16 %v1106, %v1097
        %v1188 = vpack.c.b16 %v1107, %v1098
        %v1189 = vpack.c.b16 %v1108, %v1099
        %v1190 = vpack.c.b16 %v1109, %v1100
        %v1191 = vpack.c.b16 %v1110, %v1101
        %v1192 = vpack.c.b16 %v1111, %v1102
        %v1193 = vpack.c.b16 %v1121, %v1112
        %v1194 = vpack.c.b16 %v1122, %v1113
        %v1195 = vpack.c.b16 %v1123, %v1114
        %v1196 = vpack.c.b16 %v1124, %v1115
        %v1197 = vpack.c.b16 %v1125, %v1116
        %v1198 = vpack.c.b16 %v1126, %v1117
        %v1199 = vpack.c.b16 %v1127, %v1118
        %v1200 = vpack.c.b16 %v1128, %v1119
        %v1201 = vpack.c.b16 %v1129, %v1120
        %v1418 = vunpack.c.l.b16 %v762
        %v1419 = vunpack.c.h.b16 %v762
        %v1420 = vunpack.c.l.b16 %v763
        %v1421 = vunpack.c.h.b16 %v763
        %v1422 = vunpack.c.l.b16 %v764
        %v1423 = vunpack.c.h.b16 %v764
        %v1424 = vunpack.c.l.b16 %v765
        %v1425 = vunpack.c.h.b16 %v765
        %v1426 = vunpack.c.l.b16 %v766
        %v1427 = vunpack.c.h.b16 %v766
        %v1428 = vunpack.c.l.b16 %v767
        %v1429 = vunpack.c.h.b16 %v767
        %v1430 = vunpack.c.l.b16 %v768
        %v1431 = vunpack.c.h.b16 %v768
        %v1432 = vunpack.c.l.b16 %v769
        %v1433 = vunpack.c.h.b16 %v769
        %v1434 = vunpack.c.l.b16 %v770
        %v1435 = vunpack.c.h.b16 %v770
        %v1436 = vunpack.c.l.b16 %v771
        %v1437 = vunpack.c.h.b16 %v771
        %v1438 = vunpack.c.l.b16 %v772
        %v1439 = vunpack.c.h.b16 %v772
        %v1440 = vunpack.c.l.b16 %v773
        %v1441 = vunpack.c.h.b16 %v773
        %v1442 = vunpack.c.l.b16 %v774
        %v1443 = vunpack.c.h.b16 %v774
        %v1444 = vunpack.c.l.b16 %v775
        %v1445 = vunpack.c.h.b16 %v775
        %v1446 = vunpack.c.l.b16 %v776
        %v1447 = vunpack.c.h.b16 %v776
        %v1448 = vunpack.c.l.b16 %v777
        %v1449 = vunpack.c.h.b16 %v777
        %v1450 = vunpack.c.l.b16 %v778
        %v1451 = vunpack.c.h.b16 %v778
        %v1452 = vunpack.c.l.b16 %v779
        %v1453 = vunpack.c.h.b16 %v779
        %v1454 = vunpack.c.l.b16 %v780
        %v1455 = vunpack.c.h.b16 %v780
        %v1456 = vunpack.c.l.b16 %v781
        %v1457 = vunpack.c.h.b16 %v781
        %v1458 = vunpack.c.l.b16 %v782
        %v1459 = vunpack.c.h.b16 %v782
        %v1460 = vunpack.c.l.b16 %v783
        %v1461 = vunpack.c.h.b16 %v783
        %v1462 = vunpack.c.l.b16 %v784
        %v1463 = vunpack.c.h.b16 %v784
        %v1464 = vunpack.c.l.b16 %v785
        %v1465 = vunpack.c.h.b16 %v785
        %v1466 = vunpack.c.l.b16 %v786
        %v1467 = vunpack.c.h.b16 %v786
        %v1468 = vunpack.c.l.b16 %v787
        %v1469 = vunpack.c.h.b16 %v787
        %v1470 = vunpack.c.l.b16 %v788
        %v1471 = vunpack.c.h.b16 %v788
        %v1472 = vunpack.c.l.b16 %v789
        %v1473 = vunpack.c.h.b16 %v789
        %v1474 = vunpack.c.l.b16 %v790
        %v1475 = vunpack.c.h.b16 %v790
        %v1476 = vunpack.c.l.b16 %v791
        %v1477 = vunpack.c.h.b16 %v791
        %v1478 = vunpack.c.l.b16 %v792
        %v1479 = vunpack.c.h.b16 %v792
        %v1480 = vunpack.c.l.b16 %v793
        %v1481 = vunpack.c.h.b16 %v793
        %v1482 = vunpack.c.l.b16 %v794
        %v1483 = vunpack.c.h.b16 %v794
        %v1484 = vunpack.c.l.b16 %v795
        %v1485 = vunpack.c.h.b16 %v795
        %v1486 = vunpack.c.l.b16 %v796
        %v1487 = vunpack.c.h.b16 %v796
        %v1488 = vunpack.c.l.b16 %v797
        %v1489 = vunpack.c.h.b16 %v797
        %v1490 = vunpack.c.l.b16 %v798
        %v1491 = vunpack.c.h.b16 %v798
        %v1492 = vunpack.c.l.b16 %v799
        %v1493 = vunpack.c.h.b16 %v799
        %v1494 = vunpack.c.l.b16 %v800
        %v1495 = vunpack.c.h.b16 %v800
        %v1496 = vunpack.c.l.b16 %v801
        %v1497 = vunpack.c.h.b16 %v801
        %v1498 = vunpack.c.l.b16 %v802
        %v1499 = vunpack.c.h.b16 %v802
        %v1500 = vunpack.c.l.b16 %v803
        %v1501 = vunpack.c.h.b16 %v803
        %v1502 = vunpack.c.l.b16 %v804
        %v1503 = vunpack.c.h.b16 %v804
        %v1504 = vunpack.c.l.b16 %v805
        %v1505 = vunpack.c.h.b16 %v805
        %v1506 = vunpack.c.l.b16 %v806
        %v1507 = vunpack.c.h.b16 %v806
        %v1508 = vunpack.c.l.b16 %v807
        %v1509 = vunpack.c.h.b16 %v807
        %v1510 = vunpack.c.l.b16 %v808
        %v1511 = vunpack.c.h.b16 %v808
        %v1512 = vunpack.c.l.b16 %v809
        %v1513 = vunpack.c.h.b16 %v809
        %v1514 = vunpack.c.l.b16 %v810
        %v1515 = vunpack.c.h.b16 %v810
        %v1516 = vunpack.c.l.b16 %v811
        %v1517 = vunpack.c.h.b16 %v811
        %v1518 = vunpack.c.l.b16 %v812
        %v1519 = vunpack.c.h.b16 %v812
        %v1520 = vunpack.c.l.b16 %v813
        %v1521 = vunpack.c.h.b16 %v813
        %v1522 = vunpack.c.l.b16 %v814
        %v1523 = vunpack.c.h.b16 %v814
        %v1524 = vunpack.c.l.b16 %v815
        %v1525 = vunpack.c.h.b16 %v815
        %v1526 = vunpack.c.l.b16 %v816
        %v1527 = vunpack.c.h.b16 %v816
        %v1528 = vunpack.c.l.b16 %v817
        %v1529 = vunpack.c.h.b16 %v817
        %v1530 = vunpack.c.l.b16 %v818
        %v1531 = vunpack.c.h.b16 %v818
        %v1532 = vunpack.c.l.b16 %v819
        %v1533 = vunpack.c.h.b16 %v819
        %v1534 = vunpack.c.l.b16 %v820
        %v1535 = vunpack.c.h.b16 %v820
        %v1536 = vunpack.c.l.b16 %v821
        %v1537 = vunpack.c.h.b16 %v821
        %v1538 = vunpack.c.l.b16 %v822
        %v1539 = vunpack.c.h.b16 %v822
        %v1540 = vunpack.c.l.b16 %v823
        %v1541 = vunpack.c.h.b16 %v823
        %v1542 = vunpack.c.l.b16 %v824
        %v1543 = vunpack.c.h.b16 %v824
        %v1544 = vunpack.c.l.b16 %v825
        %v1545 = vunpack.c.h.b16 %v825
        %v1546 = vunpack.c.l.b16 %v826
        %v1547 = vunpack.c.h.b16 %v826
        %v1548 = vunpack.c.l.b16 %v827
        %v1549 = vunpack.c.h.b16 %v827
        %v1550 = vunpack.c.l.b16 %v828
        %v1551 = vunpack.c.h.b16 %v828
        %v1552 = vunpack.c.l.b16 %v829
        %v1553 = vunpack.c.h.b16 %v829
        %v1554 = vunpack.c.l.b16 %v830
        %v1555 = vunpack.c.h.b16 %v830
        %v1556 = vunpack.c.l.b16 %v831
        %v1557 = vunpack.c.h.b16 %v831
        %v1558 = vunpack.c.l.b16 %v832
        %v1559 = vunpack.c.h.b16 %v832
        %v1560 = vunpack.c.l.b16 %v833
        %v1561 = vunpack.c.h.b16 %v833
        %v1562 = vunpack.c.l.b16 %v834
        %v1563 = vunpack.c.h.b16 %v834
        %v1564 = vunpack.c.l.b16 %v835
        %v1565 = vunpack.c.h.b16 %v835
        %v1566 = vunpack.c.l.b16 %v836
        %v1567 = vunpack.c.h.b16 %v836
        %v1568 = vunpack.c.l.b16 %v837
        %v1569 = vunpack.c.h.b16 %v837
        %v1570 = vunpack.c.l.b16 %v838
        %v1571 = vunpack.c.h.b16 %v838
        %v1572 = vunpack.c.l.b16 %v839
        %v1573 = vunpack.c.h.b16 %v839
        %v1574 = vunpack.c.l.b16 %v840
        %v1575 = vunpack.c.h.b16 %v840
        %v1576 = vunpack.c.l.b16 %v841
        %v1577 = vunpack.c.h.b16 %v841
        %v1578 = vunpack.c.l.b16 %v842
        %v1579 = vunpack.c.h.b16 %v842
        %v1580 = vunpack.c.l.b16 %v843
        %v1581 = vunpack.c.h.b16 %v843
        %v1582 = vunpack.c.l.b16 %v844
        %v1583 = vunpack.c.h.b16 %v844
        %v1584 = vunpack.c.l.b16 %v845
        %v1585 = vunpack.c.h.b16 %v845
        %v1586 = vunpack.c.l.b16 %v846
        %v1587 = vunpack.c.h.b16 %v846
        %v1588 = vunpack.c.l.b16 %v847
        %v1589 = vunpack.c.h.b16 %v847
        %v1590 = vunpack.c.l.b16 %v848
        %v1591 = vunpack.c.h.b16 %v848
        %v1592 = vunpack.c.l.b16 %v849
        %v1593 = vunpack.c.h.b16 %v849
        %v1594 = vunpack.c.l.b16 %v850
        %v1595 = vunpack.c.h.b16 %v850
        %v1596 = vunpack.c.l.b16 %v851
        %v1597 = vunpack.c.h.b16 %v851
        %v1598 = vunpack.c.l.b16 %v852
        %v1599 = vunpack.c.h.b16 %v852
        %v1600 = vunpack.c.l.b16 %v853
        %v1601 = vunpack.c.h.b16 %v853
        %v1602 = vunpack.c.l.b16 %v854
        %v1603 = vunpack.c.h.b16 %v854
        %v1604 = vunpack.c.l.b16 %v855
        %v1605 = vunpack.c.h.b16 %v855
        %v1606 = vunpack.c.l.b16 %v856
        %v1607 = vunpack.c.h.b16 %v856
        %v1608 = vunpack.c.l.b16 %v857
        %v1609 = vunpack.c.h.b16 %v857
        %v1610 = vunpack.c.l.b16 %v858
        %v1611 = vunpack.c.h.b16 %v858
        %v1612 = vunpack.c.l.b16 %v859
        %v1613 = vunpack.c.h.b16 %v859
        %v1614 = vunpack.c.l.b16 %v860
        %v1615 = vunpack.c.h.b16 %v860
        %v1616 = vunpack.c.l.b16 %v861
        %v1617 = vunpack.c.h.b16 %v861
        %v1618 = vunpack.c.l.b16 %v862
        %v1619 = vunpack.c.h.b16 %v862
        %v1620 = vunpack.c.l.b16 %v863
        %v1621 = vunpack.c.h.b16 %v863
        %v1622 = vunpack.c.l.b16 %v864
        %v1623 = vunpack.c.h.b16 %v864
        %v1624 = vunpack.c.l.b16 %v865
        %v1625 = vunpack.c.h.b16 %v865
        %v1626 = vunpack.c.l.b16 %v866
        %v1627 = vunpack.c.h.b16 %v866
        %v1628 = vunpack.c.l.b16 %v867
        %v1629 = vunpack.c.h.b16 %v867
        %v1630 = vunpack.c.l.b16 %v868
        %v1631 = vunpack.c.h.b16 %v868
        %v1632 = vunpack.c.l.b16 %v869
        %v1633 = vunpack.c.h.b16 %v869
        %v1634 = vunpack.c.l.b16 %v870
        %v1635 = vunpack.c.h.b16 %v870
        %v1636 = vunpack.c.l.b16 %v871
        %v1637 = vunpack.c.h.b16 %v871
        %v1638 = vunpack.c.l.b16 %v872
        %v1639 = vunpack.c.h.b16 %v872
        %v1640 = vunpack.c.l.b16 %v873
        %v1641 = vunpack.c.h.b16 %v873
        %v1642 = vunpack.c.l.b16 %v874
        %v1643 = vunpack.c.h.b16 %v874
        %v1644 = vunpack.c.l.b16 %v875
        %v1645 = vunpack.c.h.b16 %v875
        %v1646 = vunpack.c.l.b16 %v876
        %v1647 = vunpack.c.h.b16 %v876
        %v1648 = vunpack.c.l.b16 %v877
        %v1649 = vunpack.c.h.b16 %v877
        %v1650 = vunpack.c.l.b16 %v878
        %v1651 = vunpack.c.h.b16 %v878
        %v1652 = vunpack.c.l.b16 %v879
        %v1653 = vunpack.c.h.b16 %v879
        %v1654 = vunpack.c.l.b16 %v880
        %v1655 = vunpack.c.h.b16 %v880
        %v1656 = vunpack.c.l.b16 %v881
        %v1657 = vunpack.c.h.b16 %v881
        %v1658 = vunpack.c.l.b16 %v882
        %v1659 = vunpack.c.h.b16 %v882
        %v1660 = vunpack.c.l.b16 %v883
        %v1661 = vunpack.c.h.b16 %v883
        %v1662 = vunpack.c.l.b16 %v884
        %v1663 = vunpack.c.h.b16 %v884
        %v1664 = vunpack.c.l.b16 %v885
        %v1665 = vunpack.c.h.b16 %v885
        %v1666 = vunpack.c.l.b16 %v886
        %v1667 = vunpack.c.h.b16 %v886
        %v1668 = vunpack.c.l.b16 %v887
        %v1669 = vunpack.c.h.b16 %v887
        %v1670 = vunpack.c.l.b16 %v888
        %v1671 = vunpack.c.h.b16 %v888
        %v1672 = vunpack.c.l.b16 %v889
        %v1673 = vunpack.c.h.b16 %v889
        %v1674 = vunpack.c.l.b16 %v890
        %v1675 = vunpack.c.h.b16 %v890
        %v1676 = vunpack.c.l.b16 %v891
        %v1677 = vunpack.c.h.b16 %v891
        %v1678 = vunpack.c.l.b16 %v892
        %v1679 = vunpack.c.h.b16 %v892
        %v1680 = vunpack.c.l.b16 %v893
        %v1681 = vunpack.c.h.b16 %v893
        %v1682 = vunpack.c.l.b16 %v894
        %v1683 = vunpack.c.h.b16 %v894
        %v1684 = vunpack.c.l.b16 %v895
        %v1685 = vunpack.c.h.b16 %v895
        %v1686 = vunpack.c.l.b16 %v896
        %v1687 = vunpack.c.h.b16 %v896
        %v1688 = vunpack.c.l.b16 %v897
        %v1689 = vunpack.c.h.b16 %v897
        %v1690 = vunpack.c.l.b16 %v898
        %v1691 = vunpack.c.h.b16 %v898
        %v1692 = vunpack.c.l.b16 %v899
        %v1693 = vunpack.c.h.b16 %v899
        %v1694 = vunpack.c.l.b16 %v900
        %v1695 = vunpack.c.h.b16 %v900
        %v1696 = vunpack.c.l.b16 %v901
        %v1697 = vunpack.c.h.b16 %v901
        %v1698 = vunpack.c.l.b16 %v902
        %v1699 = vunpack.c.h.b16 %v902
        %v1700 = vunpack.c.l.b16 %v903
        %v1701 = vunpack.c.h.b16 %v903
        %v1702 = vunpack.c.l.b16 %v904
        %v1703 = vunpack.c.h.b16 %v904
        %v1704 = vunpack.c.l.b16 %v905
        %v1705 = vunpack.c.h.b16 %v905
        %v1706 = vpack.c.b16 %v1420, %v1418
        %v1707 = vpack.c.b16 %v1421, %v1419
        %v1708 = vpack.c.b16 %v1424, %v1422
        %v1709 = vpack.c.b16 %v1425, %v1423
        %v1710 = vpack.c.b16 %v1428, %v1426
        %v1711 = vpack.c.b16 %v1429, %v1427
        %v1712 = vpack.c.b16 %v1432, %v1430
        %v1713 = vpack.c.b16 %v1433, %v1431
        %v1714 = vpack.c.b16 %v1436, %v1434
        %v1715 = vpack.c.b16 %v1437, %v1435
        %v1716 = vpack.c.b16 %v1440, %v1438
        %v1717 = vpack.c.b16 %v1441, %v1439
        %v1718 = vpack.c.b16 %v1444, %v1442
        %v1719 = vpack.c.b16 %v1445, %v1443
        %v1720 = vpack.c.b16 %v1448, %v1446
        %v1721 = vpack.c.b16 %v1449, %v1447
        %v1722 = vpack.c.b16 %v1452, %v1450
        %v1723 = vpack.c.b16 %v1453, %v1451
        %v1724 = vpack.c.b16 %v1456, %v1454
        %v1725 = vpack.c.b16 %v1457, %v1455
        %v1726 = vpack.c.b16 %v1460, %v1458
        %v1727 = vpack.c.b16 %v1461, %v1459
        %v1728 = vpack.c.b16 %v1464, %v1462
        %v1729 = vpack.c.b16 %v1465, %v1463
        %v1730 = vpack.c.b16 %v1468, %v1466
        %v1731 = vpack.c.b16 %v1469, %v1467
        %v1732 = vpack.c.b16 %v1472, %v1470
        %v1733 = vpack.c.b16 %v1473, %v1471
        %v1734 = vpack.c.b16 %v1476, %v1474
        %v1735 = vpack.c.b16 %v1477, %v1475
        %v1736 = vpack.c.b16 %v1480, %v1478
        %v1737 = vpack.c.b16 %v1481, %v1479
        %v1738 = vpack.c.b16 %v1484, %v1482
        %v1739 = vpack.c.b16 %v1485, %v1483
        %v1740 = vpack.c.b16 %v1488, %v1486
        %v1741 = vpack.c.b16 %v1489, %v1487
        %v1742 = vpack.c.b16 %v1492, %v1490
        %v1743 = vpack.c.b16 %v1493, %v1491
        %v1744 = vpack.c.b16 %v1496, %v1494
        %v1745 = vpack.c.b16 %v1497, %v1495
        %v1746 = vpack.c.b16 %v1500, %v1498
        %v1747 = vpack.c.b16 %v1501, %v1499
        %v1748 = vpack.c.b16 %v1504, %v1502
        %v1749 = vpack.c.b16 %v1505, %v1503
        %v1750 = vpack.c.b16 %v1508, %v1506
        %v1751 = vpack.c.b16 %v1509, %v1507
        %v1752 = vpack.c.b16 %v1512, %v1510
        %v1753 = vpack.c.b16 %v1513, %v1511
        %v1754 = vpack.c.b16 %v1516, %v1514
        %v1755 = vpack.c.b16 %v1517, %v1515
        %v1756 = vpack.c.b16 %v1520, %v1518
        %v1757 = vpack.c.b16 %v1521, %v1519
        %v1758 = vpack.c.b16 %v1524, %v1522
        %v1759 = vpack.c.b16 %v1525, %v1523
        %v1760 = vpack.c.b16 %v1528, %v1526
        %v1761 = vpack.c.b16 %v1529, %v1527
        %v1762 = vpack.c.b16 %v1532, %v1530
        %v1763 = vpack.c.b16 %v1533, %v1531
        %v1764 = vpack.c.b16 %v1536, %v1534
        %v1765 = vpack.c.b16 %v1537, %v1535
        %v1766 = vpack.c.b16 %v1540, %v1538
        %v1767 = vpack.c.b16 %v1541, %v1539
        %v1768 = vpack.c.b16 %v1544, %v1542
        %v1769 = vpack.c.b16 %v1545, %v1543
        %v1770 = vpack.c.b16 %v1548, %v1546
        %v1771 = vpack.c.b16 %v1549, %v1547
        %v1772 = vpack.c.b16 %v1552, %v1550
        %v1773 = vpack.c.b16 %v1553, %v1551
        %v1774 = vpack.c.b16 %v1556, %v1554
        %v1775 = vpack.c.b16 %v1557, %v1555
        %v1776 = vpack.c.b16 %v1560, %v1558
        %v1777 = vpack.c.b16 %v1561, %v1559
        %v1778 = vpack.c.b16 %v1564, %v1562
        %v1779 = vpack.c.b16 %v1565, %v1563
        %v1780 = vpack.c.b16 %v1568, %v1566
        %v1781 = vpack.c.b16 %v1569, %v1567
        %v1782 = vpack.c.b16 %v1572, %v1570
        %v1783 = vpack.c.b16 %v1573, %v1571
        %v1784 = vpack.c.b16 %v1576, %v1574
        %v1785 = vpack.c.b16 %v1577, %v1575
        %v1786 = vpack.c.b16 %v1580, %v1578
        %v1787 = vpack.c.b16 %v1581, %v1579
        %v1788 = vpack.c.b16 %v1584, %v1582
        %v1789 = vpack.c.b16 %v1585, %v1583
        %v1790 = vpack.c.b16 %v1588, %v1586
        %v1791 = vpack.c.b16 %v1589, %v1587
        %v1792 = vpack.c.b16 %v1592, %v1590
        %v1793 = vpack.c.b16 %v1593, %v1591
        %v1794 = vpack.c.b16 %v1596, %v1594
        %v1795 = vpack.c.b16 %v1597, %v1595
        %v1796 = vpack.c.b16 %v1600, %v1598
        %v1797 = vpack.c.b16 %v1601, %v1599
        %v1798 = vpack.c.b16 %v1604, %v1602
        %v1799 = vpack.c.b16 %v1605, %v1603
        %v1800 = vpack.c.b16 %v1608, %v1606
        %v1801 = vpack.c.b16 %v1609, %v1607
        %v1802 = vpack.c.b16 %v1612, %v1610
        %v1803 = vpack.c.b16 %v1613, %v1611
        %v1804 = vpack.c.b16 %v1616, %v1614
        %v1805 = vpack.c.b16 %v1617, %v1615
        %v1806 = vpack.c.b16 %v1620, %v1618
        %v1807 = vpack.c.b16 %v1621, %v1619
        %v1808 = vpack.c.b16 %v1624, %v1622
        %v1809 = vpack.c.b16 %v1625, %v1623
        %v1810 = vpack.c.b16 %v1628, %v1626
        %v1811 = vpack.c.b16 %v1629, %v1627
        %v1812 = vpack.c.b16 %v1632, %v1630
        %v1813 = vpack.c.b16 %v1633, %v1631
        %v1814 = vpack.c.b16 %v1636, %v1634
        %v1815 = vpack.c.b16 %v1637, %v1635
        %v1816 = vpack.c.b16 %v1640, %v1638
        %v1817 = vpack.c.b16 %v1641, %v1639
        %v1818 = vpack.c.b16 %v1644, %v1642
        %v1819 = vpack.c.b16 %v1645, %v1643
        %v1820 = vpack.c.b16 %v1648, %v1646
        %v1821 = vpack.c.b16 %v1649, %v1647
        %v1822 = vpack.c.b16 %v1652, %v1650
        %v1823 = vpack.c.b16 %v1653, %v1651
        %v1824 = vpack.c.b16 %v1656, %v1654
        %v1825 = vpack.c.b16 %v1657, %v1655
        %v1826 = vpack.c.b16 %v1660, %v1658
        %v1827 = vpack.c.b16 %v1661, %v1659
        %v1828 = vpack.c.b16 %v1664, %v1662
        %v1829 = vpack.c.b16 %v1665, %v1663
        %v1830 = vpack.c.b16 %v1668, %v1666
        %v1831 = vpack.c.b16 %v1669, %v1667
        %v1832 = vpack.c.b16 %v1672, %v1670
        %v1833 = vpack.c.b16 %v1673, %v1671
        %v1834 = vpack.c.b16 %v1676, %v1674
        %v1835 = vpack.c.b16 %v1677, %v1675
        %v1836 = vpack.c.b16 %v1680, %v1678
        %v1837 = vpack.c.b16 %v1681, %v1679
        %v1838 = vpack.c.b16 %v1684, %v1682
        %v1839 = vpack.c.b16 %v1685, %v1683
        %v1840 = vpack.c.b16 %v1688, %v1686
        %v1841 = vpack.c.b16 %v1689, %v1687
        %v1842 = vpack.c.b16 %v1692, %v1690
        %v1843 = vpack.c.b16 %v1693, %v1691
        %v1844 = vpack.c.b16 %v1696, %v1694
        %v1845 = vpack.c.b16 %v1697, %v1695
        %v1846 = vpack.c.b16 %v1700, %v1698
        %v1847 = vpack.c.b16 %v1701, %v1699
        %v1848 = vpack.c.b16 %v1704, %v1702
        %v1849 = vpack.c.b16 %v1705, %v1703
        %1994 = vmatprep.subr.bf16.mxu0 %v1721
        %1995 = vmatpush1.bf16.msra.mxu0 %v1720
        %1996 = vmatprep.subr.bf16.mxu0 %v1719
        %1997 = vmatpush1.bf16.msra.mxu0 %v1718
        %1998 = vmatprep.subr.bf16.mxu0 %v1717
        %1999 = vmatpush1.bf16.msra.mxu0 %v1716
        %2000 = vmatprep.subr.bf16.mxu0 %v1715
        %2001 = vmatpush1.bf16.msra.mxu0 %v1714
        %2002 = vmatprep.subr.bf16.mxu0 %v1713
        %2003 = vmatpush1.bf16.msra.mxu0 %v1712
        %2004 = vmatprep.subr.bf16.mxu0 %v1711
        %2005 = vmatpush1.bf16.msra.mxu0 %v1710
        %2006 = vmatprep.subr.bf16.mxu0 %v1709
        %2007 = vmatpush1.bf16.msra.mxu0 %v1708
        %2008 = vmatprep.subr.bf16.mxu0 %v1707
        %2009 = vmatpush1.bf16.msra.mxu0 %v1706
        %2010 = vmatprep.subr.bf16.mxu0 %v1737
        %2011 = vmatpush2.bf16.msra.mxu0 %v1736
        %2012 = vmatprep.subr.bf16.mxu0 %v1735
        %2013 = vmatpush2.bf16.msra.mxu0 %v1734
        %2014 = vmatprep.subr.bf16.mxu0 %v1733
        %2015 = vmatpush2.bf16.msra.mxu0 %v1732
        %2016 = vmatprep.subr.bf16.mxu0 %v1731
        %2017 = vmatpush2.bf16.msra.mxu0 %v1730
        %2018 = vmatprep.subr.bf16.mxu0 %v1729
        %2019 = vmatpush2.bf16.msra.mxu0 %v1728
        %2020 = vmatprep.subr.bf16.mxu0 %v1727
        %2021 = vmatpush2.bf16.msra.mxu0 %v1726
        %2022 = vmatprep.subr.bf16.mxu0 %v1725
        %2023 = vmatpush2.bf16.msra.mxu0 %v1724
        %2024 = vmatprep.subr.bf16.mxu0 %v1723
        %2025 = vmatpush2.bf16.msra.mxu0 %v1722
        %2026 = vmatprep.mubr.bf16.mxu0 %v1131
        %2027 = vmatmul.mubr.bf16.gmra.mxu0 %v1130
        %v2028 = vpop.f32.mrf.mxu0
        %v2029 = vadd.f32 0.0, %v2028
        %v2030 = vpop.f32.mrf.mxu0
        %v2031 = vadd.f32 0.0, %v2030
        %v2032 = vpop.f32.mrf.mxu0
        %v2033 = vadd.f32 0.0, %v2032
        %v2034 = vpop.f32.mrf.mxu0
        %v2035 = vadd.f32 0.0, %v2034
        %2036 = vmatprep.mubr.bf16.mxu0 %v1140
        %2037 = vmatmul.mubr.bf16.gmra.mxu0 %v1139
        %v2038 = vpop.f32.mrf.mxu0
        %v2039 = vadd.f32 0.0, %v2038
        %v2040 = vpop.f32.mrf.mxu0
        %v2041 = vadd.f32 0.0, %v2040
        %v2042 = vpop.f32.mrf.mxu0
        %v2043 = vadd.f32 0.0, %v2042
        %v2044 = vpop.f32.mrf.mxu0
        %v2045 = vadd.f32 0.0, %v2044
        %2046 = vmatprep.mubr.bf16.mxu0 %v1149
        %2047 = vmatmul.mubr.bf16.gmra.mxu0 %v1148
        %v2048 = vpop.f32.mrf.mxu0
        %v2049 = vadd.f32 0.0, %v2048
        %v2050 = vpop.f32.mrf.mxu0
        %v2051 = vadd.f32 0.0, %v2050
        %v2052 = vpop.f32.mrf.mxu0
        %v2053 = vadd.f32 0.0, %v2052
        %v2054 = vpop.f32.mrf.mxu0
        %v2055 = vadd.f32 0.0, %v2054
        %2056 = vmatprep.mubr.bf16.mxu0 %v1158
        %2057 = vmatmul.mubr.bf16.gmra.mxu0 %v1157
        %v2058 = vpop.f32.mrf.mxu0
        %v2059 = vadd.f32 0.0, %v2058
        %v2060 = vpop.f32.mrf.mxu0
        %v2061 = vadd.f32 0.0, %v2060
        %v2062 = vpop.f32.mrf.mxu0
        %v2063 = vadd.f32 0.0, %v2062
        %v2064 = vpop.f32.mrf.mxu0
        %v2065 = vadd.f32 0.0, %v2064
        %2066 = vmatprep.mubr.bf16.mxu0 %v1167
        %2067 = vmatmul.mubr.bf16.gmra.mxu0 %v1166
        %v2068 = vpop.f32.mrf.mxu0
        %v2069 = vadd.f32 0.0, %v2068
        %v2070 = vpop.f32.mrf.mxu0
        %v2071 = vadd.f32 0.0, %v2070
        %v2072 = vpop.f32.mrf.mxu0
        %v2073 = vadd.f32 0.0, %v2072
        %v2074 = vpop.f32.mrf.mxu0
        %v2075 = vadd.f32 0.0, %v2074
        %2076 = vmatprep.mubr.bf16.mxu0 %v1176
        %2077 = vmatmul.mubr.bf16.gmra.mxu0 %v1175
        %v2078 = vpop.f32.mrf.mxu0
        %v2079 = vadd.f32 0.0, %v2078
        %v2080 = vpop.f32.mrf.mxu0
        %v2081 = vadd.f32 0.0, %v2080
        %v2082 = vpop.f32.mrf.mxu0
        %v2083 = vadd.f32 0.0, %v2082
        %v2084 = vpop.f32.mrf.mxu0
        %v2085 = vadd.f32 0.0, %v2084
        %2086 = vmatprep.mubr.bf16.mxu0 %v1185
        %2087 = vmatmul.mubr.bf16.gmra.mxu0 %v1184
        %v2088 = vpop.f32.mrf.mxu0
        %v2089 = vadd.f32 0.0, %v2088
        %v2090 = vpop.f32.mrf.mxu0
        %v2091 = vadd.f32 0.0, %v2090
        %v2092 = vpop.f32.mrf.mxu0
        %v2093 = vadd.f32 0.0, %v2092
        %v2094 = vpop.f32.mrf.mxu0
        %v2095 = vadd.f32 0.0, %v2094
        %2096 = vmatprep.mubr.bf16.mxu0 %v1194
        %2097 = vmatmul.mubr.bf16.gmra.mxu0 %v1193
        %v2098 = vpop.f32.mrf.mxu0
        %v2099 = vadd.f32 0.0, %v2098
        %v2100 = vpop.f32.mrf.mxu0
        %v2101 = vadd.f32 0.0, %v2100
        %v2102 = vpop.f32.mrf.mxu0
        %v2103 = vadd.f32 0.0, %v2102
        %v2104 = vpop.f32.mrf.mxu0
        %v2105 = vadd.f32 0.0, %v2104
        %2106 = vdwg.mxu0
        %2107 = vmatprep.subr.bf16.mxu0 %v1753
        %2108 = vmatpush1.bf16.msra.mxu0 %v1752
        %2109 = vmatprep.subr.bf16.mxu0 %v1751
        %2110 = vmatpush1.bf16.msra.mxu0 %v1750
        %2111 = vmatprep.subr.bf16.mxu0 %v1749
        %2112 = vmatpush1.bf16.msra.mxu0 %v1748
        %2113 = vmatprep.subr.bf16.mxu0 %v1747
        %2114 = vmatpush1.bf16.msra.mxu0 %v1746
        %2115 = vmatprep.subr.bf16.mxu0 %v1745
        %2116 = vmatpush1.bf16.msra.mxu0 %v1744
        %2117 = vmatprep.subr.bf16.mxu0 %v1743
        %2118 = vmatpush1.bf16.msra.mxu0 %v1742
        %2119 = vmatprep.subr.bf16.mxu0 %v1741
        %2120 = vmatpush1.bf16.msra.mxu0 %v1740
        %2121 = vmatprep.subr.bf16.mxu0 %v1739
        %2122 = vmatpush1.bf16.msra.mxu0 %v1738
        %2123 = vmatprep.subr.bf16.mxu0 %v1769
        %2124 = vmatpush2.bf16.msra.mxu0 %v1768
        %2125 = vmatprep.subr.bf16.mxu0 %v1767
        %2126 = vmatpush2.bf16.msra.mxu0 %v1766
        %2127 = vmatprep.subr.bf16.mxu0 %v1765
        %2128 = vmatpush2.bf16.msra.mxu0 %v1764
        %2129 = vmatprep.subr.bf16.mxu0 %v1763
        %2130 = vmatpush2.bf16.msra.mxu0 %v1762
        %2131 = vmatprep.subr.bf16.mxu0 %v1761
        %2132 = vmatpush2.bf16.msra.mxu0 %v1760
        %2133 = vmatprep.subr.bf16.mxu0 %v1759
        %2134 = vmatpush2.bf16.msra.mxu0 %v1758
        %2135 = vmatprep.subr.bf16.mxu0 %v1757
        %2136 = vmatpush2.bf16.msra.mxu0 %v1756
        %2137 = vmatprep.subr.bf16.mxu0 %v1755
        %2138 = vmatpush2.bf16.msra.mxu0 %v1754
        %2139 = vmatprep.mubr.bf16.mxu0 %v1133
        %2140 = vmatmul.mubr.bf16.gmra.mxu0 %v1132
        %v2141 = vpop.f32.mrf.mxu0
        %v2142 = vadd.f32 %v2029, %v2141
        %v2143 = vpop.f32.mrf.mxu0
        %v2144 = vadd.f32 %v2031, %v2143
        %v2145 = vpop.f32.mrf.mxu0
        %v2146 = vadd.f32 %v2033, %v2145
        %v2147 = vpop.f32.mrf.mxu0
        %v2148 = vadd.f32 %v2035, %v2147
        %2149 = vmatprep.mubr.bf16.mxu0 %v1142
        %2150 = vmatmul.mubr.bf16.gmra.mxu0 %v1141
        %v2151 = vpop.f32.mrf.mxu0
        %v2152 = vadd.f32 %v2039, %v2151
        %v2153 = vpop.f32.mrf.mxu0
        %v2154 = vadd.f32 %v2041, %v2153
        %v2155 = vpop.f32.mrf.mxu0
        %v2156 = vadd.f32 %v2043, %v2155
        %v2157 = vpop.f32.mrf.mxu0
        %v2158 = vadd.f32 %v2045, %v2157
        %2159 = vmatprep.mubr.bf16.mxu0 %v1151
        %2160 = vmatmul.mubr.bf16.gmra.mxu0 %v1150
        %v2161 = vpop.f32.mrf.mxu0
        %v2162 = vadd.f32 %v2049, %v2161
        %v2163 = vpop.f32.mrf.mxu0
        %v2164 = vadd.f32 %v2051, %v2163
        %v2165 = vpop.f32.mrf.mxu0
        %v2166 = vadd.f32 %v2053, %v2165
        %v2167 = vpop.f32.mrf.mxu0
        %v2168 = vadd.f32 %v2055, %v2167
        %2169 = vmatprep.mubr.bf16.mxu0 %v1160
        %2170 = vmatmul.mubr.bf16.gmra.mxu0 %v1159
        %v2171 = vpop.f32.mrf.mxu0
        %v2172 = vadd.f32 %v2059, %v2171
        %v2173 = vpop.f32.mrf.mxu0
        %v2174 = vadd.f32 %v2061, %v2173
        %v2175 = vpop.f32.mrf.mxu0
        %v2176 = vadd.f32 %v2063, %v2175
        %v2177 = vpop.f32.mrf.mxu0
        %v2178 = vadd.f32 %v2065, %v2177
        %2179 = vmatprep.mubr.bf16.mxu0 %v1169
        %2180 = vmatmul.mubr.bf16.gmra.mxu0 %v1168
        %v2181 = vpop.f32.mrf.mxu0
        %v2182 = vadd.f32 %v2069, %v2181
        %v2183 = vpop.f32.mrf.mxu0
        %v2184 = vadd.f32 %v2071, %v2183
        %v2185 = vpop.f32.mrf.mxu0
        %v2186 = vadd.f32 %v2073, %v2185
        %v2187 = vpop.f32.mrf.mxu0
        %v2188 = vadd.f32 %v2075, %v2187
        %2189 = vmatprep.mubr.bf16.mxu0 %v1178
        %2190 = vmatmul.mubr.bf16.gmra.mxu0 %v1177
        %v2191 = vpop.f32.mrf.mxu0
        %v2192 = vadd.f32 %v2079, %v2191
        %v2193 = vpop.f32.mrf.mxu0
        %v2194 = vadd.f32 %v2081, %v2193
        %v2195 = vpop.f32.mrf.mxu0
        %v2196 = vadd.f32 %v2083, %v2195
        %v2197 = vpop.f32.mrf.mxu0
        %v2198 = vadd.f32 %v2085, %v2197
        %2199 = vmatprep.mubr.bf16.mxu0 %v1187
        %2200 = vmatmul.mubr.bf16.gmra.mxu0 %v1186
        %v2201 = vpop.f32.mrf.mxu0
        %v2202 = vadd.f32 %v2089, %v2201
        %v2203 = vpop.f32.mrf.mxu0
        %v2204 = vadd.f32 %v2091, %v2203
        %v2205 = vpop.f32.mrf.mxu0
        %v2206 = vadd.f32 %v2093, %v2205
        %v2207 = vpop.f32.mrf.mxu0
        %v2208 = vadd.f32 %v2095, %v2207
        %2209 = vmatprep.mubr.bf16.mxu0 %v1196
        %2210 = vmatmul.mubr.bf16.gmra.mxu0 %v1195
        %v2211 = vpop.f32.mrf.mxu0
        %v2212 = vadd.f32 %v2099, %v2211
        %v2213 = vpop.f32.mrf.mxu0
        %v2214 = vadd.f32 %v2101, %v2213
        %v2215 = vpop.f32.mrf.mxu0
        %v2216 = vadd.f32 %v2103, %v2215
        %v2217 = vpop.f32.mrf.mxu0
        %v2218 = vadd.f32 %v2105, %v2217
        %2219 = vdwg.mxu0
        %2220 = vmatprep.subr.bf16.mxu0 %v1785
        %2221 = vmatpush1.bf16.msra.mxu0 %v1784
        %2222 = vmatprep.subr.bf16.mxu0 %v1783
        %2223 = vmatpush1.bf16.msra.mxu0 %v1782
        %2224 = vmatprep.subr.bf16.mxu0 %v1781
        %2225 = vmatpush1.bf16.msra.mxu0 %v1780
        %2226 = vmatprep.subr.bf16.mxu0 %v1779
        %2227 = vmatpush1.bf16.msra.mxu0 %v1778
        %2228 = vmatprep.subr.bf16.mxu0 %v1777
        %2229 = vmatpush1.bf16.msra.mxu0 %v1776
        %2230 = vmatprep.subr.bf16.mxu0 %v1775
        %2231 = vmatpush1.bf16.msra.mxu0 %v1774
        %2232 = vmatprep.subr.bf16.mxu0 %v1773
        %2233 = vmatpush1.bf16.msra.mxu0 %v1772
        %2234 = vmatprep.subr.bf16.mxu0 %v1771
        %2235 = vmatpush1.bf16.msra.mxu0 %v1770
        %2236 = vmatprep.subr.bf16.mxu0 %v1801
        %2237 = vmatpush2.bf16.msra.mxu0 %v1800
        %2238 = vmatprep.subr.bf16.mxu0 %v1799
        %2239 = vmatpush2.bf16.msra.mxu0 %v1798
        %2240 = vmatprep.subr.bf16.mxu0 %v1797
        %2241 = vmatpush2.bf16.msra.mxu0 %v1796
        %2242 = vmatprep.subr.bf16.mxu0 %v1795
        %2243 = vmatpush2.bf16.msra.mxu0 %v1794
        %2244 = vmatprep.subr.bf16.mxu0 %v1793
        %2245 = vmatpush2.bf16.msra.mxu0 %v1792
        %2246 = vmatprep.subr.bf16.mxu0 %v1791
        %2247 = vmatpush2.bf16.msra.mxu0 %v1790
        %2248 = vmatprep.subr.bf16.mxu0 %v1789
        %2249 = vmatpush2.bf16.msra.mxu0 %v1788
        %2250 = vmatprep.subr.bf16.mxu0 %v1787
        %2251 = vmatpush2.bf16.msra.mxu0 %v1786
        %2252 = vmatprep.mubr.bf16.mxu0 %v1135
        %2253 = vmatmul.mubr.bf16.gmra.mxu0 %v1134
        %v2254 = vpop.f32.mrf.mxu0
        %v2255 = vadd.f32 %v2142, %v2254
        %v2256 = vpop.f32.mrf.mxu0
        %v2257 = vadd.f32 %v2144, %v2256
        %v2258 = vpop.f32.mrf.mxu0
        %v2259 = vadd.f32 %v2146, %v2258
        %v2260 = vpop.f32.mrf.mxu0
        %v2261 = vadd.f32 %v2148, %v2260
        %2262 = vmatprep.mubr.bf16.mxu0 %v1144
        %2263 = vmatmul.mubr.bf16.gmra.mxu0 %v1143
        %v2264 = vpop.f32.mrf.mxu0
        %v2265 = vadd.f32 %v2152, %v2264
        %v2266 = vpop.f32.mrf.mxu0
        %v2267 = vadd.f32 %v2154, %v2266
        %v2268 = vpop.f32.mrf.mxu0
        %v2269 = vadd.f32 %v2156, %v2268
        %v2270 = vpop.f32.mrf.mxu0
        %v2271 = vadd.f32 %v2158, %v2270
        %2272 = vmatprep.mubr.bf16.mxu0 %v1153
        %2273 = vmatmul.mubr.bf16.gmra.mxu0 %v1152
        %v2274 = vpop.f32.mrf.mxu0
        %v2275 = vadd.f32 %v2162, %v2274
        %v2276 = vpop.f32.mrf.mxu0
        %v2277 = vadd.f32 %v2164, %v2276
        %v2278 = vpop.f32.mrf.mxu0
        %v2279 = vadd.f32 %v2166, %v2278
        %v2280 = vpop.f32.mrf.mxu0
        %v2281 = vadd.f32 %v2168, %v2280
        %2282 = vmatprep.mubr.bf16.mxu0 %v1162
        %2283 = vmatmul.mubr.bf16.gmra.mxu0 %v1161
        %v2284 = vpop.f32.mrf.mxu0
        %v2285 = vadd.f32 %v2172, %v2284
        %v2286 = vpop.f32.mrf.mxu0
        %v2287 = vadd.f32 %v2174, %v2286
        %v2288 = vpop.f32.mrf.mxu0
        %v2289 = vadd.f32 %v2176, %v2288
        %v2290 = vpop.f32.mrf.mxu0
        %v2291 = vadd.f32 %v2178, %v2290
        %2292 = vmatprep.mubr.bf16.mxu0 %v1171
        %2293 = vmatmul.mubr.bf16.gmra.mxu0 %v1170
        %v2294 = vpop.f32.mrf.mxu0
        %v2295 = vadd.f32 %v2182, %v2294
        %v2296 = vpop.f32.mrf.mxu0
        %v2297 = vadd.f32 %v2184, %v2296
        %v2298 = vpop.f32.mrf.mxu0
        %v2299 = vadd.f32 %v2186, %v2298
        %v2300 = vpop.f32.mrf.mxu0
        %v2301 = vadd.f32 %v2188, %v2300
        %2302 = vmatprep.mubr.bf16.mxu0 %v1180
        %2303 = vmatmul.mubr.bf16.gmra.mxu0 %v1179
        %v2304 = vpop.f32.mrf.mxu0
        %v2305 = vadd.f32 %v2192, %v2304
        %v2306 = vpop.f32.mrf.mxu0
        %v2307 = vadd.f32 %v2194, %v2306
        %v2308 = vpop.f32.mrf.mxu0
        %v2309 = vadd.f32 %v2196, %v2308
        %v2310 = vpop.f32.mrf.mxu0
        %v2311 = vadd.f32 %v2198, %v2310
        %2312 = vmatprep.mubr.bf16.mxu0 %v1189
        %2313 = vmatmul.mubr.bf16.gmra.mxu0 %v1188
        %v2314 = vpop.f32.mrf.mxu0
        %v2315 = vadd.f32 %v2202, %v2314
        %v2316 = vpop.f32.mrf.mxu0
        %v2317 = vadd.f32 %v2204, %v2316
        %v2318 = vpop.f32.mrf.mxu0
        %v2319 = vadd.f32 %v2206, %v2318
        %v2320 = vpop.f32.mrf.mxu0
        %v2321 = vadd.f32 %v2208, %v2320
        %2322 = vmatprep.mubr.bf16.mxu0 %v1198
        %2323 = vmatmul.mubr.bf16.gmra.mxu0 %v1197
        %v2324 = vpop.f32.mrf.mxu0
        %v2325 = vadd.f32 %v2212, %v2324
        %v2326 = vpop.f32.mrf.mxu0
        %v2327 = vadd.f32 %v2214, %v2326
        %v2328 = vpop.f32.mrf.mxu0
        %v2329 = vadd.f32 %v2216, %v2328
        %v2330 = vpop.f32.mrf.mxu0
        %v2331 = vadd.f32 %v2218, %v2330
        %2332 = vdwg.mxu0
        %2333 = vmatprep.subr.bf16.mxu0 %v1817
        %2334 = vmatpush1.bf16.msra.mxu0 %v1816
        %2335 = vmatprep.subr.bf16.mxu0 %v1815
        %2336 = vmatpush1.bf16.msra.mxu0 %v1814
        %2337 = vmatprep.subr.bf16.mxu0 %v1813
        %2338 = vmatpush1.bf16.msra.mxu0 %v1812
        %2339 = vmatprep.subr.bf16.mxu0 %v1811
        %2340 = vmatpush1.bf16.msra.mxu0 %v1810
        %2341 = vmatprep.subr.bf16.mxu0 %v1809
        %2342 = vmatpush1.bf16.msra.mxu0 %v1808
        %2343 = vmatprep.subr.bf16.mxu0 %v1807
        %2344 = vmatpush1.bf16.msra.mxu0 %v1806
        %2345 = vmatprep.subr.bf16.mxu0 %v1805
        %2346 = vmatpush1.bf16.msra.mxu0 %v1804
        %2347 = vmatprep.subr.bf16.mxu0 %v1803
        %2348 = vmatpush1.bf16.msra.mxu0 %v1802
        %2349 = vmatprep.subr.bf16.mxu0 %v1833
        %2350 = vmatpush2.bf16.msra.mxu0 %v1832
        %2351 = vmatprep.subr.bf16.mxu0 %v1831
        %2352 = vmatpush2.bf16.msra.mxu0 %v1830
        %2353 = vmatprep.subr.bf16.mxu0 %v1829
        %2354 = vmatpush2.bf16.msra.mxu0 %v1828
        %2355 = vmatprep.subr.bf16.mxu0 %v1827
        %2356 = vmatpush2.bf16.msra.mxu0 %v1826
        %2357 = vmatprep.subr.bf16.mxu0 %v1825
        %2358 = vmatpush2.bf16.msra.mxu0 %v1824
        %2359 = vmatprep.subr.bf16.mxu0 %v1823
        %2360 = vmatpush2.bf16.msra.mxu0 %v1822
        %2361 = vmatprep.subr.bf16.mxu0 %v1821
        %2362 = vmatpush2.bf16.msra.mxu0 %v1820
        %2363 = vmatprep.subr.bf16.mxu0 %v1819
        %2364 = vmatpush2.bf16.msra.mxu0 %v1818
        %2365 = vmatprep.mubr.bf16.mxu0 %v1137
        %2366 = vmatmul.mubr.bf16.gmra.mxu0 %v1136
        %v2367 = vpop.f32.mrf.mxu0
        %v2368 = vadd.f32 %v2255, %v2367
        %v2369 = vpop.f32.mrf.mxu0
        %v2370 = vadd.f32 %v2257, %v2369
        %v2371 = vpop.f32.mrf.mxu0
        %v2372 = vadd.f32 %v2259, %v2371
        %v2373 = vpop.f32.mrf.mxu0
        %v2374 = vadd.f32 %v2261, %v2373
        %2375 = vmatprep.mubr.bf16.mxu0 %v1146
        %2376 = vmatmul.mubr.bf16.gmra.mxu0 %v1145
        %v2377 = vpop.f32.mrf.mxu0
        %v2378 = vadd.f32 %v2265, %v2377
        %v2379 = vpop.f32.mrf.mxu0
        %v2380 = vadd.f32 %v2267, %v2379
        %v2381 = vpop.f32.mrf.mxu0
        %v2382 = vadd.f32 %v2269, %v2381
        %v2383 = vpop.f32.mrf.mxu0
        %v2384 = vadd.f32 %v2271, %v2383
        %2385 = vmatprep.mubr.bf16.mxu0 %v1155
        %2386 = vmatmul.mubr.bf16.gmra.mxu0 %v1154
        %v2387 = vpop.f32.mrf.mxu0
        %v2388 = vadd.f32 %v2275, %v2387
        %v2389 = vpop.f32.mrf.mxu0
        %v2390 = vadd.f32 %v2277, %v2389
        %v2391 = vpop.f32.mrf.mxu0
        %v2392 = vadd.f32 %v2279, %v2391
        %v2393 = vpop.f32.mrf.mxu0
        %v2394 = vadd.f32 %v2281, %v2393
        %2395 = vmatprep.mubr.bf16.mxu0 %v1164
        %2396 = vmatmul.mubr.bf16.gmra.mxu0 %v1163
        %v2397 = vpop.f32.mrf.mxu0
        %v2398 = vadd.f32 %v2285, %v2397
        %v2399 = vpop.f32.mrf.mxu0
        %v2400 = vadd.f32 %v2287, %v2399
        %v2401 = vpop.f32.mrf.mxu0
        %v2402 = vadd.f32 %v2289, %v2401
        %v2403 = vpop.f32.mrf.mxu0
        %v2404 = vadd.f32 %v2291, %v2403
        %2405 = vmatprep.mubr.bf16.mxu0 %v1173
        %2406 = vmatmul.mubr.bf16.gmra.mxu0 %v1172
        %v2407 = vpop.f32.mrf.mxu0
        %v2408 = vadd.f32 %v2295, %v2407
        %v2409 = vpop.f32.mrf.mxu0
        %v2410 = vadd.f32 %v2297, %v2409
        %v2411 = vpop.f32.mrf.mxu0
        %v2412 = vadd.f32 %v2299, %v2411
        %v2413 = vpop.f32.mrf.mxu0
        %v2414 = vadd.f32 %v2301, %v2413
        %2415 = vmatprep.mubr.bf16.mxu0 %v1182
        %2416 = vmatmul.mubr.bf16.gmra.mxu0 %v1181
        %v2417 = vpop.f32.mrf.mxu0
        %v2418 = vadd.f32 %v2305, %v2417
        %v2419 = vpop.f32.mrf.mxu0
        %v2420 = vadd.f32 %v2307, %v2419
        %v2421 = vpop.f32.mrf.mxu0
        %v2422 = vadd.f32 %v2309, %v2421
        %v2423 = vpop.f32.mrf.mxu0
        %v2424 = vadd.f32 %v2311, %v2423
        %2425 = vmatprep.mubr.bf16.mxu0 %v1191
        %2426 = vmatmul.mubr.bf16.gmra.mxu0 %v1190
        %v2427 = vpop.f32.mrf.mxu0
        %v2428 = vadd.f32 %v2315, %v2427
        %v2429 = vpop.f32.mrf.mxu0
        %v2430 = vadd.f32 %v2317, %v2429
        %v2431 = vpop.f32.mrf.mxu0
        %v2432 = vadd.f32 %v2319, %v2431
        %v2433 = vpop.f32.mrf.mxu0
        %v2434 = vadd.f32 %v2321, %v2433
        %2435 = vmatprep.mubr.bf16.mxu0 %v1200
        %2436 = vmatmul.mubr.bf16.gmra.mxu0 %v1199
        %v2437 = vpop.f32.mrf.mxu0
        %v2438 = vadd.f32 %v2325, %v2437
        %v2439 = vpop.f32.mrf.mxu0
        %v2440 = vadd.f32 %v2327, %v2439
        %v2441 = vpop.f32.mrf.mxu0
        %v2442 = vadd.f32 %v2329, %v2441
        %v2443 = vpop.f32.mrf.mxu0
        %v2444 = vadd.f32 %v2331, %v2443
        %2445 = vdwg.mxu0
        %2446 = vmatprep.subr.bf16.mxu0 %v1849
        %2447 = vmatpush1.bf16.msra.mxu0 %v1848
        %2448 = vmatprep.subr.bf16.mxu0 %v1847
        %2449 = vmatpush1.bf16.msra.mxu0 %v1846
        %2450 = vmatprep.subr.bf16.mxu0 %v1845
        %2451 = vmatpush1.bf16.msra.mxu0 %v1844
        %2452 = vmatprep.subr.bf16.mxu0 %v1843
        %2453 = vmatpush1.bf16.msra.mxu0 %v1842
        %2454 = vmatprep.subr.bf16.mxu0 %v1841
        %2455 = vmatpush1.bf16.msra.mxu0 %v1840
        %2456 = vmatprep.subr.bf16.mxu0 %v1839
        %2457 = vmatpush1.bf16.msra.mxu0 %v1838
        %2458 = vmatprep.subr.bf16.mxu0 %v1837
        %2459 = vmatpush1.bf16.msra.mxu0 %v1836
        %2460 = vmatprep.subr.bf16.mxu0 %v1835
        %2461 = vmatpush1.bf16.msra.mxu0 %v1834
        %2462 = vmatprep.subr.bf16.mxu0 0
        %2463 = vmatpush2.bf16.msra.mxu0 0
        %2464 = vmatprep.subr.bf16.mxu0 0
        %2465 = vmatpush2.bf16.msra.mxu0 0
        %2466 = vmatprep.subr.bf16.mxu0 0
        %2467 = vmatpush2.bf16.msra.mxu0 0
        %2468 = vmatprep.subr.bf16.mxu0 0
        %2469 = vmatpush2.bf16.msra.mxu0 0
        %2470 = vmatprep.subr.bf16.mxu0 0
        %2471 = vmatpush2.bf16.msra.mxu0 0
        %2472 = vmatprep.subr.bf16.mxu0 0
        %2473 = vmatpush2.bf16.msra.mxu0 0
        %2474 = vmatprep.subr.bf16.mxu0 0
        %2475 = vmatpush2.bf16.msra.mxu0 0
        %2476 = vmatprep.subr.bf16.mxu0 0
        %2477 = vmatpush2.bf16.msra.mxu0 0
        %2478 = vmatprep.mubr.bf16.mxu0 0
        %2479 = vmatmul.mubr.bf16.gmra.mxu0 %v1138
        %v2480 = vpop.f32.mrf.mxu0
        %v2481 = vadd.f32 %v2368, %v2480
        %v2482 = vpop.f32.mrf.mxu0
        %v2483 = vadd.f32 %v2370, %v2482
        %v2484 = vpop.f32.mrf.mxu0
        %v2485 = vadd.f32 %v2372, %v2484
        %v2486 = vpop.f32.mrf.mxu0
        %v2487 = vadd.f32 %v2374, %v2486
        %2488 = vmatprep.mubr.bf16.mxu0 0
        %2489 = vmatmul.mubr.bf16.gmra.mxu0 %v1147
        %v2490 = vpop.f32.mrf.mxu0
        %v2491 = vadd.f32 %v2378, %v2490
        %v2492 = vpop.f32.mrf.mxu0
        %v2493 = vadd.f32 %v2380, %v2492
        %v2494 = vpop.f32.mrf.mxu0
        %v2495 = vadd.f32 %v2382, %v2494
        %v2496 = vpop.f32.mrf.mxu0
        %v2497 = vadd.f32 %v2384, %v2496
        %2498 = vmatprep.mubr.bf16.mxu0 0
        %2499 = vmatmul.mubr.bf16.gmra.mxu0 %v1156
        %v2500 = vpop.f32.mrf.mxu0
        %v2501 = vadd.f32 %v2388, %v2500
        %v2502 = vpop.f32.mrf.mxu0
        %v2503 = vadd.f32 %v2390, %v2502
        %v2504 = vpop.f32.mrf.mxu0
        %v2505 = vadd.f32 %v2392, %v2504
        %v2506 = vpop.f32.mrf.mxu0
        %v2507 = vadd.f32 %v2394, %v2506
        %2508 = vmatprep.mubr.bf16.mxu0 0
        %2509 = vmatmul.mubr.bf16.gmra.mxu0 %v1165
        %v2510 = vpop.f32.mrf.mxu0
        %v2511 = vadd.f32 %v2398, %v2510
        %v2512 = vpop.f32.mrf.mxu0
        %v2513 = vadd.f32 %v2400, %v2512
        %v2514 = vpop.f32.mrf.mxu0
        %v2515 = vadd.f32 %v2402, %v2514
        %v2516 = vpop.f32.mrf.mxu0
        %v2517 = vadd.f32 %v2404, %v2516
        %2518 = vmatprep.mubr.bf16.mxu0 0
        %2519 = vmatmul.mubr.bf16.gmra.mxu0 %v1174
        %v2520 = vpop.f32.mrf.mxu0
        %v2521 = vadd.f32 %v2408, %v2520
        %v2522 = vpop.f32.mrf.mxu0
        %v2523 = vadd.f32 %v2410, %v2522
        %v2524 = vpop.f32.mrf.mxu0
        %v2525 = vadd.f32 %v2412, %v2524
        %v2526 = vpop.f32.mrf.mxu0
        %v2527 = vadd.f32 %v2414, %v2526
        %2528 = vmatprep.mubr.bf16.mxu0 0
        %2529 = vmatmul.mubr.bf16.gmra.mxu0 %v1183
        %v2530 = vpop.f32.mrf.mxu0
        %v2531 = vadd.f32 %v2418, %v2530
        %v2532 = vpop.f32.mrf.mxu0
        %v2533 = vadd.f32 %v2420, %v2532
        %v2534 = vpop.f32.mrf.mxu0
        %v2535 = vadd.f32 %v2422, %v2534
        %v2536 = vpop.f32.mrf.mxu0
        %v2537 = vadd.f32 %v2424, %v2536
        %2538 = vmatprep.mubr.bf16.mxu0 0
        %2539 = vmatmul.mubr.bf16.gmra.mxu0 %v1192
        %v2540 = vpop.f32.mrf.mxu0
        %v2541 = vadd.f32 %v2428, %v2540
        %v2542 = vpop.f32.mrf.mxu0
        %v2543 = vadd.f32 %v2430, %v2542
        %v2544 = vpop.f32.mrf.mxu0
        %v2545 = vadd.f32 %v2432, %v2544
        %v2546 = vpop.f32.mrf.mxu0
        %v2547 = vadd.f32 %v2434, %v2546
        %2548 = vmatprep.mubr.bf16.mxu0 0
        %2549 = vmatmul.mubr.bf16.gmra.mxu0 %v1201
        %v2550 = vpop.f32.mrf.mxu0
        %v2551 = vadd.f32 %v2438, %v2550
        %v2552 = vpop.f32.mrf.mxu0
        %v2553 = vadd.f32 %v2440, %v2552
        %v2554 = vpop.f32.mrf.mxu0
        %v2555 = vadd.f32 %v2442, %v2554
        %v2556 = vpop.f32.mrf.mxu0
        %v2557 = vadd.f32 %v2444, %v2556
        %2558 = vdwg.mxu0
        %2559 = vst [vmem:[#allocation3] sm:$0xff] %v2481
        %2560 = vst [vmem:[#allocation3 + $0x8] sm:$0xff] %v2483
        %2561 = vst [vmem:[#allocation3 + $0x10] sm:$0xff] %v2485
        %2562 = vst [vmem:[#allocation3 + $0x18] sm:$0xff] %v2487
        %2563 = vst [vmem:[#allocation3 + $0x20] sm:$0xff] %v2491
        %2564 = vst [vmem:[#allocation3 + $0x28] sm:$0xff] %v2493
        %2565 = vst [vmem:[#allocation3 + $0x30] sm:$0xff] %v2495
        %2566 = vst [vmem:[#allocation3 + $0x38] sm:$0xff] %v2497
        %2567 = vst [vmem:[#allocation3 + $0x40] sm:$0xff] %v2501
        %2568 = vst [vmem:[#allocation3 + $0x48] sm:$0xff] %v2503
        %2569 = vst [vmem:[#allocation3 + $0x50] sm:$0xff] %v2505
        %2570 = vst [vmem:[#allocation3 + $0x58] sm:$0xff] %v2507
        %2571 = vst [vmem:[#allocation3 + $0x60] sm:$0xff] %v2511
        %2572 = vst [vmem:[#allocation3 + $0x68] sm:$0xff] %v2513
        %2573 = vst [vmem:[#allocation3 + $0x70] sm:$0xff] %v2515
        %2574 = vst [vmem:[#allocation3 + $0x78] sm:$0xff] %v2517
        %2575 = vst [vmem:[#allocation3 + $0x80] sm:$0xff] %v2521
        %2576 = vst [vmem:[#allocation3 + $0x88] sm:$0xff] %v2523
        %2577 = vst [vmem:[#allocation3 + $0x90] sm:$0xff] %v2525
        %2578 = vst [vmem:[#allocation3 + $0x98] sm:$0xff] %v2527
        %2579 = vst [vmem:[#allocation3 + $0xa0] sm:$0xff] %v2531
        %2580 = vst [vmem:[#allocation3 + $0xa8] sm:$0xff] %v2533
        %2581 = vst [vmem:[#allocation3 + $0xb0] sm:$0xff] %v2535
        %2582 = vst [vmem:[#allocation3 + $0xb8] sm:$0xff] %v2537
        %2583 = vst [vmem:[#allocation3 + $0xc0] sm:$0xff] %v2541
        %2584 = vst [vmem:[#allocation3 + $0xc8] sm:$0xff] %v2543
        %2585 = vst [vmem:[#allocation3 + $0xd0] sm:$0xff] %v2545
        %2586 = vst [vmem:[#allocation3 + $0xd8] sm:$0xff] %v2547
        %2587 = vst [vmem:[#allocation3 + $0xe0] sm:$0xff] %v2551
        %2588 = vst [vmem:[#allocation3 + $0xe8] sm:$0xff] %v2553
        %2589 = vst [vmem:[#allocation3 + $0xf0] sm:$0xff] %v2555
        %2590 = vst [vmem:[#allocation3 + $0xf8] sm:$0xff] %v2557
        %v2591 = vld [vmem:[#allocation3] sm:$0xff]
        %v2592 = vld [vmem:[#allocation3 + $0x8] sm:$0xff]
        %v2593 = vld [vmem:[#allocation3 + $0x10] sm:$0xff]
        %v2594 = vld [vmem:[#allocation3 + $0x18] sm:$0xff]
        %v2595 = vld [vmem:[#allocation3 + $0x20] sm:$0xff]
        %v2596 = vld [vmem:[#allocation3 + $0x28] sm:$0xff]
        %v2597 = vld [vmem:[#allocation3 + $0x30] sm:$0xff]
        %v2598 = vld [vmem:[#allocation3 + $0x38] sm:$0xff]
        %v2599 = vld [vmem:[#allocation3 + $0x40] sm:$0xff]
        %v2600 = vld [vmem:[#allocation3 + $0x48] sm:$0xff]
        %v2601 = vld [vmem:[#allocation3 + $0x50] sm:$0xff]
        %v2602 = vld [vmem:[#allocation3 + $0x58] sm:$0xff]
        %v2603 = vld [vmem:[#allocation3 + $0x60] sm:$0xff]
        %v2604 = vld [vmem:[#allocation3 + $0x68] sm:$0xff]
        %v2605 = vld [vmem:[#allocation3 + $0x70] sm:$0xff]
        %v2606 = vld [vmem:[#allocation3 + $0x78] sm:$0xff]
        %v2607 = vld [vmem:[#allocation3 + $0x80] sm:$0xff]
        %v2608 = vld [vmem:[#allocation3 + $0x88] sm:$0xff]
        %v2609 = vld [vmem:[#allocation3 + $0x90] sm:$0xff]
        %v2610 = vld [vmem:[#allocation3 + $0x98] sm:$0xff]
        %v2611 = vld [vmem:[#allocation3 + $0xa0] sm:$0xff]
        %v2612 = vld [vmem:[#allocation3 + $0xa8] sm:$0xff]
        %v2613 = vld [vmem:[#allocation3 + $0xb0] sm:$0xff]
        %v2614 = vld [vmem:[#allocation3 + $0xb8] sm:$0xff]
        %v2615 = vld [vmem:[#allocation3 + $0xc0] sm:$0xff]
        %v2616 = vld [vmem:[#allocation3 + $0xc8] sm:$0xff]
        %v2617 = vld [vmem:[#allocation3 + $0xd0] sm:$0xff]
        %v2618 = vld [vmem:[#allocation3 + $0xd8] sm:$0xff]
        %v2619 = vld [vmem:[#allocation3 + $0xe0] sm:$0xff]
        %v2620 = vld [vmem:[#allocation3 + $0xe8] sm:$0xff]
        %v2621 = vld [vmem:[#allocation3 + $0xf0] sm:$0xff]
        %v2622 = vld [vmem:[#allocation3 + $0xf8] sm:$0xff]
        %v2623 = vadd.f32 %v2591, %v2593
        %v2624 = vadd.f32 %v2623, %v2595
        %v2625 = vadd.f32 %v2624, %v2597
        %v2626 = vadd.f32 %v2625, %v2599
        %v2627 = vadd.f32 %v2626, %v2601
        %v2628 = vadd.f32 %v2627, %v2603
        %v2629 = vadd.f32 %v2628, %v2605
        %v2630 = vadd.f32 %v2629, %v2607
        %v2631 = vadd.f32 %v2630, %v2609
        %v2632 = vadd.f32 %v2631, %v2611
        %v2633 = vadd.f32 %v2632, %v2613
        %v2634 = vadd.f32 %v2633, %v2615
        %v2635 = vadd.f32 %v2634, %v2617
        %v2636 = vadd.f32 %v2635, %v2619
        %v2637 = vadd.f32 %v2636, %v2621
        %v2638 = vrot.slane %v2637, 4
        %v2639 = vadd.f32 %v2637, %v2638
        %v2640 = vrot.slane %v2639, 2
        %v2641 = vadd.f32 %v2639, %v2640
        %v2642 = vrot.slane %v2641, 1
        %v2643 = vadd.f32 %v2641, %v2642
        %v2644 = vadd.f32 %v2592, %v2594
        %v2645 = vadd.f32 %v2644, %v2596
        %v2646 = vadd.f32 %v2645, %v2598
        %v2647 = vadd.f32 %v2646, %v2600
        %v2648 = vadd.f32 %v2647, %v2602
        %v2649 = vadd.f32 %v2648, %v2604
        %v2650 = vadd.f32 %v2649, %v2606
        %v2651 = vadd.f32 %v2650, %v2608
        %v2652 = vadd.f32 %v2651, %v2610
        %v2653 = vadd.f32 %v2652, %v2612
        %v2654 = vadd.f32 %v2653, %v2614
        %v2655 = vadd.f32 %v2654, %v2616
        %v2656 = vadd.f32 %v2655, %v2618
        %v2657 = vadd.f32 %v2656, %v2620
        %v2658 = vadd.f32 %v2657, %v2622
        %v2659 = vrot.slane %v2658, 4
        %v2660 = vadd.f32 %v2658, %v2659
        %v2661 = vrot.slane %v2660, 2
        %v2662 = vadd.f32 %v2660, %v2661
        %v2663 = vrot.slane %v2662, 1
        %v2664 = vadd.f32 %v2662, %v2663
        %v2665 = vrcp.pop 128.0
        %v2666 = vmul.f32 %v2643, %v2665
        %v2667 = vmul.f32 %v2664, %v2665
        %v2668 = vsub.f32 %v2591, %v2666
        %v2669 = vsub.f32 %v2592, %v2667
        %v2670 = vsub.f32 %v2593, %v2666
        %v2671 = vsub.f32 %v2594, %v2667
        %v2672 = vsub.f32 %v2595, %v2666
        %v2673 = vsub.f32 %v2596, %v2667
        %v2674 = vsub.f32 %v2597, %v2666
        %v2675 = vsub.f32 %v2598, %v2667
        %v2676 = vsub.f32 %v2599, %v2666
        %v2677 = vsub.f32 %v2600, %v2667
        %v2678 = vsub.f32 %v2601, %v2666
        %v2679 = vsub.f32 %v2602, %v2667
        %v2680 = vsub.f32 %v2603, %v2666
        %v2681 = vsub.f32 %v2604, %v2667
        %v2682 = vsub.f32 %v2605, %v2666
        %v2683 = vsub.f32 %v2606, %v2667
        %v2684 = vsub.f32 %v2607, %v2666
        %v2685 = vsub.f32 %v2608, %v2667
        %v2686 = vsub.f32 %v2609, %v2666
        %v2687 = vsub.f32 %v2610, %v2667
        %v2688 = vsub.f32 %v2611, %v2666
        %v2689 = vsub.f32 %v2612, %v2667
        %v2690 = vsub.f32 %v2613, %v2666
        %v2691 = vsub.f32 %v2614, %v2667
        %v2692 = vsub.f32 %v2615, %v2666
        %v2693 = vsub.f32 %v2616, %v2667
        %v2694 = vsub.f32 %v2617, %v2666
        %v2695 = vsub.f32 %v2618, %v2667
        %v2696 = vsub.f32 %v2619, %v2666
        %v2697 = vsub.f32 %v2620, %v2667
        %v2698 = vsub.f32 %v2621, %v2666
        %v2699 = vsub.f32 %v2622, %v2667
        %v2700 = vmul.f32 %v2668, %v2668
        %v2701 = vmul.f32 %v2669, %v2669
        %v2702 = vmul.f32 %v2670, %v2670
        %v2703 = vmul.f32 %v2671, %v2671
        %v2704 = vmul.f32 %v2672, %v2672
        %v2705 = vmul.f32 %v2673, %v2673
        %v2706 = vmul.f32 %v2674, %v2674
        %v2707 = vmul.f32 %v2675, %v2675
        %v2708 = vmul.f32 %v2676, %v2676
        %v2709 = vmul.f32 %v2677, %v2677
        %v2710 = vmul.f32 %v2678, %v2678
        %v2711 = vmul.f32 %v2679, %v2679
        %v2712 = vmul.f32 %v2680, %v2680
        %v2713 = vmul.f32 %v2681, %v2681
        %v2714 = vmul.f32 %v2682, %v2682
        %v2715 = vmul.f32 %v2683, %v2683
        %v2716 = vmul.f32 %v2684, %v2684
        %v2717 = vmul.f32 %v2685, %v2685
        %v2718 = vmul.f32 %v2686, %v2686
        %v2719 = vmul.f32 %v2687, %v2687
        %v2720 = vmul.f32 %v2688, %v2688
        %v2721 = vmul.f32 %v2689, %v2689
        %v2722 = vmul.f32 %v2690, %v2690
        %v2723 = vmul.f32 %v2691, %v2691
        %v2724 = vmul.f32 %v2692, %v2692
        %v2725 = vmul.f32 %v2693, %v2693
        %v2726 = vmul.f32 %v2694, %v2694
        %v2727 = vmul.f32 %v2695, %v2695
        %v2728 = vmul.f32 %v2696, %v2696
        %v2729 = vmul.f32 %v2697, %v2697
        %v2730 = vmul.f32 %v2698, %v2698
        %v2731 = vmul.f32 %v2699, %v2699
        %v2732 = vadd.f32 %v2700, %v2702
        %v2733 = vadd.f32 %v2732, %v2704
        %v2734 = vadd.f32 %v2733, %v2706
        %v2735 = vadd.f32 %v2734, %v2708
        %v2736 = vadd.f32 %v2735, %v2710
        %v2737 = vadd.f32 %v2736, %v2712
        %v2738 = vadd.f32 %v2737, %v2714
        %v2739 = vadd.f32 %v2738, %v2716
        %v2740 = vadd.f32 %v2739, %v2718
        %v2741 = vadd.f32 %v2740, %v2720
        %v2742 = vadd.f32 %v2741, %v2722
        %v2743 = vadd.f32 %v2742, %v2724
        %v2744 = vadd.f32 %v2743, %v2726
        %v2745 = vadd.f32 %v2744, %v2728
        %v2746 = vadd.f32 %v2745, %v2730
        %v2747 = vrot.slane %v2746, 4
        %v2748 = vadd.f32 %v2746, %v2747
        %v2749 = vrot.slane %v2748, 2
        %v2750 = vadd.f32 %v2748, %v2749
        %v2751 = vrot.slane %v2750, 1
        %v2752 = vadd.f32 %v2750, %v2751
        %v2753 = vadd.f32 %v2701, %v2703
        %v2754 = vadd.f32 %v2753, %v2705
        %v2755 = vadd.f32 %v2754, %v2707
        %v2756 = vadd.f32 %v2755, %v2709
        %v2757 = vadd.f32 %v2756, %v2711
        %v2758 = vadd.f32 %v2757, %v2713
        %v2759 = vadd.f32 %v2758, %v2715
        %v2760 = vadd.f32 %v2759, %v2717
        %v2761 = vadd.f32 %v2760, %v2719
        %v2762 = vadd.f32 %v2761, %v2721
        %v2763 = vadd.f32 %v2762, %v2723
        %v2764 = vadd.f32 %v2763, %v2725
        %v2765 = vadd.f32 %v2764, %v2727
        %v2766 = vadd.f32 %v2765, %v2729
        %v2767 = vadd.f32 %v2766, %v2731
        %v2768 = vrot.slane %v2767, 4
        %v2769 = vadd.f32 %v2767, %v2768
        %v2770 = vrot.slane %v2769, 2
        %v2771 = vadd.f32 %v2769, %v2770
        %v2772 = vrot.slane %v2771, 1
        %v2773 = vadd.f32 %v2771, %v2772
        %v2774 = vmul.f32 %v2752, %v2665
        %v2775 = vmul.f32 %v2773, %v2665
        %v2776 = vld [vmem:[%s405] sm:$0x3]
        %v2777 = vadd.f32 %v2774, 1e-05
        %v2778 = vadd.f32 %v2775, 1e-05
        %v2779 = vrsqrt.pop %v2777
        %v2780 = vrsqrt.pop %v2778
        %v2783 = vcombine.low %v2779, %v2780
        %v2785 = vunpack.c.l.s4 1966171168
        %v2786 = vunpack.c.0.s8 %v2785
        %v2787 = vlaneseq
        %v2788 = vshrl.u32 %v2787, 7
        %v2789 = vsub.s32 %v2786, %v2788
        %v2790 = vrot.slane %v2783, %v2789
        %v2792 = vunpack.c.l.s4 1966171168
        %v2793 = vunpack.c.0.s8 %v2792
        %v2794 = vlaneseq
        %v2795 = vshrl.u32 %v2794, 7
        %v2796 = vsub.s32 %v2793, %v2795
        %v2797 = vrot.slane %v2790, %v2796
        %v2799 = vmul.f32 %v2776, %v2797
        %v2800 = vld [vmem:[%s414] sm:$0x3]
        %v2802 = vlaneseq
        %v2803 = vshrl.u32 %v2802, 7
        %v2804 = vsub.s32 0, %v2803
        %v2805 = vrot.slane %v2799, %v2804
        %v2806 = vlaneseq
        %v2807 = vshrl.u32 %v2806, 7
        %v2808 = vsub.s32 1, %v2807
        %v2809 = vrot.slane %v2799, %v2808
        %v2812 = vmul.f32 %v2666, %v2805
        %v2813 = vmul.f32 %v2667, %v2809
        %v2816 = vcombine.low %v2812, %v2813
        %v2818 = vunpack.c.l.s4 1966171168
        %v2819 = vunpack.c.0.s8 %v2818
        %v2820 = vlaneseq
        %v2821 = vshrl.u32 %v2820, 7
        %v2822 = vsub.s32 %v2819, %v2821
        %v2823 = vrot.slane %v2816, %v2822
        %v2825 = vunpack.c.l.s4 1966171168
        %v2826 = vunpack.c.0.s8 %v2825
        %v2827 = vlaneseq
        %v2828 = vshrl.u32 %v2827, 7
        %v2829 = vsub.s32 %v2826, %v2828
        %v2830 = vrot.slane %v2823, %v2829
        %v2832 = vsub.f32 %v2800, %v2830
        %v2833 = vmul.f32 %v2591, %v2805
        %v2834 = vmul.f32 %v2592, %v2809
        %v2835 = vmul.f32 %v2593, %v2805
        %v2836 = vmul.f32 %v2594, %v2809
        %v2837 = vmul.f32 %v2595, %v2805
        %v2838 = vmul.f32 %v2596, %v2809
        %v2839 = vmul.f32 %v2597, %v2805
        %v2840 = vmul.f32 %v2598, %v2809
        %v2841 = vmul.f32 %v2599, %v2805
        %v2842 = vmul.f32 %v2600, %v2809
        %v2843 = vmul.f32 %v2601, %v2805
        %v2844 = vmul.f32 %v2602, %v2809
        %v2845 = vmul.f32 %v2603, %v2805
        %v2846 = vmul.f32 %v2604, %v2809
        %v2847 = vmul.f32 %v2605, %v2805
        %v2848 = vmul.f32 %v2606, %v2809
        %v2849 = vmul.f32 %v2607, %v2805
        %v2850 = vmul.f32 %v2608, %v2809
        %v2851 = vmul.f32 %v2609, %v2805
        %v2852 = vmul.f32 %v2610, %v2809
        %v2853 = vmul.f32 %v2611, %v2805
        %v2854 = vmul.f32 %v2612, %v2809
        %v2855 = vmul.f32 %v2613, %v2805
        %v2856 = vmul.f32 %v2614, %v2809
        %v2857 = vmul.f32 %v2615, %v2805
        %v2858 = vmul.f32 %v2616, %v2809
        %v2859 = vmul.f32 %v2617, %v2805
        %v2860 = vmul.f32 %v2618, %v2809
        %v2861 = vmul.f32 %v2619, %v2805
        %v2862 = vmul.f32 %v2620, %v2809
        %v2863 = vmul.f32 %v2621, %v2805
        %v2864 = vmul.f32 %v2622, %v2809
        %v2866 = vlaneseq
        %v2867 = vshrl.u32 %v2866, 7
        %v2868 = vsub.s32 0, %v2867
        %v2869 = vrot.slane %v2832, %v2868
        %v2870 = vlaneseq
        %v2871 = vshrl.u32 %v2870, 7
        %v2872 = vsub.s32 1, %v2871
        %v2873 = vrot.slane %v2832, %v2872
        %v2876 = vadd.f32 %v2833, %v2869
        %v2877 = vadd.f32 %v2834, %v2873
        %v2878 = vadd.f32 %v2835, %v2869
        %v2879 = vadd.f32 %v2836, %v2873
        %v2880 = vadd.f32 %v2837, %v2869
        %v2881 = vadd.f32 %v2838, %v2873
        %v2882 = vadd.f32 %v2839, %v2869
        %v2883 = vadd.f32 %v2840, %v2873
        %v2884 = vadd.f32 %v2841, %v2869
        %v2885 = vadd.f32 %v2842, %v2873
        %v2886 = vadd.f32 %v2843, %v2869
        %v2887 = vadd.f32 %v2844, %v2873
        %v2888 = vadd.f32 %v2845, %v2869
        %v2889 = vadd.f32 %v2846, %v2873
        %v2890 = vadd.f32 %v2847, %v2869
        %v2891 = vadd.f32 %v2848, %v2873
        %v2892 = vadd.f32 %v2849, %v2869
        %v2893 = vadd.f32 %v2850, %v2873
        %v2894 = vadd.f32 %v2851, %v2869
        %v2895 = vadd.f32 %v2852, %v2873
        %v2896 = vadd.f32 %v2853, %v2869
        %v2897 = vadd.f32 %v2854, %v2873
        %v2898 = vadd.f32 %v2855, %v2869
        %v2899 = vadd.f32 %v2856, %v2873
        %v2900 = vadd.f32 %v2857, %v2869
        %v2901 = vadd.f32 %v2858, %v2873
        %v2902 = vadd.f32 %v2859, %v2869
        %v2903 = vadd.f32 %v2860, %v2873
        %v2904 = vadd.f32 %v2861, %v2869
        %v2905 = vadd.f32 %v2862, %v2873
        %v2906 = vadd.f32 %v2863, %v2869
        %v2907 = vadd.f32 %v2864, %v2873
        %v2908 = vmax.f32 %v2876, 0.0
        %v2909 = vmax.f32 %v2877, 0.0
        %v2910 = vmax.f32 %v2878, 0.0
        %v2911 = vmax.f32 %v2879, 0.0
        %v2912 = vmax.f32 %v2880, 0.0
        %v2913 = vmax.f32 %v2881, 0.0
        %v2914 = vmax.f32 %v2882, 0.0
        %v2915 = vmax.f32 %v2883, 0.0
        %v2916 = vmax.f32 %v2884, 0.0
        %v2917 = vmax.f32 %v2885, 0.0
        %v2918 = vmax.f32 %v2886, 0.0
        %v2919 = vmax.f32 %v2887, 0.0
        %v2920 = vmax.f32 %v2888, 0.0
        %v2921 = vmax.f32 %v2889, 0.0
        %v2922 = vmax.f32 %v2890, 0.0
        %v2923 = vmax.f32 %v2891, 0.0
        %v2924 = vmax.f32 %v2892, 0.0
        %v2925 = vmax.f32 %v2893, 0.0
        %v2926 = vmax.f32 %v2894, 0.0
        %v2927 = vmax.f32 %v2895, 0.0
        %v2928 = vmax.f32 %v2896, 0.0
        %v2929 = vmax.f32 %v2897, 0.0
        %v2930 = vmax.f32 %v2898, 0.0
        %v2931 = vmax.f32 %v2899, 0.0
        %v2932 = vmax.f32 %v2900, 0.0
        %v2933 = vmax.f32 %v2901, 0.0
        %v2934 = vmax.f32 %v2902, 0.0
        %v2935 = vmax.f32 %v2903, 0.0
        %v2936 = vmax.f32 %v2904, 0.0
        %v2937 = vmax.f32 %v2905, 0.0
        %v2938 = vmax.f32 %v2906, 0.0
        %v2939 = vmax.f32 %v2907, 0.0
        %v2940 = vadd.f32 %v2908, %v2910
        %v2941 = vadd.f32 %v2940, %v2912
        %v2942 = vadd.f32 %v2941, %v2914
        %v2943 = vadd.f32 %v2942, %v2916
        %v2944 = vadd.f32 %v2943, %v2918
        %v2945 = vadd.f32 %v2944, %v2920
        %v2946 = vadd.f32 %v2945, %v2922
        %v2947 = vrot.slane %v2946, 4
        %v2948 = vadd.f32 %v2946, %v2947
        %v2949 = vrot.slane %v2948, 2
        %v2950 = vadd.f32 %v2948, %v2949
        %v2951 = vrot.slane %v2950, 1
        %v2952 = vadd.f32 %v2950, %v2951
        %v2953 = vadd.f32 %v2909, %v2911
        %v2954 = vadd.f32 %v2953, %v2913
        %v2955 = vadd.f32 %v2954, %v2915
        %v2956 = vadd.f32 %v2955, %v2917
        %v2957 = vadd.f32 %v2956, %v2919
        %v2958 = vadd.f32 %v2957, %v2921
        %v2959 = vadd.f32 %v2958, %v2923
        %v2960 = vrot.slane %v2959, 4
        %v2961 = vadd.f32 %v2959, %v2960
        %v2962 = vrot.slane %v2961, 2
        %v2963 = vadd.f32 %v2961, %v2962
        %v2964 = vrot.slane %v2963, 1
        %v2965 = vadd.f32 %v2963, %v2964
        %v2966 = vadd.f32 %v2924, %v2926
        %v2967 = vadd.f32 %v2966, %v2928
        %v2968 = vadd.f32 %v2967, %v2930
        %v2969 = vadd.f32 %v2968, %v2932
        %v2970 = vadd.f32 %v2969, %v2934
        %v2971 = vadd.f32 %v2970, %v2936
        %v2972 = vadd.f32 %v2971, %v2938
        %v2973 = vrot.slane %v2972, 4
        %v2974 = vadd.f32 %v2972, %v2973
        %v2975 = vrot.slane %v2974, 2
        %v2976 = vadd.f32 %v2974, %v2975
        %v2977 = vrot.slane %v2976, 1
        %v2978 = vadd.f32 %v2976, %v2977
        %v2979 = vadd.f32 %v2925, %v2927
        %v2980 = vadd.f32 %v2979, %v2929
        %v2981 = vadd.f32 %v2980, %v2931
        %v2982 = vadd.f32 %v2981, %v2933
        %v2983 = vadd.f32 %v2982, %v2935
        %v2984 = vadd.f32 %v2983, %v2937
        %v2985 = vadd.f32 %v2984, %v2939
        %v2986 = vrot.slane %v2985, 4
        %v2987 = vadd.f32 %v2985, %v2986
        %v2988 = vrot.slane %v2987, 2
        %v2989 = vadd.f32 %v2987, %v2988
        %v2990 = vrot.slane %v2989, 1
        %v2991 = vadd.f32 %v2989, %v2990
        %v2992 = vrcp.pop 64.0
        %v2993 = vmul.f32 %v2952, %v2992
        %v2994 = vmul.f32 %v2965, %v2992
        %v2995 = vmul.f32 %v2978, %v2992
        %v2996 = vmul.f32 %v2991, %v2992
        %v2997 = vld [vmem:[#allocation4] sm:$0xf]
        %v2998 = vpack.c.bf16 %v2993, %v2993
        %v2999 = vpack.c.bf16 %v2994, %v2994
        %v3000 = vpack.c.bf16 %v2995, %v2995
        %v3001 = vpack.c.bf16 %v2996, %v2996
        %v3002 = vld [vmem:[%s423] sm:$0xff]
        %v3003 = vld [vmem:[%s423 + $0x8] sm:$0xff]
        %v3004 = vld [vmem:[%s423 + $0x10] sm:$0xff]
        %v3005 = vld [vmem:[%s423 + $0x18] sm:$0xff]
        %v3006 = vld [vmem:[%s423 + $0x20] sm:$0xff]
        %v3007 = vld [vmem:[%s423 + $0x28] sm:$0xff]
        %v3008 = vld [vmem:[%s423 + $0x30] sm:$0xff]
        %v3009 = vld [vmem:[%s423 + $0x38] sm:$0xff]
        %v3010 = vld [vmem:[%s423 + $0x40] sm:$0xff]
        %v3011 = vld [vmem:[%s423 + $0x48] sm:$0xff]
        %v3012 = vld [vmem:[%s423 + $0x50] sm:$0xff]
        %v3013 = vld [vmem:[%s423 + $0x58] sm:$0xff]
        %v3014 = vld [vmem:[%s423 + $0x60] sm:$0xff]
        %v3015 = vld [vmem:[%s423 + $0x68] sm:$0xff]
        %v3016 = vld [vmem:[%s423 + $0x70] sm:$0xff]
        %v3017 = vld [vmem:[%s423 + $0x78] sm:$0xff]
        %v3018 = vld [vmem:[%s423 + $0x80] sm:$0xff]
        %v3019 = vld [vmem:[%s423 + $0x88] sm:$0xff]
        %v3020 = vld [vmem:[%s423 + $0x90] sm:$0xff]
        %v3021 = vld [vmem:[%s423 + $0x98] sm:$0xff]
        %v3022 = vld [vmem:[%s423 + $0xa0] sm:$0xff]
        %v3023 = vld [vmem:[%s423 + $0xa8] sm:$0xff]
        %v3024 = vld [vmem:[%s423 + $0xb0] sm:$0xff]
        %v3025 = vld [vmem:[%s423 + $0xb8] sm:$0xff]
        %v3026 = vld [vmem:[%s423 + $0xc0] sm:$0xff]
        %v3027 = vld [vmem:[%s423 + $0xc8] sm:$0xff]
        %v3028 = vld [vmem:[%s423 + $0xd0] sm:$0xff]
        %v3029 = vld [vmem:[%s423 + $0xd8] sm:$0xff]
        %v3030 = vld [vmem:[%s423 + $0xe0] sm:$0xff]
        %v3031 = vld [vmem:[%s423 + $0xe8] sm:$0xff]
        %v3032 = vld [vmem:[%s423 + $0xf0] sm:$0xff]
        %v3033 = vld [vmem:[%s423 + $0xf8] sm:$0xff]
        %v3038 = vunpack.c.l.b16 %v2998
        %v3039 = vunpack.c.l.b16 %v2999
        %v3040 = vunpack.c.l.b16 %v3000
        %v3041 = vunpack.c.l.b16 %v3001
        %vm3042 = vcmask 1041409
        %v3043 = vsel %vm3042, %v3040, %v3038
        %v3044 = vsel %vm3042, %v3041, %v3039
        %v3045 = vpack.c.b16 %v3043, %v3043
        %v3046 = vpack.c.b16 %v3044, %v3044
        %v3081 = vunpack.c.l.b16 %v3002
        %v3082 = vunpack.c.h.b16 %v3002
        %v3083 = vunpack.c.l.b16 %v3003
        %v3084 = vunpack.c.h.b16 %v3003
        %v3085 = vunpack.c.l.b16 %v3004
        %v3086 = vunpack.c.h.b16 %v3004
        %v3087 = vunpack.c.l.b16 %v3005
        %v3088 = vunpack.c.h.b16 %v3005
        %v3089 = vunpack.c.l.b16 %v3006
        %v3090 = vunpack.c.h.b16 %v3006
        %v3091 = vunpack.c.l.b16 %v3007
        %v3092 = vunpack.c.h.b16 %v3007
        %v3093 = vunpack.c.l.b16 %v3008
        %v3094 = vunpack.c.h.b16 %v3008
        %v3095 = vunpack.c.l.b16 %v3009
        %v3096 = vunpack.c.h.b16 %v3009
        %v3097 = vunpack.c.l.b16 %v3010
        %v3098 = vunpack.c.h.b16 %v3010
        %v3099 = vunpack.c.l.b16 %v3011
        %v3100 = vunpack.c.h.b16 %v3011
        %v3101 = vunpack.c.l.b16 %v3012
        %v3102 = vunpack.c.h.b16 %v3012
        %v3103 = vunpack.c.l.b16 %v3013
        %v3104 = vunpack.c.h.b16 %v3013
        %v3105 = vunpack.c.l.b16 %v3014
        %v3106 = vunpack.c.h.b16 %v3014
        %v3107 = vunpack.c.l.b16 %v3015
        %v3108 = vunpack.c.h.b16 %v3015
        %v3109 = vunpack.c.l.b16 %v3016
        %v3110 = vunpack.c.h.b16 %v3016
        %v3111 = vunpack.c.l.b16 %v3017
        %v3112 = vunpack.c.h.b16 %v3017
        %v3113 = vunpack.c.l.b16 %v3018
        %v3114 = vunpack.c.h.b16 %v3018
        %v3115 = vunpack.c.l.b16 %v3019
        %v3116 = vunpack.c.h.b16 %v3019
        %v3117 = vunpack.c.l.b16 %v3020
        %v3118 = vunpack.c.h.b16 %v3020
        %v3119 = vunpack.c.l.b16 %v3021
        %v3120 = vunpack.c.h.b16 %v3021
        %v3121 = vunpack.c.l.b16 %v3022
        %v3122 = vunpack.c.h.b16 %v3022
        %v3123 = vunpack.c.l.b16 %v3023
        %v3124 = vunpack.c.h.b16 %v3023
        %v3125 = vunpack.c.l.b16 %v3024
        %v3126 = vunpack.c.h.b16 %v3024
        %v3127 = vunpack.c.l.b16 %v3025
        %v3128 = vunpack.c.h.b16 %v3025
        %v3129 = vunpack.c.l.b16 %v3026
        %v3130 = vunpack.c.h.b16 %v3026
        %v3131 = vunpack.c.l.b16 %v3027
        %v3132 = vunpack.c.h.b16 %v3027
        %v3133 = vunpack.c.l.b16 %v3028
        %v3134 = vunpack.c.h.b16 %v3028
        %v3135 = vunpack.c.l.b16 %v3029
        %v3136 = vunpack.c.h.b16 %v3029
        %v3137 = vunpack.c.l.b16 %v3030
        %v3138 = vunpack.c.h.b16 %v3030
        %v3139 = vunpack.c.l.b16 %v3031
        %v3140 = vunpack.c.h.b16 %v3031
        %v3141 = vunpack.c.l.b16 %v3032
        %v3142 = vunpack.c.h.b16 %v3032
        %v3143 = vunpack.c.l.b16 %v3033
        %v3144 = vunpack.c.h.b16 %v3033
        %v3145 = vpack.c.b16 %v3083, %v3081
        %v3146 = vpack.c.b16 %v3084, %v3082
        %v3147 = vpack.c.b16 %v3087, %v3085
        %v3148 = vpack.c.b16 %v3088, %v3086
        %v3149 = vpack.c.b16 %v3091, %v3089
        %v3150 = vpack.c.b16 %v3092, %v3090
        %v3151 = vpack.c.b16 %v3095, %v3093
        %v3152 = vpack.c.b16 %v3096, %v3094
        %v3153 = vpack.c.b16 %v3099, %v3097
        %v3154 = vpack.c.b16 %v3100, %v3098
        %v3155 = vpack.c.b16 %v3103, %v3101
        %v3156 = vpack.c.b16 %v3104, %v3102
        %v3157 = vpack.c.b16 %v3107, %v3105
        %v3158 = vpack.c.b16 %v3108, %v3106
        %v3159 = vpack.c.b16 %v3111, %v3109
        %v3160 = vpack.c.b16 %v3112, %v3110
        %v3161 = vpack.c.b16 %v3115, %v3113
        %v3162 = vpack.c.b16 %v3116, %v3114
        %v3163 = vpack.c.b16 %v3119, %v3117
        %v3164 = vpack.c.b16 %v3120, %v3118
        %v3165 = vpack.c.b16 %v3123, %v3121
        %v3166 = vpack.c.b16 %v3124, %v3122
        %v3167 = vpack.c.b16 %v3127, %v3125
        %v3168 = vpack.c.b16 %v3128, %v3126
        %v3169 = vpack.c.b16 %v3131, %v3129
        %v3170 = vpack.c.b16 %v3132, %v3130
        %v3171 = vpack.c.b16 %v3135, %v3133
        %v3172 = vpack.c.b16 %v3136, %v3134
        %v3173 = vpack.c.b16 %v3139, %v3137
        %v3174 = vpack.c.b16 %v3140, %v3138
        %v3175 = vpack.c.b16 %v3143, %v3141
        %v3176 = vpack.c.b16 %v3144, %v3142
        %3209 = vmatprep.subr.bf16.mxu0 %v3160
        %3210 = vmatpush1.bf16.msra.mxu0 %v3159
        %3211 = vmatprep.subr.bf16.mxu0 %v3158
        %3212 = vmatpush1.bf16.msra.mxu0 %v3157
        %3213 = vmatprep.subr.bf16.mxu0 %v3156
        %3214 = vmatpush1.bf16.msra.mxu0 %v3155
        %3215 = vmatprep.subr.bf16.mxu0 %v3154
        %3216 = vmatpush1.bf16.msra.mxu0 %v3153
        %3217 = vmatprep.subr.bf16.mxu0 %v3152
        %3218 = vmatpush1.bf16.msra.mxu0 %v3151
        %3219 = vmatprep.subr.bf16.mxu0 %v3150
        %3220 = vmatpush1.bf16.msra.mxu0 %v3149
        %3221 = vmatprep.subr.bf16.mxu0 %v3148
        %3222 = vmatpush1.bf16.msra.mxu0 %v3147
        %3223 = vmatprep.subr.bf16.mxu0 %v3146
        %3224 = vmatpush1.bf16.msra.mxu0 %v3145
        %3225 = vmatprep.subr.bf16.mxu0 %v3176
        %3226 = vmatpush2.bf16.msra.mxu0 %v3175
        %3227 = vmatprep.subr.bf16.mxu0 %v3174
        %3228 = vmatpush2.bf16.msra.mxu0 %v3173
        %3229 = vmatprep.subr.bf16.mxu0 %v3172
        %3230 = vmatpush2.bf16.msra.mxu0 %v3171
        %3231 = vmatprep.subr.bf16.mxu0 %v3170
        %3232 = vmatpush2.bf16.msra.mxu0 %v3169
        %3233 = vmatprep.subr.bf16.mxu0 %v3168
        %3234 = vmatpush2.bf16.msra.mxu0 %v3167
        %3235 = vmatprep.subr.bf16.mxu0 %v3166
        %3236 = vmatpush2.bf16.msra.mxu0 %v3165
        %3237 = vmatprep.subr.bf16.mxu0 %v3164
        %3238 = vmatpush2.bf16.msra.mxu0 %v3163
        %3239 = vmatprep.subr.bf16.mxu0 %v3162
        %3240 = vmatpush2.bf16.msra.mxu0 %v3161
        %3241 = vmatprep.mubr.bf16.mxu0 %v3046
        %3242 = vmatmul.mubr.bf16.gmra.mxu0 %v3045
        %v3243 = vpop.f32.mrf.mxu0
        %v3244 = vadd.f32 0.0, %v3243
        %v3245 = vpop.f32.mrf.mxu0
        %v3246 = vadd.f32 0.0, %v3245
        %v3247 = vpop.f32.mrf.mxu0
        %v3248 = vpop.f32.mrf.mxu0
        %3249 = vdwg.mxu0
        %v3252 = vcombine.low %v3244, %v3246
        %v3254 = vunpack.c.l.s4 1983009808
        %v3255 = vunpack.c.0.s8 %v3254
        %v3256 = vlaneseq
        %v3257 = vshrl.u32 %v3256, 7
        %v3258 = vsub.s32 %v3255, %v3257
        %v3259 = vrot.slane %v3252, %v3258
        %v3261 = vadd.f32 %v2997, %v3259
        %3262 = vst [vmem:[#allocation4] sm:$0xf] %v3261
        %p3263 = scmp.eq.s32.totalorder %s29, 1
        // Predicated region
        $region89: #{tpu_custom_call.1} parent=51 // pred_check
          %p3264 = pneg %p3263
        $region90: #{tpu_custom_call.1} parent=51 // pred_check_branch
          %3266 = sbr.rel (%p3264) target = $region92
        $region91: #{tpu_custom_call.1} parent=51 // pred_region
          %v3267 = vld [vmem:[#allocation4] sm:$0xf]
          %v3268 = vld [vmem:[#allocation14] sm:$0x3]
          %v3270 = vlaneseq
          %v3271 = vshrl.u32 %v3270, 7
          %v3272 = vsub.s32 0, %v3271
          %v3273 = vrot.slane %v3268, %v3272
          %v3274 = vlaneseq
          %v3275 = vshrl.u32 %v3274, 7
          %v3276 = vsub.s32 1, %v3275
          %v3277 = vrot.slane %v3268, %v3276
          %v3278 = vcombine.low %v3273, %v3277
          %v3280 = vunpack.c.l.s4 1983009808
          %v3281 = vunpack.c.0.s8 %v3280
          %v3282 = vlaneseq
          %v3283 = vshrl.u32 %v3282, 7
          %v3284 = vsub.s32 %v3281, %v3283
          %v3285 = vrot.slane %v3278, %v3284
          %v3287 = vadd.f32 %v3267, %v3285
          %v3288 = vmax.f32 %v3287, 0.0
          %v3291 = vunpack.c.l.s4 1983009808
          %v3292 = vunpack.c.0.s8 %v3291
          %v3293 = vlaneseq
          %v3294 = vshrl.u32 %v3293, 7
          %v3295 = vsub.s32 %v3292, %v3294
          %v3296 = vrot.slane %v3288, %v3295
          %v3297 = vcombine.high %v3296, %v3296
          %v3300 = vpack.c.bf16 %v3296, %v3296
          %v3301 = vpack.c.bf16 %v3297, %v3297
          %v3302 = vld [vmem:[#allocation16] sm:$0xf]
          %v3303 = vld [vmem:[#allocation16 + $0x4] sm:$0xf]
          %v3304 = vld [vmem:[#allocation16 + $0x8] sm:$0xf]
          %v3305 = vld [vmem:[#allocation16 + $0xc] sm:$0xf]
          %v3306 = vld [vmem:[#allocation16 + $0x10] sm:$0xf]
          %v3307 = vld [vmem:[#allocation16 + $0x14] sm:$0xf]
          %v3308 = vld [vmem:[#allocation16 + $0x18] sm:$0xf]
          %v3309 = vld [vmem:[#allocation16 + $0x1c] sm:$0xf]
          %v3310 = vld [vmem:[#allocation16 + $0x20] sm:$0xf]
          %v3311 = vld [vmem:[#allocation16 + $0x24] sm:$0xf]
          %v3312 = vld [vmem:[#allocation16 + $0x28] sm:$0xf]
          %v3313 = vld [vmem:[#allocation16 + $0x2c] sm:$0xf]
          %v3314 = vld [vmem:[#allocation16 + $0x30] sm:$0xf]
          %v3315 = vld [vmem:[#allocation16 + $0x34] sm:$0xf]
          %v3316 = vld [vmem:[#allocation16 + $0x38] sm:$0xf]
          %v3317 = vld [vmem:[#allocation16 + $0x3c] sm:$0xf]
          %v3318 = vld [vmem:[#allocation16 + $0x40] sm:$0xf]
          %v3319 = vld [vmem:[#allocation16 + $0x44] sm:$0xf]
          %v3320 = vld [vmem:[#allocation16 + $0x48] sm:$0xf]
          %v3321 = vld [vmem:[#allocation16 + $0x4c] sm:$0xf]
          %v3322 = vld [vmem:[#allocation16 + $0x50] sm:$0xf]
          %v3323 = vld [vmem:[#allocation16 + $0x54] sm:$0xf]
          %v3324 = vld [vmem:[#allocation16 + $0x58] sm:$0xf]
          %v3325 = vld [vmem:[#allocation16 + $0x5c] sm:$0xf]
          %v3326 = vld [vmem:[#allocation16 + $0x60] sm:$0xf]
          %v3327 = vld [vmem:[#allocation16 + $0x64] sm:$0xf]
          %v3328 = vld [vmem:[#allocation16 + $0x68] sm:$0xf]
          %v3329 = vld [vmem:[#allocation16 + $0x6c] sm:$0xf]
          %v3330 = vld [vmem:[#allocation16 + $0x70] sm:$0xf]
          %v3331 = vld [vmem:[#allocation16 + $0x74] sm:$0xf]
          %v3332 = vld [vmem:[#allocation16 + $0x78] sm:$0xf]
          %v3333 = vld [vmem:[#allocation16 + $0x7c] sm:$0xf]
          %v3334 = vld [vmem:[#allocation17] sm:$0x1]
          %v3336 = vlaneseq
          %v3337 = vshrl.u32 %v3336, 7
          %v3338 = vsub.s32 0, %v3337
          %v3339 = vrot.slane %v3334, %v3338
          %v3373 = vunpack.c.l.b16 %v3302
          %v3374 = vunpack.c.l.b16 %v3303
          %v3375 = vunpack.c.l.b16 %v3304
          %v3376 = vunpack.c.l.b16 %v3305
          %v3377 = vunpack.c.l.b16 %v3306
          %v3378 = vunpack.c.l.b16 %v3307
          %v3379 = vunpack.c.l.b16 %v3308
          %v3380 = vunpack.c.l.b16 %v3309
          %v3381 = vunpack.c.l.b16 %v3310
          %v3382 = vunpack.c.l.b16 %v3311
          %v3383 = vunpack.c.l.b16 %v3312
          %v3384 = vunpack.c.l.b16 %v3313
          %v3385 = vunpack.c.l.b16 %v3314
          %v3386 = vunpack.c.l.b16 %v3315
          %v3387 = vunpack.c.l.b16 %v3316
          %v3388 = vunpack.c.l.b16 %v3317
          %v3389 = vunpack.c.l.b16 %v3318
          %v3390 = vunpack.c.l.b16 %v3319
          %v3391 = vunpack.c.l.b16 %v3320
          %v3392 = vunpack.c.l.b16 %v3321
          %v3393 = vunpack.c.l.b16 %v3322
          %v3394 = vunpack.c.l.b16 %v3323
          %v3395 = vunpack.c.l.b16 %v3324
          %v3396 = vunpack.c.l.b16 %v3325
          %v3397 = vunpack.c.l.b16 %v3326
          %v3398 = vunpack.c.l.b16 %v3327
          %v3399 = vunpack.c.l.b16 %v3328
          %v3400 = vunpack.c.l.b16 %v3329
          %v3401 = vunpack.c.l.b16 %v3330
          %v3402 = vunpack.c.l.b16 %v3331
          %v3403 = vunpack.c.l.b16 %v3332
          %v3404 = vunpack.c.l.b16 %v3333
          %v3405 = vpack.c.b16 %v3374, %v3373
          %v3406 = vpack.c.b16 %v3376, %v3375
          %v3407 = vpack.c.b16 %v3378, %v3377
          %v3408 = vpack.c.b16 %v3380, %v3379
          %v3409 = vpack.c.b16 %v3382, %v3381
          %v3410 = vpack.c.b16 %v3384, %v3383
          %v3411 = vpack.c.b16 %v3386, %v3385
          %v3412 = vpack.c.b16 %v3388, %v3387
          %v3413 = vpack.c.b16 %v3390, %v3389
          %v3414 = vpack.c.b16 %v3392, %v3391
          %v3415 = vpack.c.b16 %v3394, %v3393
          %v3416 = vpack.c.b16 %v3396, %v3395
          %v3417 = vpack.c.b16 %v3398, %v3397
          %v3418 = vpack.c.b16 %v3400, %v3399
          %v3419 = vpack.c.b16 %v3402, %v3401
          %v3420 = vpack.c.b16 %v3404, %v3403
          %3437 = vmatprep.subr.bf16.mxu0 0
          %3438 = vmatpush1.bf16.msra.mxu0 %v3412
          %3439 = vmatprep.subr.bf16.mxu0 0
          %3440 = vmatpush1.bf16.msra.mxu0 %v3411
          %3441 = vmatprep.subr.bf16.mxu0 0
          %3442 = vmatpush1.bf16.msra.mxu0 %v3410
          %3443 = vmatprep.subr.bf16.mxu0 0
          %3444 = vmatpush1.bf16.msra.mxu0 %v3409
          %3445 = vmatprep.subr.bf16.mxu0 0
          %3446 = vmatpush1.bf16.msra.mxu0 %v3408
          %3447 = vmatprep.subr.bf16.mxu0 0
          %3448 = vmatpush1.bf16.msra.mxu0 %v3407
          %3449 = vmatprep.subr.bf16.mxu0 0
          %3450 = vmatpush1.bf16.msra.mxu0 %v3406
          %3451 = vmatprep.subr.bf16.mxu0 0
          %3452 = vmatpush1.bf16.msra.mxu0 %v3405
          %3453 = vmatprep.subr.bf16.mxu0 0
          %3454 = vmatpush2.bf16.msra.mxu0 %v3420
          %3455 = vmatprep.subr.bf16.mxu0 0
          %3456 = vmatpush2.bf16.msra.mxu0 %v3419
          %3457 = vmatprep.subr.bf16.mxu0 0
          %3458 = vmatpush2.bf16.msra.mxu0 %v3418
          %3459 = vmatprep.subr.bf16.mxu0 0
          %3460 = vmatpush2.bf16.msra.mxu0 %v3417
          %3461 = vmatprep.subr.bf16.mxu0 0
          %3462 = vmatpush2.bf16.msra.mxu0 %v3416
          %3463 = vmatprep.subr.bf16.mxu0 0
          %3464 = vmatpush2.bf16.msra.mxu0 %v3415
          %3465 = vmatprep.subr.bf16.mxu0 0
          %3466 = vmatpush2.bf16.msra.mxu0 %v3414
          %3467 = vmatprep.subr.bf16.mxu0 0
          %3468 = vmatpush2.bf16.msra.mxu0 %v3413
          %3469 = vmatprep.mubr.bf16.mxu0 %v3301
          %3470 = vmatmul.mubr.bf16.gmra.mxu0 %v3300
          %v3471 = vpop.f32.mrf.mxu0
          %v3472 = vadd.f32 %v3339, %v3471
          %v3473 = vpop.f32.mrf.mxu0
          %v3474 = vpop.f32.mrf.mxu0
          %v3475 = vpop.f32.mrf.mxu0
          %3476 = vdwg.mxu0
          %3477 = vst [vmem:[#allocation19] sm:$0x3] %v3472
        $region92: #{tpu_custom_call.1} parent=51 // pred_fallthru
          _
        // Predicated region
        $region93: #{tpu_custom_call.1} parent=51 // pred_check
          %p3478 = pneg %p230
        $region94: #{tpu_custom_call.1} parent=51 // pred_check_branch
          %3480 = sbr.rel (%p3478) target = $region96
        $region95: #{tpu_custom_call.1} parent=51 // pred_region
          %s3482 = ssub.s32 32, 32
          %3483 = vsyncadd [#allocation7], %s3482
          %s3485 = sshll.u32 [#allocation19], 4
          %s3486 = int_to_ptr.vmem [resolvable:$true] %s3485
          %3488 = dma.vmem_to_hbm [thread:$0]  %s3486, 32, %s8, [#allocation7]
        $region96: #{tpu_custom_call.1} parent=51 // pred_fallthru
          _
        // Predicated region
        $region97: #{tpu_custom_call.1} parent=51 // pred_check
          %p3489 = pneg %p230
        $region98: #{tpu_custom_call.1} parent=51 // pred_check_branch
          %3491 = sbr.rel (%p3489) target = $region100
        $region99: #{tpu_custom_call.1} parent=51 // pred_region
          %3492 = dma.done [#allocation7], 32
        $region100: #{tpu_custom_call.1} parent=51 // pred_fallthru
          _
      $region52: #{tpu_custom_call.1} parent=5 // pred_fallthru
        _
      %p3493 = scmp.le.s32.totalorder 2, %s24
      // Predicated region
      $region101: #{tpu_custom_call.1} parent=5 // pred_check
        %p3494 = pneg %p3493
      $region102: #{tpu_custom_call.1} parent=5 // pred_check_branch
        %3496 = sbr.rel (%p3494) target = $region104
      $region103: #{tpu_custom_call.1} parent=5 // pred_region
        %s3497 = ssub.s32 %s24, 2
      $region104: #{tpu_custom_call.1} parent=5 // pred_fallthru
        _
    $region6: #{tpu_custom_call.1} parent=1 // loop_footer
      %s28 = sadd.s32 1, %s24
    $region7: #{tpu_custom_call.1} parent=1 // loop_footer_branch
      %23 = sbr.rel target = $region3
    $region8: #{tpu_custom_call.1} parent=1 // loop_exit
      _
    %3498 = vsyncpa [#allocation6], 1
    %s3499 = scalar_lea.sflag [#allocation6], 1
    %3500 = vsyncpa %s3499, 1
    %3501 = vsyncpa [#allocation9], 1
    %s3502 = scalar_lea.sflag [#allocation9], 1
    %3503 = vsyncpa %s3502, 1
    %3504 = vsyncpa [#allocation12], 1
    %s3505 = scalar_lea.sflag [#allocation12], 1
    %3506 = vsyncpa %s3505, 1
    %3507 = vsyncpa [#allocation15], 1
    %3508 = vsyncpa [#allocation18], 1
    %3509 = vsyncpa [#allocation7], 1
    %s3510 = scalar_lea.sflag [#allocation7], 1
    %3511 = vsyncpa %s3510, 1

</llo_original>
